<compile_context>
chip_gen: v6e
topology: v6e:2x2x1
jax: 0.10.0
libtpu: 0.0.40
codegen_flags: <defaults>
</compile_context>

<pallas_src>
import functools

import numpy as np

import jax
import jax.numpy as jnp
from jax.experimental import pallas as pl
from jax.experimental.pallas import tpu as pltpu


# ---------------------------------------------------------------------------
# Fused Pallas kernel: whole CSP_DenseBlock, whole batch, one invocation
# ---------------------------------------------------------------------------

def _csp_dense_kernel(x_ref, w_ref, m_ref, out_ref, acc_ref, *,
                      p1, c2, L, k, W, NHW, offs):
    """x_ref:   (C_in, N*H*W)  channel-major input, batch folded into lanes
       w_ref:   (R, KPAD)      packed weight/bias slab (static row offsets)
       m_ref:   (9, N*H*W)     precomputed 3x3 boundary masks
       out_ref: (C_out, N*H*W)
       acc_ref: (c2 + L*k, N*H*W) VMEM scratch, dense accumulator (append order)
    """
    k4 = 4 * k

    # part1 is a straight pass-through; feat (part2) seeds both the output and
    # the dense accumulator.  All writes are at static row offsets (no concat).
    out_ref[0:p1, :] = x_ref[0:p1, :]
    feat = x_ref[p1:p1 + c2, :]
    feat_out = p1 + (L - 1) * k
    out_ref[feat_out:feat_out + c2, :] = feat
    acc_ref[0:c2, :] = feat

    for i in range(L):
        cin = c2 + i * k
        r1, r2 = offs[i]

        # --- BN_Conv2d #1: 1x1 conv (+ folded BN) + ReLU --------------------
        w1 = w_ref[r1:r1 + k4, 0:cin]            # columns already in acc order
        b1 = w_ref[r1:r1 + k4, cin:cin + 1]
        h = jnp.dot(w1, acc_ref[0:cin, :], preferred_element_type=jnp.float32)
        h = jnp.maximum(h + b1, 0.0)             # (4k, NHW), lane-dense

        # --- BN_Conv2d #2: 3x3 SAME conv as 9 rolled+masked tap matmuls -----
        f = None
        t = 0
        for dy in (-1, 0, 1):
            for dx in (-1, 0, 1):
                off = dy * W + dx
                src = h if off == 0 else pltpu.roll(h, (-off) % NHW, 1)
                tap = src if off == 0 else src * m_ref[t:t + 1, :]
                w2t = w_ref[r2 + t * k:r2 + (t + 1) * k, 0:k4]
                c = jnp.dot(w2t, tap, preferred_element_type=jnp.float32)
                f = c if f is None else f + c
                t += 1
        b2 = w_ref[r2 + 4 * k:r2 + 5 * k, k4:k4 + 1]
        f = jnp.maximum(f + b2, 0.0)             # (k, NHW)

        # f_i goes straight to its output channel slot (CSP order
        # [part1, f_{L-1}, ..., f_1, x, f_0]) and is appended into the
        # accumulator for later layers.
        o_off = p1 + (L - 1) * k + c2 if i == 0 else p1 + (L - 1 - i) * k
        out_ref[o_off:o_off + k, :] = f
        if i + 1 < L:
            acc_ref[c2 + i * k:c2 + (i + 1) * k, :] = f


# ---------------------------------------------------------------------------
# Wrapper (NCHW in / NCHW out)
# ---------------------------------------------------------------------------

def csp_dense_block(x_nchw, w_slab, masks, *, part1_chnls, num_layers, k, offs):
    N, C, H, W = x_nchw.shape
    NHW = N * H * W
    c2 = C - part1_chnls
    C_out = C + num_layers * k

    # Channel-major with the batch folded into lanes: (C, N*H*W).
    x_cm = jnp.transpose(x_nchw, (1, 0, 2, 3)).reshape(C, NHW)

    kern = functools.partial(_csp_dense_kernel, p1=part1_chnls, c2=c2,
                             L=num_layers, k=k, W=W, NHW=NHW, offs=offs)

    vmem = pl.BlockSpec(memory_space=pltpu.MemorySpace.VMEM)
    out = pl.pallas_call(
        kern,
        out_shape=jax.ShapeDtypeStruct((C_out, NHW), jnp.float32),
        in_specs=[vmem, vmem, vmem],
        out_specs=vmem,
        scratch_shapes=[pltpu.VMEM((c2 + num_layers * k, NHW), jnp.float32)],
        compiler_params=pltpu.CompilerParams(vmem_limit_bytes=32 * 1024 * 1024),
    )(x_cm, w_slab, masks)
    return jnp.transpose(out.reshape(C_out, N, H, W), (1, 0, 2, 3))


# ---------------------------------------------------------------------------
# Host-side parameter packing (done once)
# ---------------------------------------------------------------------------

def _append_order_rows(i, c2, k):
    """Accumulator row (append order: [x, f_0, f_1, ...]) of each reference-
    order input channel of dense layer i (ref order: [f_{i-1},...,f_1, x, f_0])."""
    src = []
    for j in range(i - 1, 0, -1):
        src.extend(range(c2 + j * k, c2 + (j + 1) * k))
    src.extend(range(c2))
    if i >= 1:
        src.extend(range(c2, c2 + k))
    return np.asarray(src, np.int64)


def prepare_kernel_params(layer_params, c2, k):
    """Pack all folded weights/biases into ONE pre-padded f32 slab.

    Per layer i, at static row offsets (r1_i, r2_i):
      rows [r1, r1+4k): cols [0,cin) = permuted 1x1 weight, col `cin` = bias
      rows [r2, r2+9k): 9 taps of the 3x3 weight, (k,4k) each, (dy,dx)
                        row-major; the centre-tap rows carry the bias in col 4k
    Returns (slab, [(r1_i, r2_i), ...]).
    """
    L = len(layer_params)
    k4 = 4 * k
    max_cin = c2 + (L - 1) * k
    kpad = max(k4 + 1, max_cin + 1)

    blocks, offs, r = [], [], 0
    for i, (w1, b1, w2, b2) in enumerate(layer_params):
        cin = c2 + i * k
        blk1 = np.zeros((k4, kpad), np.float32)
        blk1[:, _append_order_rows(i, c2, k)] = np.asarray(w1).T   # (4k, cin)
        blk1[:, cin] = np.asarray(b1)
        r1 = r
        blocks.append(blk1)
        r += k4

        r2 = r
        w2_np = np.asarray(w2)                                     # HWIO (3,3,4k,k)
        for t in range(9):
            ky, kx = divmod(t, 3)
            blk = np.zeros((k, kpad), np.float32)
            blk[:, 0:k4] = w2_np[ky, kx].T                         # (k, 4k)
            if t == 4:
                blk[:, k4] = np.asarray(b2)
            blocks.append(blk)
            r += k
        offs.append((r1, r2))
    return jnp.asarray(np.concatenate(blocks, axis=0)), offs


def make_boundary_masks(N, H, W):
    """(9, N*H*W) f32 masks: 1 where the 3x3 tap's source pixel lies inside the
    SAME image (also kills the cross-image wrap of pltpu.roll along lanes)."""
    hw = H * W
    q = np.arange(N * hw) % hw
    yy, xx = q // W, q % W
    ms = []
    for dy in (-1, 0, 1):
        for dx in (-1, 0, 1):
            ms.append(((yy + dy >= 0) & (yy + dy < H) &
                       (xx + dx >= 0) & (xx + dx < W)).astype(np.float32))
    return jnp.asarray(np.stack(ms, axis=0))


# ---------------------------------------------------------------------------
# Synthetic parameters (BN folded into conv weight + bias)
# ---------------------------------------------------------------------------

def _fold_bn(gamma, beta, mean, var, eps=1e-5):
    s = gamma / jnp.sqrt(var + eps)
    t = beta - mean * s
    return s, t


def make_params(key, k0, num_layers, k):
    """Per layer: (w1 (cin,4k), b1 (4k,), w2 HWIO (3,3,4k,k), b2 (k,))."""
    params = []
    for i in range(num_layers):
        cin = k0 + i * k
        key, kw1, kg1, kb1, km1, kv1, kw2, kg2, kb2, km2, kv2 = jax.random.split(key, 11)
        w1 = 0.1 * jax.random.normal(kw1, (cin, 4 * k), jnp.float32)
        g1 = 1.0 + 0.1 * jax.random.normal(kg1, (4 * k,), jnp.float32)
        be1 = 0.1 * jax.random.normal(kb1, (4 * k,), jnp.float32)
        m1 = 0.05 * jax.random.normal(km1, (4 * k,), jnp.float32)
        v1 = 1.0 + 0.1 * jnp.abs(jax.random.normal(kv1, (4 * k,), jnp.float32))
        s1, t1 = _fold_bn(g1, be1, m1, v1)
        w1f = w1 * s1[None, :]

        w2 = 0.1 * jax.random.normal(kw2, (3, 3, 4 * k, k), jnp.float32)
        g2 = 1.0 + 0.1 * jax.random.normal(kg2, (k,), jnp.float32)
        be2 = 0.1 * jax.random.normal(kb2, (k,), jnp.float32)
        m2 = 0.05 * jax.random.normal(km2, (k,), jnp.float32)
        v2 = 1.0 + 0.1 * jnp.abs(jax.random.normal(kv2, (k,), jnp.float32))
        s2, t2 = _fold_bn(g2, be2, m2, v2)
        w2f = w2 * s2[None, None, None, :]
        params.append((w1f, t1, w2f, t2))
    return params


# ---------------------------------------------------------------------------
# Pure-JAX reference (lax.conv) for correctness checking
# ---------------------------------------------------------------------------

def _ref_conv_bn_relu(x, w_hwio, b, padding):
    y = jax.lax.conv_general_dilated(
        x, w_hwio, window_strides=(1, 1), padding=padding,
        dimension_numbers=("NHWC", "HWIO", "NHWC"))
    return jnp.maximum(y + b, 0.0)


def csp_dense_block_ref(x_nchw, layer_params, part1_chnls):
    x = jnp.transpose(x_nchw, (0, 2, 3, 1))
    part1 = x[..., :part1_chnls]
    p2 = x[..., part1_chnls:]
    out = None
    for li, (w1, b1, w2, b2) in enumerate(layer_params):
        inp = p2 if li == 0 else out
        h = _ref_conv_bn_relu(inp, w1.reshape(1, 1, *w1.shape), b1, "VALID")
        feat = _ref_conv_bn_relu(h, w2, b2, "SAME")
        out = jnp.concatenate([inp, feat] if li == 0 else [feat, out], axis=-1)
    out = jnp.concatenate([part1, out], axis=-1)
    return jnp.transpose(out, (0, 3, 1, 2))


# ---------------------------------------------------------------------------

if __name__ == "__main__":
    # Module config: in_channels=4, num_layers=3, k=4, part_ratio=0.5
    # (3 layers so that the non-trivial "prepend -> append" column permutation
    # path is exercised and checked against the reference).
    in_channels, num_layers, k, part_ratio = 4, 3, 4, 0.5
    part1_chnls = int(in_channels * part_ratio)
    part2_chnls = in_channels - part1_chnls
    N, H, W = 2, 16, 16

    x = jax.random.normal(jax.random.PRNGKey(0), (N, in_channels, H, W), jnp.float32)
    params = make_params(jax.random.PRNGKey(1), k0=part2_chnls,
                         num_layers=num_layers, k=k)
    w_slab, offs = prepare_kernel_params(params, c2=part2_chnls, k=k)
    masks = make_boundary_masks(N, H, W)

    fwd = jax.jit(functools.partial(csp_dense_block, part1_chnls=part1_chnls,
                                    num_layers=num_layers, k=k, offs=offs))
    out = jax.block_until_ready(fwd(x, w_slab, masks))

    expected_channels = in_channels + num_layers * k
    assert out.shape == (N, expected_channels, H, W), out.shape

    ref = csp_dense_block_ref(x, params, part1_chnls)
    max_err = float(jnp.max(jnp.abs(out - ref)))
    assert jnp.allclose(out, ref, atol=1e-3, rtol=1e-3), max_err

    print("KERNEL_OK")
</pallas_src>

<mosaic_0001>
module attributes {stable_mosaic.version = 11 : i64} {
  func.func @_csp_dense_kernel(%arg0: memref<4x512xf32, #tpu.memory_space<vmem>>, %arg1: memref<156x17xf32, #tpu.memory_space<vmem>>, %arg2: memref<9x512xf32, #tpu.memory_space<vmem>>, %arg3: memref<16x512xf32, #tpu.memory_space<vmem>>, %arg4: memref<14x512xf32, #tpu.memory_space<vmem>>) attributes {dimension_semantics = [], scalar_prefetch = 0 : i64, scratch_operands = 1 : i64, tpu.core_type = #tpu.core_type<tc>} {
    %c0 = arith.constant 0 : index
    %c0_0 = arith.constant 0 : index
    %0 = vector.load %arg0[%c0, %c0_0] : memref<4x512xf32, #tpu.memory_space<vmem>>, vector<2x512xf32>
    %c0_1 = arith.constant 0 : index
    %c0_2 = arith.constant 0 : index
    %1 = vector.load %arg3[%c0_1, %c0_2] : memref<16x512xf32, #tpu.memory_space<vmem>>, vector<2x512xf32>
    tpu.vector_store %arg3[%c0_1, %c0_2], %0 {strides = array<i32>} : memref<16x512xf32, #tpu.memory_space<vmem>>, vector<2x512xf32>,
    %c2 = arith.constant 2 : index
    %c0_3 = arith.constant 0 : index
    %2 = vector.load %arg0[%c2, %c0_3] : memref<4x512xf32, #tpu.memory_space<vmem>>, vector<2x512xf32>
    %c10 = arith.constant 10 : index
    %c0_4 = arith.constant 0 : index
    %3 = vector.load %arg3[%c10, %c0_4] : memref<16x512xf32, #tpu.memory_space<vmem>>, vector<2x512xf32>
    tpu.vector_store %arg3[%c10, %c0_4], %2 {strides = array<i32>} : memref<16x512xf32, #tpu.memory_space<vmem>>, vector<2x512xf32>,
    %c0_5 = arith.constant 0 : index
    %c0_6 = arith.constant 0 : index
    %4 = vector.load %arg4[%c0_5, %c0_6] : memref<14x512xf32, #tpu.memory_space<vmem>>, vector<2x512xf32>
    tpu.vector_store %arg4[%c0_5, %c0_6], %2 {strides = array<i32>} : memref<14x512xf32, #tpu.memory_space<vmem>>, vector<2x512xf32>,
    %c0_7 = arith.constant 0 : index
    %c0_8 = arith.constant 0 : index
    %5 = vector.load %arg1[%c0_7, %c0_8] : memref<156x17xf32, #tpu.memory_space<vmem>>, vector<16x2xf32>
    %c0_9 = arith.constant 0 : index
    %c2_10 = arith.constant 2 : index
    %6 = vector.load %arg1[%c0_9, %c2_10] : memref<156x17xf32, #tpu.memory_space<vmem>>, vector<16x1xf32>
    %c0_11 = arith.constant 0 : index
    %c0_12 = arith.constant 0 : index
    %7 = vector.load %arg4[%c0_11, %c0_12] : memref<14x512xf32, #tpu.memory_space<vmem>>, vector<2x512xf32>
    %cst = arith.constant dense<0.000000e+00> : vector<16x512xf32>
    %8 = tpu.matmul %5, %7, %cst {dimension_numbers = #tpu.dot_dimension_numbers<[1], [0], [0], [1], [0, 0, 1, 1], [], []>} : vector<16x2xf32>, vector<2x512xf32>, vector<16x512xf32> -> vector<16x512xf32>
    %9 = vector.broadcast %6 : vector<16x1xf32> to vector<16x512xf32>
    %10 = arith.addf %8, %9 : vector<16x512xf32>
    %cst_13 = arith.constant 0.000000e+00 : f32
    %11 = vector.broadcast %cst_13 : f32 to vector<16x512xf32>
    %12 = arith.maximumf %10, %11 : vector<16x512xf32>
    %c17_i32 = arith.constant 17 : i32
    %13 = tpu.dynamic_rotate %12 by %c17_i32 dim 1 : vector<16x512xf32>, i32 -> vector<16x512xf32>
    %c0_14 = arith.constant 0 : index
    %c0_15 = arith.constant 0 : index
    %14 = vector.load %arg2[%c0_14, %c0_15] : memref<9x512xf32, #tpu.memory_space<vmem>>, vector<1x512xf32>
    %15 = vector.broadcast %14 : vector<1x512xf32> to vector<16x512xf32>
    %16 = arith.mulf %13, %15 : vector<16x512xf32>
    %c16 = arith.constant 16 : index
    %c0_16 = arith.constant 0 : index
    %17 = vector.load %arg1[%c16, %c0_16] : memref<156x17xf32, #tpu.memory_space<vmem>>, vector<4x16xf32>
    %cst_17 = arith.constant dense<0.000000e+00> : vector<4x512xf32>
    %18 = tpu.matmul %17, %16, %cst_17 {dimension_numbers = #tpu.dot_dimension_numbers<[1], [0], [0], [1], [0, 0, 1, 1], [], []>} : vector<4x16xf32>, vector<16x512xf32>, vector<4x512xf32> -> vector<4x512xf32>
    %c16_i32 = arith.constant 16 : i32
    %19 = tpu.dynamic_rotate %12 by %c16_i32 dim 1 : vector<16x512xf32>, i32 -> vector<16x512xf32>
    %c1 = arith.constant 1 : index
    %c0_18 = arith.constant 0 : index
    %20 = vector.load %arg2[%c1, %c0_18] : memref<9x512xf32, #tpu.memory_space<vmem>>, vector<1x512xf32>
    %21 = vector.broadcast %20 : vector<1x512xf32> to vector<16x512xf32>
    %22 = arith.mulf %19, %21 : vector<16x512xf32>
    %c20 = arith.constant 20 : index
    %c0_19 = arith.constant 0 : index
    %23 = vector.load %arg1[%c20, %c0_19] : memref<156x17xf32, #tpu.memory_space<vmem>>, vector<4x16xf32>
    %cst_20 = arith.constant dense<0.000000e+00> : vector<4x512xf32>
    %24 = tpu.matmul %23, %22, %cst_20 {dimension_numbers = #tpu.dot_dimension_numbers<[1], [0], [0], [1], [0, 0, 1, 1], [], []>} : vector<4x16xf32>, vector<16x512xf32>, vector<4x512xf32> -> vector<4x512xf32>
    %25 = arith.addf %18, %24 : vector<4x512xf32>
    %c15_i32 = arith.constant 15 : i32
    %26 = tpu.dynamic_rotate %12 by %c15_i32 dim 1 : vector<16x512xf32>, i32 -> vector<16x512xf32>
    %c2_21 = arith.constant 2 : index
    %c0_22 = arith.constant 0 : index
    %27 = vector.load %arg2[%c2_21, %c0_22] : memref<9x512xf32, #tpu.memory_space<vmem>>, vector<1x512xf32>
    %28 = vector.broadcast %27 : vector<1x512xf32> to vector<16x512xf32>
    %29 = arith.mulf %26, %28 : vector<16x512xf32>
    %c24 = arith.constant 24 : index
    %c0_23 = arith.constant 0 : index
    %30 = vector.load %arg1[%c24, %c0_23] : memref<156x17xf32, #tpu.memory_space<vmem>>, vector<4x16xf32>
    %cst_24 = arith.constant dense<0.000000e+00> : vector<4x512xf32>
    %31 = tpu.matmul %30, %29, %cst_24 {dimension_numbers = #tpu.dot_dimension_numbers<[1], [0], [0], [1], [0, 0, 1, 1], [], []>} : vector<4x16xf32>, vector<16x512xf32>, vector<4x512xf32> -> vector<4x512xf32>
    %32 = arith.addf %25, %31 : vector<4x512xf32>
    %c1_i32 = arith.constant 1 : i32
    %33 = tpu.dynamic_rotate %12 by %c1_i32 dim 1 : vector<16x512xf32>, i32 -> vector<16x512xf32>
    %c3 = arith.constant 3 : index
    %c0_25 = arith.constant 0 : index
    %34 = vector.load %arg2[%c3, %c0_25] : memref<9x512xf32, #tpu.memory_space<vmem>>, vector<1x512xf32>
    %35 = vector.broadcast %34 : vector<1x512xf32> to vector<16x512xf32>
    %36 = arith.mulf %33, %35 : vector<16x512xf32>
    %c28 = arith.constant 28 : index
    %c0_26 = arith.constant 0 : index
    %37 = vector.load %arg1[%c28, %c0_26] : memref<156x17xf32, #tpu.memory_space<vmem>>, vector<4x16xf32>
    %cst_27 = arith.constant dense<0.000000e+00> : vector<4x512xf32>
    %38 = tpu.matmul %37, %36, %cst_27 {dimension_numbers = #tpu.dot_dimension_numbers<[1], [0], [0], [1], [0, 0, 1, 1], [], []>} : vector<4x16xf32>, vector<16x512xf32>, vector<4x512xf32> -> vector<4x512xf32>
    %39 = arith.addf %32, %38 : vector<4x512xf32>
    %c32 = arith.constant 32 : index
    %c0_28 = arith.constant 0 : index
    %40 = vector.load %arg1[%c32, %c0_28] : memref<156x17xf32, #tpu.memory_space<vmem>>, vector<4x16xf32>
    %cst_29 = arith.constant dense<0.000000e+00> : vector<4x512xf32>
    %41 = tpu.matmul %40, %12, %cst_29 {dimension_numbers = #tpu.dot_dimension_numbers<[1], [0], [0], [1], [0, 0, 1, 1], [], []>} : vector<4x16xf32>, vector<16x512xf32>, vector<4x512xf32> -> vector<4x512xf32>
    %42 = arith.addf %39, %41 : vector<4x512xf32>
    %c511_i32 = arith.constant 511 : i32
    %43 = tpu.dynamic_rotate %12 by %c511_i32 dim 1 : vector<16x512xf32>, i32 -> vector<16x512xf32>
    %c5 = arith.constant 5 : index
    %c0_30 = arith.constant 0 : index
    %44 = vector.load %arg2[%c5, %c0_30] : memref<9x512xf32, #tpu.memory_space<vmem>>, vector<1x512xf32>
    %45 = vector.broadcast %44 : vector<1x512xf32> to vector<16x512xf32>
    %46 = arith.mulf %43, %45 : vector<16x512xf32>
    %c36 = arith.constant 36 : index
    %c0_31 = arith.constant 0 : index
    %47 = vector.load %arg1[%c36, %c0_31] : memref<156x17xf32, #tpu.memory_space<vmem>>, vector<4x16xf32>
    %cst_32 = arith.constant dense<0.000000e+00> : vector<4x512xf32>
    %48 = tpu.matmul %47, %46, %cst_32 {dimension_numbers = #tpu.dot_dimension_numbers<[1], [0], [0], [1], [0, 0, 1, 1], [], []>} : vector<4x16xf32>, vector<16x512xf32>, vector<4x512xf32> -> vector<4x512xf32>
    %49 = arith.addf %42, %48 : vector<4x512xf32>
    %c497_i32 = arith.constant 497 : i32
    %50 = tpu.dynamic_rotate %12 by %c497_i32 dim 1 : vector<16x512xf32>, i32 -> vector<16x512xf32>
    %c6 = arith.constant 6 : index
    %c0_33 = arith.constant 0 : index
    %51 = vector.load %arg2[%c6, %c0_33] : memref<9x512xf32, #tpu.memory_space<vmem>>, vector<1x512xf32>
    %52 = vector.broadcast %51 : vector<1x512xf32> to vector<16x512xf32>
    %53 = arith.mulf %50, %52 : vector<16x512xf32>
    %c40 = arith.constant 40 : index
    %c0_34 = arith.constant 0 : index
    %54 = vector.load %arg1[%c40, %c0_34] : memref<156x17xf32, #tpu.memory_space<vmem>>, vector<4x16xf32>
    %cst_35 = arith.constant dense<0.000000e+00> : vector<4x512xf32>
    %55 = tpu.matmul %54, %53, %cst_35 {dimension_numbers = #tpu.dot_dimension_numbers<[1], [0], [0], [1], [0, 0, 1, 1], [], []>} : vector<4x16xf32>, vector<16x512xf32>, vector<4x512xf32> -> vector<4x512xf32>
    %56 = arith.addf %49, %55 : vector<4x512xf32>
    %c496_i32 = arith.constant 496 : i32
    %57 = tpu.dynamic_rotate %12 by %c496_i32 dim 1 : vector<16x512xf32>, i32 -> vector<16x512xf32>
    %c7 = arith.constant 7 : index
    %c0_36 = arith.constant 0 : index
    %58 = vector.load %arg2[%c7, %c0_36] : memref<9x512xf32, #tpu.memory_space<vmem>>, vector<1x512xf32>
    %59 = vector.broadcast %58 : vector<1x512xf32> to vector<16x512xf32>
    %60 = arith.mulf %57, %59 : vector<16x512xf32>
    %c44 = arith.constant 44 : index
    %c0_37 = arith.constant 0 : index
    %61 = vector.load %arg1[%c44, %c0_37] : memref<156x17xf32, #tpu.memory_space<vmem>>, vector<4x16xf32>
    %cst_38 = arith.constant dense<0.000000e+00> : vector<4x512xf32>
    %62 = tpu.matmul %61, %60, %cst_38 {dimension_numbers = #tpu.dot_dimension_numbers<[1], [0], [0], [1], [0, 0, 1, 1], [], []>} : vector<4x16xf32>, vector<16x512xf32>, vector<4x512xf32> -> vector<4x512xf32>
    %63 = arith.addf %56, %62 : vector<4x512xf32>
    %c495_i32 = arith.constant 495 : i32
    %64 = tpu.dynamic_rotate %12 by %c495_i32 dim 1 : vector<16x512xf32>, i32 -> vector<16x512xf32>
    %c8 = arith.constant 8 : index
    %c0_39 = arith.constant 0 : index
    %65 = vector.load %arg2[%c8, %c0_39] : memref<9x512xf32, #tpu.memory_space<vmem>>, vector<1x512xf32>
    %66 = vector.broadcast %65 : vector<1x512xf32> to vector<16x512xf32>
    %67 = arith.mulf %64, %66 : vector<16x512xf32>
    %c48 = arith.constant 48 : index
    %c0_40 = arith.constant 0 : index
    %68 = vector.load %arg1[%c48, %c0_40] : memref<156x17xf32, #tpu.memory_space<vmem>>, vector<4x16xf32>
    %cst_41 = arith.constant dense<0.000000e+00> : vector<4x512xf32>
    %69 = tpu.matmul %68, %67, %cst_41 {dimension_numbers = #tpu.dot_dimension_numbers<[1], [0], [0], [1], [0, 0, 1, 1], [], []>} : vector<4x16xf32>, vector<16x512xf32>, vector<4x512xf32> -> vector<4x512xf32>
    %70 = arith.addf %63, %69 : vector<4x512xf32>
    %c32_42 = arith.constant 32 : index
    %c16_43 = arith.constant 16 : index
    %71 = vector.load %arg1[%c32_42, %c16_43] : memref<156x17xf32, #tpu.memory_space<vmem>>, vector<4x1xf32>
    %72 = vector.broadcast %71 : vector<4x1xf32> to vector<4x512xf32>
    %73 = arith.addf %70, %72 : vector<4x512xf32>
    %cst_44 = arith.constant 0.000000e+00 : f32
    %74 = vector.broadcast %cst_44 : f32 to vector<4x512xf32>
    %75 = arith.maximumf %73, %74 : vector<4x512xf32>
    %c12 = arith.constant 12 : index
    %c0_45 = arith.constant 0 : index
    %76 = vector.load %arg3[%c12, %c0_45] : memref<16x512xf32, #tpu.memory_space<vmem>>, vector<4x512xf32>
    tpu.vector_store %arg3[%c12, %c0_45], %75 {strides = array<i32>} : memref<16x512xf32, #tpu.memory_space<vmem>>, vector<4x512xf32>,
    %c2_46 = arith.constant 2 : index
    %c0_47 = arith.constant 0 : index
    %77 = vector.load %arg4[%c2_46, %c0_47] : memref<14x512xf32, #tpu.memory_space<vmem>>, vector<4x512xf32>
    tpu.vector_store %arg4[%c2_46, %c0_47], %75 {strides = array<i32>} : memref<14x512xf32, #tpu.memory_space<vmem>>, vector<4x512xf32>,
    %c52 = arith.constant 52 : index
    %c0_48 = arith.constant 0 : index
    %78 = vector.load %arg1[%c52, %c0_48] : memref<156x17xf32, #tpu.memory_space<vmem>>, vector<16x6xf32>
    %c52_49 = arith.constant 52 : index
    %c6_50 = arith.constant 6 : index
    %79 = vector.load %arg1[%c52_49, %c6_50] : memref<156x17xf32, #tpu.memory_space<vmem>>, vector<16x1xf32>
    %c0_51 = arith.constant 0 : index
    %c0_52 = arith.constant 0 : index
    %80 = vector.load %arg4[%c0_51, %c0_52] : memref<14x512xf32, #tpu.memory_space<vmem>>, vector<6x512xf32>
    %cst_53 = arith.constant dense<0.000000e+00> : vector<16x512xf32>
    %81 = tpu.matmul %78, %80, %cst_53 {dimension_numbers = #tpu.dot_dimension_numbers<[1], [0], [0], [1], [0, 0, 1, 1], [], []>} : vector<16x6xf32>, vector<6x512xf32>, vector<16x512xf32> -> vector<16x512xf32>
    %82 = vector.broadcast %79 : vector<16x1xf32> to vector<16x512xf32>
    %83 = arith.addf %81, %82 : vector<16x512xf32>
    %cst_54 = arith.constant 0.000000e+00 : f32
    %84 = vector.broadcast %cst_54 : f32 to vector<16x512xf32>
    %85 = arith.maximumf %83, %84 : vector<16x512xf32>
    %c17_i32_55 = arith.constant 17 : i32
    %86 = tpu.dynamic_rotate %85 by %c17_i32_55 dim 1 : vector<16x512xf32>, i32 -> vector<16x512xf32>
    %c0_56 = arith.constant 0 : index
    %c0_57 = arith.constant 0 : index
    %87 = vector.load %arg2[%c0_56, %c0_57] : memref<9x512xf32, #tpu.memory_space<vmem>>, vector<1x512xf32>
    %88 = vector.broadcast %87 : vector<1x512xf32> to vector<16x512xf32>
    %89 = arith.mulf %86, %88 : vector<16x512xf32>
    %c68 = arith.constant 68 : index
    %c0_58 = arith.constant 0 : index
    %90 = vector.load %arg1[%c68, %c0_58] : memref<156x17xf32, #tpu.memory_space<vmem>>, vector<4x16xf32>
    %cst_59 = arith.constant dense<0.000000e+00> : vector<4x512xf32>
    %91 = tpu.matmul %90, %89, %cst_59 {dimension_numbers = #tpu.dot_dimension_numbers<[1], [0], [0], [1], [0, 0, 1, 1], [], []>} : vector<4x16xf32>, vector<16x512xf32>, vector<4x512xf32> -> vector<4x512xf32>
    %c16_i32_60 = arith.constant 16 : i32
    %92 = tpu.dynamic_rotate %85 by %c16_i32_60 dim 1 : vector<16x512xf32>, i32 -> vector<16x512xf32>
    %c1_61 = arith.constant 1 : index
    %c0_62 = arith.constant 0 : index
    %93 = vector.load %arg2[%c1_61, %c0_62] : memref<9x512xf32, #tpu.memory_space<vmem>>, vector<1x512xf32>
    %94 = vector.broadcast %93 : vector<1x512xf32> to vector<16x512xf32>
    %95 = arith.mulf %92, %94 : vector<16x512xf32>
    %c72 = arith.constant 72 : index
    %c0_63 = arith.constant 0 : index
    %96 = vector.load %arg1[%c72, %c0_63] : memref<156x17xf32, #tpu.memory_space<vmem>>, vector<4x16xf32>
    %cst_64 = arith.constant dense<0.000000e+00> : vector<4x512xf32>
    %97 = tpu.matmul %96, %95, %cst_64 {dimension_numbers = #tpu.dot_dimension_numbers<[1], [0], [0], [1], [0, 0, 1, 1], [], []>} : vector<4x16xf32>, vector<16x512xf32>, vector<4x512xf32> -> vector<4x512xf32>
    %98 = arith.addf %91, %97 : vector<4x512xf32>
    %c15_i32_65 = arith.constant 15 : i32
    %99 = tpu.dynamic_rotate %85 by %c15_i32_65 dim 1 : vector<16x512xf32>, i32 -> vector<16x512xf32>
    %c2_66 = arith.constant 2 : index
    %c0_67 = arith.constant 0 : index
    %100 = vector.load %arg2[%c2_66, %c0_67] : memref<9x512xf32, #tpu.memory_space<vmem>>, vector<1x512xf32>
    %101 = vector.broadcast %100 : vector<1x512xf32> to vector<16x512xf32>
    %102 = arith.mulf %99, %101 : vector<16x512xf32>
    %c76 = arith.constant 76 : index
    %c0_68 = arith.constant 0 : index
    %103 = vector.load %arg1[%c76, %c0_68] : memref<156x17xf32, #tpu.memory_space<vmem>>, vector<4x16xf32>
    %cst_69 = arith.constant dense<0.000000e+00> : vector<4x512xf32>
    %104 = tpu.matmul %103, %102, %cst_69 {dimension_numbers = #tpu.dot_dimension_numbers<[1], [0], [0], [1], [0, 0, 1, 1], [], []>} : vector<4x16xf32>, vector<16x512xf32>, vector<4x512xf32> -> vector<4x512xf32>
    %105 = arith.addf %98, %104 : vector<4x512xf32>
    %c1_i32_70 = arith.constant 1 : i32
    %106 = tpu.dynamic_rotate %85 by %c1_i32_70 dim 1 : vector<16x512xf32>, i32 -> vector<16x512xf32>
    %c3_71 = arith.constant 3 : index
    %c0_72 = arith.constant 0 : index
    %107 = vector.load %arg2[%c3_71, %c0_72] : memref<9x512xf32, #tpu.memory_space<vmem>>, vector<1x512xf32>
    %108 = vector.broadcast %107 : vector<1x512xf32> to vector<16x512xf32>
    %109 = arith.mulf %106, %108 : vector<16x512xf32>
    %c80 = arith.constant 80 : index
    %c0_73 = arith.constant 0 : index
    %110 = vector.load %arg1[%c80, %c0_73] : memref<156x17xf32, #tpu.memory_space<vmem>>, vector<4x16xf32>
    %cst_74 = arith.constant dense<0.000000e+00> : vector<4x512xf32>
    %111 = tpu.matmul %110, %109, %cst_74 {dimension_numbers = #tpu.dot_dimension_numbers<[1], [0], [0], [1], [0, 0, 1, 1], [], []>} : vector<4x16xf32>, vector<16x512xf32>, vector<4x512xf32> -> vector<4x512xf32>
    %112 = arith.addf %105, %111 : vector<4x512xf32>
    %c84 = arith.constant 84 : index
    %c0_75 = arith.constant 0 : index
    %113 = vector.load %arg1[%c84, %c0_75] : memref<156x17xf32, #tpu.memory_space<vmem>>, vector<4x16xf32>
    %cst_76 = arith.constant dense<0.000000e+00> : vector<4x512xf32>
    %114 = tpu.matmul %113, %85, %cst_76 {dimension_numbers = #tpu.dot_dimension_numbers<[1], [0], [0], [1], [0, 0, 1, 1], [], []>} : vector<4x16xf32>, vector<16x512xf32>, vector<4x512xf32> -> vector<4x512xf32>
    %115 = arith.addf %112, %114 : vector<4x512xf32>
    %c511_i32_77 = arith.constant 511 : i32
    %116 = tpu.dynamic_rotate %85 by %c511_i32_77 dim 1 : vector<16x512xf32>, i32 -> vector<16x512xf32>
    %c5_78 = arith.constant 5 : index
    %c0_79 = arith.constant 0 : index
    %117 = vector.load %arg2[%c5_78, %c0_79] : memref<9x512xf32, #tpu.memory_space<vmem>>, vector<1x512xf32>
    %118 = vector.broadcast %117 : vector<1x512xf32> to vector<16x512xf32>
    %119 = arith.mulf %116, %118 : vector<16x512xf32>
    %c88 = arith.constant 88 : index
    %c0_80 = arith.constant 0 : index
    %120 = vector.load %arg1[%c88, %c0_80] : memref<156x17xf32, #tpu.memory_space<vmem>>, vector<4x16xf32>
    %cst_81 = arith.constant dense<0.000000e+00> : vector<4x512xf32>
    %121 = tpu.matmul %120, %119, %cst_81 {dimension_numbers = #tpu.dot_dimension_numbers<[1], [0], [0], [1], [0, 0, 1, 1], [], []>} : vector<4x16xf32>, vector<16x512xf32>, vector<4x512xf32> -> vector<4x512xf32>
    %122 = arith.addf %115, %121 : vector<4x512xf32>
    %c497_i32_82 = arith.constant 497 : i32
    %123 = tpu.dynamic_rotate %85 by %c497_i32_82 dim 1 : vector<16x512xf32>, i32 -> vector<16x512xf32>
    %c6_83 = arith.constant 6 : index
    %c0_84 = arith.constant 0 : index
    %124 = vector.load %arg2[%c6_83, %c0_84] : memref<9x512xf32, #tpu.memory_space<vmem>>, vector<1x512xf32>
    %125 = vector.broadcast %124 : vector<1x512xf32> to vector<16x512xf32>
    %126 = arith.mulf %123, %125 : vector<16x512xf32>
    %c92 = arith.constant 92 : index
    %c0_85 = arith.constant 0 : index
    %127 = vector.load %arg1[%c92, %c0_85] : memref<156x17xf32, #tpu.memory_space<vmem>>, vector<4x16xf32>
    %cst_86 = arith.constant dense<0.000000e+00> : vector<4x512xf32>
    %128 = tpu.matmul %127, %126, %cst_86 {dimension_numbers = #tpu.dot_dimension_numbers<[1], [0], [0], [1], [0, 0, 1, 1], [], []>} : vector<4x16xf32>, vector<16x512xf32>, vector<4x512xf32> -> vector<4x512xf32>
    %129 = arith.addf %122, %128 : vector<4x512xf32>
    %c496_i32_87 = arith.constant 496 : i32
    %130 = tpu.dynamic_rotate %85 by %c496_i32_87 dim 1 : vector<16x512xf32>, i32 -> vector<16x512xf32>
    %c7_88 = arith.constant 7 : index
    %c0_89 = arith.constant 0 : index
    %131 = vector.load %arg2[%c7_88, %c0_89] : memref<9x512xf32, #tpu.memory_space<vmem>>, vector<1x512xf32>
    %132 = vector.broadcast %131 : vector<1x512xf32> to vector<16x512xf32>
    %133 = arith.mulf %130, %132 : vector<16x512xf32>
    %c96 = arith.constant 96 : index
    %c0_90 = arith.constant 0 : index
    %134 = vector.load %arg1[%c96, %c0_90] : memref<156x17xf32, #tpu.memory_space<vmem>>, vector<4x16xf32>
    %cst_91 = arith.constant dense<0.000000e+00> : vector<4x512xf32>
    %135 = tpu.matmul %134, %133, %cst_91 {dimension_numbers = #tpu.dot_dimension_numbers<[1], [0], [0], [1], [0, 0, 1, 1], [], []>} : vector<4x16xf32>, vector<16x512xf32>, vector<4x512xf32> -> vector<4x512xf32>
    %136 = arith.addf %129, %135 : vector<4x512xf32>
    %c495_i32_92 = arith.constant 495 : i32
    %137 = tpu.dynamic_rotate %85 by %c495_i32_92 dim 1 : vector<16x512xf32>, i32 -> vector<16x512xf32>
    %c8_93 = arith.constant 8 : index
    %c0_94 = arith.constant 0 : index
    %138 = vector.load %arg2[%c8_93, %c0_94] : memref<9x512xf32, #tpu.memory_space<vmem>>, vector<1x512xf32>
    %139 = vector.broadcast %138 : vector<1x512xf32> to vector<16x512xf32>
    %140 = arith.mulf %137, %139 : vector<16x512xf32>
    %c100 = arith.constant 100 : index
    %c0_95 = arith.constant 0 : index
    %141 = vector.load %arg1[%c100, %c0_95] : memref<156x17xf32, #tpu.memory_space<vmem>>, vector<4x16xf32>
    %cst_96 = arith.constant dense<0.000000e+00> : vector<4x512xf32>
    %142 = tpu.matmul %141, %140, %cst_96 {dimension_numbers = #tpu.dot_dimension_numbers<[1], [0], [0], [1], [0, 0, 1, 1], [], []>} : vector<4x16xf32>, vector<16x512xf32>, vector<4x512xf32> -> vector<4x512xf32>
    %143 = arith.addf %136, %142 : vector<4x512xf32>
    %c84_97 = arith.constant 84 : index
    %c16_98 = arith.constant 16 : index
    %144 = vector.load %arg1[%c84_97, %c16_98] : memref<156x17xf32, #tpu.memory_space<vmem>>, vector<4x1xf32>
    %145 = vector.broadcast %144 : vector<4x1xf32> to vector<4x512xf32>
    %146 = arith.addf %143, %145 : vector<4x512xf32>
    %cst_99 = arith.constant 0.000000e+00 : f32
    %147 = vector.broadcast %cst_99 : f32 to vector<4x512xf32>
    %148 = arith.maximumf %146, %147 : vector<4x512xf32>
    %c6_100 = arith.constant 6 : index
    %c0_101 = arith.constant 0 : index
    %149 = vector.load %arg3[%c6_100, %c0_101] : memref<16x512xf32, #tpu.memory_space<vmem>>, vector<4x512xf32>
    tpu.vector_store %arg3[%c6_100, %c0_101], %148 {strides = array<i32>} : memref<16x512xf32, #tpu.memory_space<vmem>>, vector<4x512xf32>,
    %c6_102 = arith.constant 6 : index
    %c0_103 = arith.constant 0 : index
    %150 = vector.load %arg4[%c6_102, %c0_103] : memref<14x512xf32, #tpu.memory_space<vmem>>, vector<4x512xf32>
    tpu.vector_store %arg4[%c6_102, %c0_103], %148 {strides = array<i32>} : memref<14x512xf32, #tpu.memory_space<vmem>>, vector<4x512xf32>,
    %c104 = arith.constant 104 : index
    %c0_104 = arith.constant 0 : index
    %151 = vector.load %arg1[%c104, %c0_104] : memref<156x17xf32, #tpu.memory_space<vmem>>, vector<16x10xf32>
    %c104_105 = arith.constant 104 : index
    %c10_106 = arith.constant 10 : index
    %152 = vector.load %arg1[%c104_105, %c10_106] : memref<156x17xf32, #tpu.memory_space<vmem>>, vector<16x1xf32>
    %c0_107 = arith.constant 0 : index
    %c0_108 = arith.constant 0 : index
    %153 = vector.load %arg4[%c0_107, %c0_108] : memref<14x512xf32, #tpu.memory_space<vmem>>, vector<10x512xf32>
    %cst_109 = arith.constant dense<0.000000e+00> : vector<16x512xf32>
    %154 = tpu.matmul %151, %153, %cst_109 {dimension_numbers = #tpu.dot_dimension_numbers<[1], [0], [0], [1], [0, 0, 1, 1], [], []>} : vector<16x10xf32>, vector<10x512xf32>, vector<16x512xf32> -> vector<16x512xf32>
    %155 = vector.broadcast %152 : vector<16x1xf32> to vector<16x512xf32>
    %156 = arith.addf %154, %155 : vector<16x512xf32>
    %cst_110 = arith.constant 0.000000e+00 : f32
    %157 = vector.broadcast %cst_110 : f32 to vector<16x512xf32>
    %158 = arith.maximumf %156, %157 : vector<16x512xf32>
    %c17_i32_111 = arith.constant 17 : i32
    %159 = tpu.dynamic_rotate %158 by %c17_i32_111 dim 1 : vector<16x512xf32>, i32 -> vector<16x512xf32>
    %c0_112 = arith.constant 0 : index
    %c0_113 = arith.constant 0 : index
    %160 = vector.load %arg2[%c0_112, %c0_113] : memref<9x512xf32, #tpu.memory_space<vmem>>, vector<1x512xf32>
    %161 = vector.broadcast %160 : vector<1x512xf32> to vector<16x512xf32>
    %162 = arith.mulf %159, %161 : vector<16x512xf32>
    %c120 = arith.constant 120 : index
    %c0_114 = arith.constant 0 : index
    %163 = vector.load %arg1[%c120, %c0_114] : memref<156x17xf32, #tpu.memory_space<vmem>>, vector<4x16xf32>
    %cst_115 = arith.constant dense<0.000000e+00> : vector<4x512xf32>
    %164 = tpu.matmul %163, %162, %cst_115 {dimension_numbers = #tpu.dot_dimension_numbers<[1], [0], [0], [1], [0, 0, 1, 1], [], []>} : vector<4x16xf32>, vector<16x512xf32>, vector<4x512xf32> -> vector<4x512xf32>
    %c16_i32_116 = arith.constant 16 : i32
    %165 = tpu.dynamic_rotate %158 by %c16_i32_116 dim 1 : vector<16x512xf32>, i32 -> vector<16x512xf32>
    %c1_117 = arith.constant 1 : index
    %c0_118 = arith.constant 0 : index
    %166 = vector.load %arg2[%c1_117, %c0_118] : memref<9x512xf32, #tpu.memory_space<vmem>>, vector<1x512xf32>
    %167 = vector.broadcast %166 : vector<1x512xf32> to vector<16x512xf32>
    %168 = arith.mulf %165, %167 : vector<16x512xf32>
    %c124 = arith.constant 124 : index
    %c0_119 = arith.constant 0 : index
    %169 = vector.load %arg1[%c124, %c0_119] : memref<156x17xf32, #tpu.memory_space<vmem>>, vector<4x16xf32>
    %cst_120 = arith.constant dense<0.000000e+00> : vector<4x512xf32>
    %170 = tpu.matmul %169, %168, %cst_120 {dimension_numbers = #tpu.dot_dimension_numbers<[1], [0], [0], [1], [0, 0, 1, 1], [], []>} : vector<4x16xf32>, vector<16x512xf32>, vector<4x512xf32> -> vector<4x512xf32>
    %171 = arith.addf %164, %170 : vector<4x512xf32>
    %c15_i32_121 = arith.constant 15 : i32
    %172 = tpu.dynamic_rotate %158 by %c15_i32_121 dim 1 : vector<16x512xf32>, i32 -> vector<16x512xf32>
    %c2_122 = arith.constant 2 : index
    %c0_123 = arith.constant 0 : index
    %173 = vector.load %arg2[%c2_122, %c0_123] : memref<9x512xf32, #tpu.memory_space<vmem>>, vector<1x512xf32>
    %174 = vector.broadcast %173 : vector<1x512xf32> to vector<16x512xf32>
    %175 = arith.mulf %172, %174 : vector<16x512xf32>
    %c128 = arith.constant 128 : index
    %c0_124 = arith.constant 0 : index
    %176 = vector.load %arg1[%c128, %c0_124] : memref<156x17xf32, #tpu.memory_space<vmem>>, vector<4x16xf32>
    %cst_125 = arith.constant dense<0.000000e+00> : vector<4x512xf32>
    %177 = tpu.matmul %176, %175, %cst_125 {dimension_numbers = #tpu.dot_dimension_numbers<[1], [0], [0], [1], [0, 0, 1, 1], [], []>} : vector<4x16xf32>, vector<16x512xf32>, vector<4x512xf32> -> vector<4x512xf32>
    %178 = arith.addf %171, %177 : vector<4x512xf32>
    %c1_i32_126 = arith.constant 1 : i32
    %179 = tpu.dynamic_rotate %158 by %c1_i32_126 dim 1 : vector<16x512xf32>, i32 -> vector<16x512xf32>
    %c3_127 = arith.constant 3 : index
    %c0_128 = arith.constant 0 : index
    %180 = vector.load %arg2[%c3_127, %c0_128] : memref<9x512xf32, #tpu.memory_space<vmem>>, vector<1x512xf32>
    %181 = vector.broadcast %180 : vector<1x512xf32> to vector<16x512xf32>
    %182 = arith.mulf %179, %181 : vector<16x512xf32>
    %c132 = arith.constant 132 : index
    %c0_129 = arith.constant 0 : index
    %183 = vector.load %arg1[%c132, %c0_129] : memref<156x17xf32, #tpu.memory_space<vmem>>, vector<4x16xf32>
    %cst_130 = arith.constant dense<0.000000e+00> : vector<4x512xf32>
    %184 = tpu.matmul %183, %182, %cst_130 {dimension_numbers = #tpu.dot_dimension_numbers<[1], [0], [0], [1], [0, 0, 1, 1], [], []>} : vector<4x16xf32>, vector<16x512xf32>, vector<4x512xf32> -> vector<4x512xf32>
    %185 = arith.addf %178, %184 : vector<4x512xf32>
    %c136 = arith.constant 136 : index
    %c0_131 = arith.constant 0 : index
    %186 = vector.load %arg1[%c136, %c0_131] : memref<156x17xf32, #tpu.memory_space<vmem>>, vector<4x16xf32>
    %cst_132 = arith.constant dense<0.000000e+00> : vector<4x512xf32>
    %187 = tpu.matmul %186, %158, %cst_132 {dimension_numbers = #tpu.dot_dimension_numbers<[1], [0], [0], [1], [0, 0, 1, 1], [], []>} : vector<4x16xf32>, vector<16x512xf32>, vector<4x512xf32> -> vector<4x512xf32>
    %188 = arith.addf %185, %187 : vector<4x512xf32>
    %c511_i32_133 = arith.constant 511 : i32
    %189 = tpu.dynamic_rotate %158 by %c511_i32_133 dim 1 : vector<16x512xf32>, i32 -> vector<16x512xf32>
    %c5_134 = arith.constant 5 : index
    %c0_135 = arith.constant 0 : index
    %190 = vector.load %arg2[%c5_134, %c0_135] : memref<9x512xf32, #tpu.memory_space<vmem>>, vector<1x512xf32>
    %191 = vector.broadcast %190 : vector<1x512xf32> to vector<16x512xf32>
    %192 = arith.mulf %189, %191 : vector<16x512xf32>
    %c140 = arith.constant 140 : index
    %c0_136 = arith.constant 0 : index
    %193 = vector.load %arg1[%c140, %c0_136] : memref<156x17xf32, #tpu.memory_space<vmem>>, vector<4x16xf32>
    %cst_137 = arith.constant dense<0.000000e+00> : vector<4x512xf32>
    %194 = tpu.matmul %193, %192, %cst_137 {dimension_numbers = #tpu.dot_dimension_numbers<[1], [0], [0], [1], [0, 0, 1, 1], [], []>} : vector<4x16xf32>, vector<16x512xf32>, vector<4x512xf32> -> vector<4x512xf32>
    %195 = arith.addf %188, %194 : vector<4x512xf32>
    %c497_i32_138 = arith.constant 497 : i32
    %196 = tpu.dynamic_rotate %158 by %c497_i32_138 dim 1 : vector<16x512xf32>, i32 -> vector<16x512xf32>
    %c6_139 = arith.constant 6 : index
    %c0_140 = arith.constant 0 : index
    %197 = vector.load %arg2[%c6_139, %c0_140] : memref<9x512xf32, #tpu.memory_space<vmem>>, vector<1x512xf32>
    %198 = vector.broadcast %197 : vector<1x512xf32> to vector<16x512xf32>
    %199 = arith.mulf %196, %198 : vector<16x512xf32>
    %c144 = arith.constant 144 : index
    %c0_141 = arith.constant 0 : index
    %200 = vector.load %arg1[%c144, %c0_141] : memref<156x17xf32, #tpu.memory_space<vmem>>, vector<4x16xf32>
    %cst_142 = arith.constant dense<0.000000e+00> : vector<4x512xf32>
    %201 = tpu.matmul %200, %199, %cst_142 {dimension_numbers = #tpu.dot_dimension_numbers<[1], [0], [0], [1], [0, 0, 1, 1], [], []>} : vector<4x16xf32>, vector<16x512xf32>, vector<4x512xf32> -> vector<4x512xf32>
    %202 = arith.addf %195, %201 : vector<4x512xf32>
    %c496_i32_143 = arith.constant 496 : i32
    %203 = tpu.dynamic_rotate %158 by %c496_i32_143 dim 1 : vector<16x512xf32>, i32 -> vector<16x512xf32>
    %c7_144 = arith.constant 7 : index
    %c0_145 = arith.constant 0 : index
    %204 = vector.load %arg2[%c7_144, %c0_145] : memref<9x512xf32, #tpu.memory_space<vmem>>, vector<1x512xf32>
    %205 = vector.broadcast %204 : vector<1x512xf32> to vector<16x512xf32>
    %206 = arith.mulf %203, %205 : vector<16x512xf32>
    %c148 = arith.constant 148 : index
    %c0_146 = arith.constant 0 : index
    %207 = vector.load %arg1[%c148, %c0_146] : memref<156x17xf32, #tpu.memory_space<vmem>>, vector<4x16xf32>
    %cst_147 = arith.constant dense<0.000000e+00> : vector<4x512xf32>
    %208 = tpu.matmul %207, %206, %cst_147 {dimension_numbers = #tpu.dot_dimension_numbers<[1], [0], [0], [1], [0, 0, 1, 1], [], []>} : vector<4x16xf32>, vector<16x512xf32>, vector<4x512xf32> -> vector<4x512xf32>
    %209 = arith.addf %202, %208 : vector<4x512xf32>
    %c495_i32_148 = arith.constant 495 : i32
    %210 = tpu.dynamic_rotate %158 by %c495_i32_148 dim 1 : vector<16x512xf32>, i32 -> vector<16x512xf32>
    %c8_149 = arith.constant 8 : index
    %c0_150 = arith.constant 0 : index
    %211 = vector.load %arg2[%c8_149, %c0_150] : memref<9x512xf32, #tpu.memory_space<vmem>>, vector<1x512xf32>
    %212 = vector.broadcast %211 : vector<1x512xf32> to vector<16x512xf32>
    %213 = arith.mulf %210, %212 : vector<16x512xf32>
    %c152 = arith.constant 152 : index
    %c0_151 = arith.constant 0 : index
    %214 = vector.load %arg1[%c152, %c0_151] : memref<156x17xf32, #tpu.memory_space<vmem>>, vector<4x16xf32>
    %cst_152 = arith.constant dense<0.000000e+00> : vector<4x512xf32>
    %215 = tpu.matmul %214, %213, %cst_152 {dimension_numbers = #tpu.dot_dimension_numbers<[1], [0], [0], [1], [0, 0, 1, 1], [], []>} : vector<4x16xf32>, vector<16x512xf32>, vector<4x512xf32> -> vector<4x512xf32>
    %216 = arith.addf %209, %215 : vector<4x512xf32>
    %c136_153 = arith.constant 136 : index
    %c16_154 = arith.constant 16 : index
    %217 = vector.load %arg1[%c136_153, %c16_154] : memref<156x17xf32, #tpu.memory_space<vmem>>, vector<4x1xf32>
    %218 = vector.broadcast %217 : vector<4x1xf32> to vector<4x512xf32>
    %219 = arith.addf %216, %218 : vector<4x512xf32>
    %cst_155 = arith.constant 0.000000e+00 : f32
    %220 = vector.broadcast %cst_155 : f32 to vector<4x512xf32>
    %221 = arith.maximumf %219, %220 : vector<4x512xf32>
    %c2_156 = arith.constant 2 : index
    %c0_157 = arith.constant 0 : index
    %222 = vector.load %arg3[%c2_156, %c0_157] : memref<16x512xf32, #tpu.memory_space<vmem>>, vector<4x512xf32>
    tpu.vector_store %arg3[%c2_156, %c0_157], %221 {strides = array<i32>} : memref<16x512xf32, #tpu.memory_space<vmem>>, vector<4x512xf32>,
    return
  }
}

</mosaic_0001>

<llo_original>
// kernel: csp_dense_block.1
$region0: #{csp_dense_block.1}
  #allocation0 [shape = 'u32[]', space=smem, size = 0x4, offset = 0x4, fixed_abs, tag = 'smem constant byte address 0x4 - core index']
  #allocation1 [shape = 'u32[144,128]{1,0:T(1,128)}', space=vmem, size = 0x12000, scoped, tag = 'internal scratch']
  #allocation2 [shape = 'f32[14,512]{1,0:T(8,128)}', space=vmem, size = 0x8000, scoped, tag = 'scratch operand']
  %s0 = inlined_call_operand.vmem [shape: f32[4,512], index: 0, kind: input, shape index: {}]
  %s1 = inlined_call_operand.vmem [shape: f32[156,17], index: 1, kind: input, shape index: {}]
  %s2 = inlined_call_operand.vmem [shape: f32[9,512], index: 2, kind: input, shape index: {}]
  %s3 = inlined_call_operand.vmem [shape: f32[16,512], index: 3, kind: output, shape index: {}]
  %s4 = sld [smem:[#allocation0]]
  $region22: #{csp_dense_block.1} parent=0
    _
  %s6 = ssub.s32 1, %s4
  %s7 = scalar_select 0, %s6, %s4
  // Predicated region
  $region2: #{csp_dense_block.1} parent=0 // pred_check
    _
  $region3: #{csp_dense_block.1} parent=0 // pred_check_branch
    %9 = sbr.rel (0) target = $region5
  $region4: #{csp_dense_block.1} parent=0 // pred_region
    _
  $region5: #{csp_dense_block.1} parent=0 // pred_fallthru
    _
  // Predicated region
  $region6: #{csp_dense_block.1} parent=0 // pred_check
    _
  $region7: #{csp_dense_block.1} parent=0 // pred_check_branch
    %11 = sbr.rel (0) target = $region9
  $region8: #{csp_dense_block.1} parent=0 // pred_region
    _
  $region9: #{csp_dense_block.1} parent=0 // pred_fallthru
    _
  // Predicated region
  $region10: #{csp_dense_block.1} parent=0 // pred_check
    _
  $region11: #{csp_dense_block.1} parent=0 // pred_check_branch
    %13 = sbr.rel (0) target = $region13
  $region12: #{csp_dense_block.1} parent=0 // pred_region
    _
  $region13: #{csp_dense_block.1} parent=0 // pred_fallthru
    _
  %v14 = vld [vmem:[%s0] sm:$0x33]
  %v15 = vld [vmem:[%s0 + $0x8] sm:$0x33]
  %v18 = vcombine.high %v14, %v14
  %v19 = vcombine.high %v15, %v15
  %22 = vst [vmem:[%s3] sm:$0x3] %v14
  %23 = vst [vmem:[%s3 + $0x8] sm:$0x3] %v18
  %24 = vst [vmem:[%s3 + $0x10] sm:$0x3] %v15
  %25 = vst [vmem:[%s3 + $0x18] sm:$0x3] %v19
  %v26 = vld [vmem:[%s0] sm:$0xcc]
  %v27 = vld [vmem:[%s0 + $0x8] sm:$0xcc]
  %v30 = vcombine.high %v26, %v26
  %v31 = vcombine.high %v27, %v27
  %34 = vst [vmem:[%s3 + $0x20] sm:$0xc] %v26
  %35 = vst [vmem:[%s3 + $0x28] sm:$0xc] %v30
  %36 = vst [vmem:[%s3 + $0x30] sm:$0xc] %v27
  %37 = vst [vmem:[%s3 + $0x38] sm:$0xc] %v31
  %v38 = vrot.slane %v26, 2
  %v39 = vrot.slane %v30, 2
  %v40 = vrot.slane %v27, 2
  %v41 = vrot.slane %v31, 2
  %46 = vst [vmem:[#allocation2] sm:$0x3] %v38
  %47 = vst [vmem:[#allocation2 + $0x8] sm:$0x3] %v39
  %48 = vst [vmem:[#allocation2 + $0x10] sm:$0x3] %v40
  %49 = vst [vmem:[#allocation2 + $0x18] sm:$0x3] %v41
  %v50 = vld [vmem:[%s1] sm:$0xff]
  %v51 = vld [vmem:[%s1 + $0x8] sm:$0xff]
  %v52 = vld [vmem:[#allocation2] sm:$0x3]
  %v53 = vld [vmem:[#allocation2 + $0x8] sm:$0x3]
  %v54 = vld [vmem:[#allocation2 + $0x10] sm:$0x3]
  %v55 = vld [vmem:[#allocation2 + $0x18] sm:$0x3]
  %57 = vset.pattern.permute.xlu0 2
  %58 = vperm.xlu0 %57, %v50
  %v59 = vpop.permute.xlu0 %58
  %62 = vset.pattern.permute.xlu0 2
  %63 = vperm.xlu0 %62, %v51
  %v64 = vpop.permute.xlu0 %63
  %vm66 = vcmask 15360
  %v67 = vsel %vm66, %v50, 0
  %v69 = vsel %vm66, %v51, 0
  %vm71 = vcmask 1041408
  %v73 = vsel %vm71, %v52, 0
  %v76 = vsel %vm71, %v53, 0
  %v79 = vsel %vm71, %v54, 0
  %v82 = vsel %vm71, %v55, 0
  %84 = vmatprep.subr.mxu0 0.0
  %85 = vmatpush1.msra.mxu0 0.0
  %86 = vmatprep.subr.mxu0 0.0
  %87 = vmatpush1.msra.mxu0 0.0
  %88 = vmatprep.subr.mxu0 0.0
  %89 = vmatpush1.msra.mxu0 0.0
  %90 = vmatprep.subr.mxu0 0.0
  %91 = vmatpush1.msra.mxu0 0.0
  %92 = vmatprep.subr.mxu0 0.0
  %93 = vmatpush1.msra.mxu0 0.0
  %94 = vmatprep.subr.mxu0 0.0
  %95 = vmatpush1.msra.mxu0 0.0
  %96 = vmatprep.subr.mxu0 0.0
  %97 = vmatpush1.msra.mxu0 0.0
  %98 = vmatprep.subr.mxu0 0.0
  %99 = vmatpush1.msra.mxu0 0.0
  %100 = vmatprep.subr.mxu0 0.0
  %101 = vmatpush1.msra.mxu0 0.0
  %102 = vmatprep.subr.mxu0 0.0
  %103 = vmatpush1.msra.mxu0 0.0
  %104 = vmatprep.subr.mxu0 0.0
  %105 = vmatpush1.msra.mxu0 0.0
  %106 = vmatprep.subr.mxu0 0.0
  %107 = vmatpush1.msra.mxu0 0.0
  %108 = vmatprep.subr.mxu0 0.0
  %109 = vmatpush1.msra.mxu0 0.0
  %110 = vmatprep.subr.mxu0 0.0
  %111 = vmatpush1.msra.mxu0 0.0
  %112 = vmatprep.subr.mxu0 0.0
  %113 = vmatpush1.msra.mxu0 0.0
  %114 = vmatprep.subr.mxu0 %v76
  %115 = vmatpush1.msra.mxu0 %v73
  %116 = vmatprep.subr.mxu0 0.0
  %117 = vmatpush2.msra.mxu0 0.0
  %118 = vmatprep.subr.mxu0 0.0
  %119 = vmatpush2.msra.mxu0 0.0
  %120 = vmatprep.subr.mxu0 0.0
  %121 = vmatpush2.msra.mxu0 0.0
  %122 = vmatprep.subr.mxu0 0.0
  %123 = vmatpush2.msra.mxu0 0.0
  %124 = vmatprep.subr.mxu0 0.0
  %125 = vmatpush2.msra.mxu0 0.0
  %126 = vmatprep.subr.mxu0 0.0
  %127 = vmatpush2.msra.mxu0 0.0
  %128 = vmatprep.subr.mxu0 0.0
  %129 = vmatpush2.msra.mxu0 0.0
  %130 = vmatprep.subr.mxu0 0.0
  %131 = vmatpush2.msra.mxu0 0.0
  %132 = vmatprep.subr.mxu0 0.0
  %133 = vmatpush2.msra.mxu0 0.0
  %134 = vmatprep.subr.mxu0 0.0
  %135 = vmatpush2.msra.mxu0 0.0
  %136 = vmatprep.subr.mxu0 0.0
  %137 = vmatpush2.msra.mxu0 0.0
  %138 = vmatprep.subr.mxu0 0.0
  %139 = vmatpush2.msra.mxu0 0.0
  %140 = vmatprep.subr.mxu0 0.0
  %141 = vmatpush2.msra.mxu0 0.0
  %142 = vmatprep.subr.mxu0 0.0
  %143 = vmatpush2.msra.mxu0 0.0
  %144 = vmatprep.subr.mxu0 0.0
  %145 = vmatpush2.msra.mxu0 0.0
  %146 = vmatprep.subr.mxu0 0.0
  %147 = vmatpush2.msra.mxu0 0.0
  %148 = vmatprep.mubr.f32.mxu0 0.0
  %149 = vmatmul.mubr.f32.gmra.mxu0 %v67
  %v150 = vpop.f32.mrf.mxu0
  %v151 = vadd.f32 %v59, %v150
  %v152 = vpop.f32.mrf.mxu0
  %v153 = vadd.f32 %v59, %v152
  %154 = vmatprep.mubr.f32.mxu0 0.0
  %155 = vmatmul.mubr.f32.gmra.mxu0 %v69
  %v156 = vpop.f32.mrf.mxu0
  %v157 = vadd.f32 %v64, %v156
  %v158 = vpop.f32.mrf.mxu0
  %v159 = vadd.f32 %v64, %v158
  %160 = vdwg.mxu0
  %161 = vmatprep.subr.mxu0 0.0
  %162 = vmatpush1.msra.mxu0 0.0
  %163 = vmatprep.subr.mxu0 0.0
  %164 = vmatpush1.msra.mxu0 0.0
  %165 = vmatprep.subr.mxu0 0.0
  %166 = vmatpush1.msra.mxu0 0.0
  %167 = vmatprep.subr.mxu0 0.0
  %168 = vmatpush1.msra.mxu0 0.0
  %169 = vmatprep.subr.mxu0 0.0
  %170 = vmatpush1.msra.mxu0 0.0
  %171 = vmatprep.subr.mxu0 0.0
  %172 = vmatpush1.msra.mxu0 0.0
  %173 = vmatprep.subr.mxu0 0.0
  %174 = vmatpush1.msra.mxu0 0.0
  %175 = vmatprep.subr.mxu0 0.0
  %176 = vmatpush1.msra.mxu0 0.0
  %177 = vmatprep.subr.mxu0 0.0
  %178 = vmatpush1.msra.mxu0 0.0
  %179 = vmatprep.subr.mxu0 0.0
  %180 = vmatpush1.msra.mxu0 0.0
  %181 = vmatprep.subr.mxu0 0.0
  %182 = vmatpush1.msra.mxu0 0.0
  %183 = vmatprep.subr.mxu0 0.0
  %184 = vmatpush1.msra.mxu0 0.0
  %185 = vmatprep.subr.mxu0 0.0
  %186 = vmatpush1.msra.mxu0 0.0
  %187 = vmatprep.subr.mxu0 0.0
  %188 = vmatpush1.msra.mxu0 0.0
  %189 = vmatprep.subr.mxu0 0.0
  %190 = vmatpush1.msra.mxu0 0.0
  %191 = vmatprep.subr.mxu0 %v82
  %192 = vmatpush1.msra.mxu0 %v79
  %193 = vmatprep.subr.mxu0 0.0
  %194 = vmatpush2.msra.mxu0 0.0
  %195 = vmatprep.subr.mxu0 0.0
  %196 = vmatpush2.msra.mxu0 0.0
  %197 = vmatprep.subr.mxu0 0.0
  %198 = vmatpush2.msra.mxu0 0.0
  %199 = vmatprep.subr.mxu0 0.0
  %200 = vmatpush2.msra.mxu0 0.0
  %201 = vmatprep.subr.mxu0 0.0
  %202 = vmatpush2.msra.mxu0 0.0
  %203 = vmatprep.subr.mxu0 0.0
  %204 = vmatpush2.msra.mxu0 0.0
  %205 = vmatprep.subr.mxu0 0.0
  %206 = vmatpush2.msra.mxu0 0.0
  %207 = vmatprep.subr.mxu0 0.0
  %208 = vmatpush2.msra.mxu0 0.0
  %209 = vmatprep.subr.mxu0 0.0
  %210 = vmatpush2.msra.mxu0 0.0
  %211 = vmatprep.subr.mxu0 0.0
  %212 = vmatpush2.msra.mxu0 0.0
  %213 = vmatprep.subr.mxu0 0.0
  %214 = vmatpush2.msra.mxu0 0.0
  %215 = vmatprep.subr.mxu0 0.0
  %216 = vmatpush2.msra.mxu0 0.0
  %217 = vmatprep.subr.mxu0 0.0
  %218 = vmatpush2.msra.mxu0 0.0
  %219 = vmatprep.subr.mxu0 0.0
  %220 = vmatpush2.msra.mxu0 0.0
  %221 = vmatprep.subr.mxu0 0.0
  %222 = vmatpush2.msra.mxu0 0.0
  %223 = vmatprep.subr.mxu0 0.0
  %224 = vmatpush2.msra.mxu0 0.0
  %225 = vmatprep.mubr.f32.mxu0 0.0
  %226 = vmatmul.mubr.f32.gmra.mxu0 %v67
  %v227 = vpop.f32.mrf.mxu0
  %v228 = vadd.f32 %v59, %v227
  %v229 = vpop.f32.mrf.mxu0
  %v230 = vadd.f32 %v59, %v229
  %231 = vmatprep.mubr.f32.mxu0 0.0
  %232 = vmatmul.mubr.f32.gmra.mxu0 %v69
  %v233 = vpop.f32.mrf.mxu0
  %v234 = vadd.f32 %v64, %v233
  %v235 = vpop.f32.mrf.mxu0
  %v236 = vadd.f32 %v64, %v235
  %237 = vdwg.mxu0
  %v238 = vmax.f32 %v151, 0.0
  %v239 = vmax.f32 %v153, 0.0
  %v240 = vmax.f32 %v228, 0.0
  %v241 = vmax.f32 %v230, 0.0
  %v242 = vmax.f32 %v157, 0.0
  %v243 = vmax.f32 %v159, 0.0
  %v244 = vmax.f32 %v234, 0.0
  %v245 = vmax.f32 %v236, 0.0
  %246 = vrot.lane.b32.xlu0 %v238, 17
  %v247 = vpop.permute.xlu0 %246
  %248 = vrot.lane.b32.xlu0 %v242, 17
  %v249 = vpop.permute.xlu0 %248
  %250 = vrot.lane.b32.xlu0 %v239, 17
  %v251 = vpop.permute.xlu0 %250
  %252 = vrot.lane.b32.xlu0 %v243, 17
  %v253 = vpop.permute.xlu0 %252
  %254 = vrot.lane.b32.xlu0 %v240, 17
  %v255 = vpop.permute.xlu0 %254
  %256 = vrot.lane.b32.xlu0 %v244, 17
  %v257 = vpop.permute.xlu0 %256
  %258 = vrot.lane.b32.xlu0 %v241, 17
  %v259 = vpop.permute.xlu0 %258
  %260 = vrot.lane.b32.xlu0 %v245, 17
  %v261 = vpop.permute.xlu0 %260
  %v262 = vlaneseq
  %v263 = vand.u32 %v262, 127
  %vm264 = vcmp.lt.s32.totalorder %v263, 17
  %v265 = vsel %vm264, %v255, %v259
  %v266 = vsel %vm264, %v257, %v261
  %v267 = vsel %vm264, %v251, %v255
  %v268 = vsel %vm264, %v253, %v257
  %v269 = vsel %vm264, %v247, %v251
  %v270 = vsel %vm264, %v249, %v253
  %v271 = vsel %vm264, %v259, %v247
  %v272 = vsel %vm264, %v261, %v249
  %v273 = vld [vmem:[%s2] ss:$8 sm:$0xf]
  %v275 = vlaneseq
  %v276 = vshrl.u32 %v275, 7
  %v277 = vsub.s32 0, %v276
  %v278 = vrot.slane %v273, %v277
  %v279 = vlaneseq
  %v280 = vshrl.u32 %v279, 7
  %v281 = vsub.s32 1, %v280
  %v282 = vrot.slane %v273, %v281
  %v283 = vlaneseq
  %v284 = vshrl.u32 %v283, 7
  %v285 = vsub.s32 2, %v284
  %v286 = vrot.slane %v273, %v285
  %v287 = vlaneseq
  %v288 = vshrl.u32 %v287, 7
  %v289 = vsub.s32 3, %v288
  %v290 = vrot.slane %v273, %v289
  %v295 = vmul.f32 %v271, %v278
  %v296 = vmul.f32 %v269, %v282
  %v297 = vmul.f32 %v267, %v286
  %v298 = vmul.f32 %v265, %v290
  %v299 = vmul.f32 %v272, %v278
  %v300 = vmul.f32 %v270, %v282
  %v301 = vmul.f32 %v268, %v286
  %v302 = vmul.f32 %v266, %v290
  %v303 = vld [vmem:[%s1 + $0x10] sm:$0xf]
  %304 = vrot.lane.b32.xlu0 %v238, 16
  %v305 = vpop.permute.xlu0 %304
  %306 = vrot.lane.b32.xlu0 %v242, 16
  %v307 = vpop.permute.xlu0 %306
  %308 = vrot.lane.b32.xlu0 %v239, 16
  %v309 = vpop.permute.xlu0 %308
  %310 = vrot.lane.b32.xlu0 %v243, 16
  %v311 = vpop.permute.xlu0 %310
  %312 = vrot.lane.b32.xlu0 %v240, 16
  %v313 = vpop.permute.xlu0 %312
  %314 = vrot.lane.b32.xlu0 %v244, 16
  %v315 = vpop.permute.xlu0 %314
  %316 = vrot.lane.b32.xlu0 %v241, 16
  %v317 = vpop.permute.xlu0 %316
  %318 = vrot.lane.b32.xlu0 %v245, 16
  %v319 = vpop.permute.xlu0 %318
  %vm320 = vcmp.lt.s32.totalorder %v263, 16
  %v321 = vsel %vm320, %v313, %v317
  %v322 = vsel %vm320, %v315, %v319
  %v323 = vsel %vm320, %v309, %v313
  %v324 = vsel %vm320, %v311, %v315
  %v325 = vsel %vm320, %v305, %v309
  %v326 = vsel %vm320, %v307, %v311
  %v327 = vsel %vm320, %v317, %v305
  %v328 = vsel %vm320, %v319, %v307
  %s329 = scalar_lea.vmem %s2, 1
  %v330 = vld [vmem:[%s329] ss:$8 sm:$0xf]
  %v332 = vlaneseq
  %v333 = vshrl.u32 %v332, 7
  %v334 = vsub.s32 0, %v333
  %v335 = vrot.slane %v330, %v334
  %v336 = vlaneseq
  %v337 = vshrl.u32 %v336, 7
  %v338 = vsub.s32 1, %v337
  %v339 = vrot.slane %v330, %v338
  %v340 = vlaneseq
  %v341 = vshrl.u32 %v340, 7
  %v342 = vsub.s32 2, %v341
  %v343 = vrot.slane %v330, %v342
  %v344 = vlaneseq
  %v345 = vshrl.u32 %v344, 7
  %v346 = vsub.s32 3, %v345
  %v347 = vrot.slane %v330, %v346
  %v352 = vmul.f32 %v327, %v335
  %v353 = vmul.f32 %v325, %v339
  %v354 = vmul.f32 %v323, %v343
  %v355 = vmul.f32 %v321, %v347
  %v356 = vmul.f32 %v328, %v335
  %v357 = vmul.f32 %v326, %v339
  %v358 = vmul.f32 %v324, %v343
  %v359 = vmul.f32 %v322, %v347
  %v360 = vld [vmem:[%s1 + $0x14] sm:$0xf]
  %vm361 = vcmask 130048
  %v363 = vsel %vm361, %v360, 0
  %365 = vmatprep.subr.mxu0 0.0
  %366 = vmatpush1.msra.mxu0 0.0
  %367 = vmatprep.subr.mxu0 0.0
  %368 = vmatpush1.msra.mxu0 0.0
  %369 = vmatprep.subr.mxu0 0.0
  %370 = vmatpush1.msra.mxu0 0.0
  %371 = vmatprep.subr.mxu0 0.0
  %372 = vmatpush1.msra.mxu0 0.0
  %373 = vmatprep.subr.mxu0 0.0
  %374 = vmatpush1.msra.mxu0 0.0
  %375 = vmatprep.subr.mxu0 0.0
  %376 = vmatpush1.msra.mxu0 0.0
  %377 = vmatprep.subr.mxu0 0.0
  %378 = vmatpush1.msra.mxu0 0.0
  %379 = vmatprep.subr.mxu0 0.0
  %380 = vmatpush1.msra.mxu0 0.0
  %381 = vmatprep.subr.mxu0 0.0
  %382 = vmatpush1.msra.mxu0 0.0
  %383 = vmatprep.subr.mxu0 0.0
  %384 = vmatpush1.msra.mxu0 0.0
  %385 = vmatprep.subr.mxu0 0.0
  %386 = vmatpush1.msra.mxu0 0.0
  %387 = vmatprep.subr.mxu0 0.0
  %388 = vmatpush1.msra.mxu0 0.0
  %389 = vmatprep.subr.mxu0 0.0
  %390 = vmatpush1.msra.mxu0 0.0
  %391 = vmatprep.subr.mxu0 0.0
  %392 = vmatpush1.msra.mxu0 0.0
  %393 = vmatprep.subr.mxu0 %v357
  %394 = vmatpush1.msra.mxu0 %v356
  %395 = vmatprep.subr.mxu0 %v353
  %396 = vmatpush1.msra.mxu0 %v352
  %397 = vmatprep.subr.mxu0 0.0
  %398 = vmatpush2.msra.mxu0 0.0
  %399 = vmatprep.subr.mxu0 0.0
  %400 = vmatpush2.msra.mxu0 0.0
  %401 = vmatprep.subr.mxu0 0.0
  %402 = vmatpush2.msra.mxu0 0.0
  %403 = vmatprep.subr.mxu0 0.0
  %404 = vmatpush2.msra.mxu0 0.0
  %405 = vmatprep.subr.mxu0 0.0
  %406 = vmatpush2.msra.mxu0 0.0
  %407 = vmatprep.subr.mxu0 0.0
  %408 = vmatpush2.msra.mxu0 0.0
  %409 = vmatprep.subr.mxu0 0.0
  %410 = vmatpush2.msra.mxu0 0.0
  %411 = vmatprep.subr.mxu0 0.0
  %412 = vmatpush2.msra.mxu0 0.0
  %413 = vmatprep.subr.mxu0 0.0
  %414 = vmatpush2.msra.mxu0 0.0
  %415 = vmatprep.subr.mxu0 0.0
  %416 = vmatpush2.msra.mxu0 0.0
  %417 = vmatprep.subr.mxu0 0.0
  %418 = vmatpush2.msra.mxu0 0.0
  %419 = vmatprep.subr.mxu0 0.0
  %420 = vmatpush2.msra.mxu0 0.0
  %421 = vmatprep.subr.mxu0 0.0
  %422 = vmatpush2.msra.mxu0 0.0
  %423 = vmatprep.subr.mxu0 0.0
  %424 = vmatpush2.msra.mxu0 0.0
  %425 = vmatprep.subr.mxu0 0.0
  %426 = vmatpush2.msra.mxu0 0.0
  %427 = vmatprep.subr.mxu0 0.0
  %428 = vmatpush2.msra.mxu0 0.0
  %429 = vmatprep.mubr.f32.mxu0 0.0
  %430 = vmatmul.mubr.f32.gmra.mxu0 %v363
  %v431 = vpop.f32.mrf.mxu0
  %v432 = vadd.f32 0.0, %v431
  %v433 = vpop.f32.mrf.mxu0
  %v434 = vadd.f32 0.0, %v433
  %435 = vdwg.mxu0
  %436 = vmatprep.subr.mxu0 0.0
  %437 = vmatpush1.msra.mxu0 0.0
  %438 = vmatprep.subr.mxu0 0.0
  %439 = vmatpush1.msra.mxu0 0.0
  %440 = vmatprep.subr.mxu0 0.0
  %441 = vmatpush1.msra.mxu0 0.0
  %442 = vmatprep.subr.mxu0 0.0
  %443 = vmatpush1.msra.mxu0 0.0
  %444 = vmatprep.subr.mxu0 0.0
  %445 = vmatpush1.msra.mxu0 0.0
  %446 = vmatprep.subr.mxu0 0.0
  %447 = vmatpush1.msra.mxu0 0.0
  %448 = vmatprep.subr.mxu0 0.0
  %449 = vmatpush1.msra.mxu0 0.0
  %450 = vmatprep.subr.mxu0 0.0
  %451 = vmatpush1.msra.mxu0 0.0
  %452 = vmatprep.subr.mxu0 0.0
  %453 = vmatpush1.msra.mxu0 0.0
  %454 = vmatprep.subr.mxu0 0.0
  %455 = vmatpush1.msra.mxu0 0.0
  %456 = vmatprep.subr.mxu0 0.0
  %457 = vmatpush1.msra.mxu0 0.0
  %458 = vmatprep.subr.mxu0 0.0
  %459 = vmatpush1.msra.mxu0 0.0
  %460 = vmatprep.subr.mxu0 0.0
  %461 = vmatpush1.msra.mxu0 0.0
  %462 = vmatprep.subr.mxu0 0.0
  %463 = vmatpush1.msra.mxu0 0.0
  %464 = vmatprep.subr.mxu0 %v359
  %465 = vmatpush1.msra.mxu0 %v358
  %466 = vmatprep.subr.mxu0 %v355
  %467 = vmatpush1.msra.mxu0 %v354
  %468 = vmatprep.subr.mxu0 0.0
  %469 = vmatpush2.msra.mxu0 0.0
  %470 = vmatprep.subr.mxu0 0.0
  %471 = vmatpush2.msra.mxu0 0.0
  %472 = vmatprep.subr.mxu0 0.0
  %473 = vmatpush2.msra.mxu0 0.0
  %474 = vmatprep.subr.mxu0 0.0
  %475 = vmatpush2.msra.mxu0 0.0
  %476 = vmatprep.subr.mxu0 0.0
  %477 = vmatpush2.msra.mxu0 0.0
  %478 = vmatprep.subr.mxu0 0.0
  %479 = vmatpush2.msra.mxu0 0.0
  %480 = vmatprep.subr.mxu0 0.0
  %481 = vmatpush2.msra.mxu0 0.0
  %482 = vmatprep.subr.mxu0 0.0
  %483 = vmatpush2.msra.mxu0 0.0
  %484 = vmatprep.subr.mxu0 0.0
  %485 = vmatpush2.msra.mxu0 0.0
  %486 = vmatprep.subr.mxu0 0.0
  %487 = vmatpush2.msra.mxu0 0.0
  %488 = vmatprep.subr.mxu0 0.0
  %489 = vmatpush2.msra.mxu0 0.0
  %490 = vmatprep.subr.mxu0 0.0
  %491 = vmatpush2.msra.mxu0 0.0
  %492 = vmatprep.subr.mxu0 0.0
  %493 = vmatpush2.msra.mxu0 0.0
  %494 = vmatprep.subr.mxu0 0.0
  %495 = vmatpush2.msra.mxu0 0.0
  %496 = vmatprep.subr.mxu0 0.0
  %497 = vmatpush2.msra.mxu0 0.0
  %498 = vmatprep.subr.mxu0 0.0
  %499 = vmatpush2.msra.mxu0 0.0
  %500 = vmatprep.mubr.f32.mxu0 0.0
  %501 = vmatmul.mubr.f32.gmra.mxu0 %v363
  %v502 = vpop.f32.mrf.mxu0
  %v503 = vadd.f32 0.0, %v502
  %v504 = vpop.f32.mrf.mxu0
  %v505 = vadd.f32 0.0, %v504
  %506 = vdwg.mxu0
  %v508 = vsel %vm361, %v303, 0
  %510 = vmatprep.subr.mxu0 0.0
  %511 = vmatpush1.msra.mxu0 0.0
  %512 = vmatprep.subr.mxu0 0.0
  %513 = vmatpush1.msra.mxu0 0.0
  %514 = vmatprep.subr.mxu0 0.0
  %515 = vmatpush1.msra.mxu0 0.0
  %516 = vmatprep.subr.mxu0 0.0
  %517 = vmatpush1.msra.mxu0 0.0
  %518 = vmatprep.subr.mxu0 0.0
  %519 = vmatpush1.msra.mxu0 0.0
  %520 = vmatprep.subr.mxu0 0.0
  %521 = vmatpush1.msra.mxu0 0.0
  %522 = vmatprep.subr.mxu0 0.0
  %523 = vmatpush1.msra.mxu0 0.0
  %524 = vmatprep.subr.mxu0 0.0
  %525 = vmatpush1.msra.mxu0 0.0
  %526 = vmatprep.subr.mxu0 0.0
  %527 = vmatpush1.msra.mxu0 0.0
  %528 = vmatprep.subr.mxu0 0.0
  %529 = vmatpush1.msra.mxu0 0.0
  %530 = vmatprep.subr.mxu0 0.0
  %531 = vmatpush1.msra.mxu0 0.0
  %532 = vmatprep.subr.mxu0 0.0
  %533 = vmatpush1.msra.mxu0 0.0
  %534 = vmatprep.subr.mxu0 0.0
  %535 = vmatpush1.msra.mxu0 0.0
  %536 = vmatprep.subr.mxu0 0.0
  %537 = vmatpush1.msra.mxu0 0.0
  %538 = vmatprep.subr.mxu0 %v300
  %539 = vmatpush1.msra.mxu0 %v299
  %540 = vmatprep.subr.mxu0 %v296
  %541 = vmatpush1.msra.mxu0 %v295
  %542 = vmatprep.subr.mxu0 0.0
  %543 = vmatpush2.msra.mxu0 0.0
  %544 = vmatprep.subr.mxu0 0.0
  %545 = vmatpush2.msra.mxu0 0.0
  %546 = vmatprep.subr.mxu0 0.0
  %547 = vmatpush2.msra.mxu0 0.0
  %548 = vmatprep.subr.mxu0 0.0
  %549 = vmatpush2.msra.mxu0 0.0
  %550 = vmatprep.subr.mxu0 0.0
  %551 = vmatpush2.msra.mxu0 0.0
  %552 = vmatprep.subr.mxu0 0.0
  %553 = vmatpush2.msra.mxu0 0.0
  %554 = vmatprep.subr.mxu0 0.0
  %555 = vmatpush2.msra.mxu0 0.0
  %556 = vmatprep.subr.mxu0 0.0
  %557 = vmatpush2.msra.mxu0 0.0
  %558 = vmatprep.subr.mxu0 0.0
  %559 = vmatpush2.msra.mxu0 0.0
  %560 = vmatprep.subr.mxu0 0.0
  %561 = vmatpush2.msra.mxu0 0.0
  %562 = vmatprep.subr.mxu0 0.0
  %563 = vmatpush2.msra.mxu0 0.0
  %564 = vmatprep.subr.mxu0 0.0
  %565 = vmatpush2.msra.mxu0 0.0
  %566 = vmatprep.subr.mxu0 0.0
  %567 = vmatpush2.msra.mxu0 0.0
  %568 = vmatprep.subr.mxu0 0.0
  %569 = vmatpush2.msra.mxu0 0.0
  %570 = vmatprep.subr.mxu0 0.0
  %571 = vmatpush2.msra.mxu0 0.0
  %572 = vmatprep.subr.mxu0 0.0
  %573 = vmatpush2.msra.mxu0 0.0
  %574 = vmatprep.mubr.f32.mxu0 0.0
  %575 = vmatmul.mubr.f32.gmra.mxu0 %v508
  %v576 = vpop.f32.mrf.mxu0
  %v577 = vadd.f32 %v432, %v576
  %v578 = vpop.f32.mrf.mxu0
  %v579 = vadd.f32 %v434, %v578
  %580 = vdwg.mxu0
  %581 = vmatprep.subr.mxu0 0.0
  %582 = vmatpush1.msra.mxu0 0.0
  %583 = vmatprep.subr.mxu0 0.0
  %584 = vmatpush1.msra.mxu0 0.0
  %585 = vmatprep.subr.mxu0 0.0
  %586 = vmatpush1.msra.mxu0 0.0
  %587 = vmatprep.subr.mxu0 0.0
  %588 = vmatpush1.msra.mxu0 0.0
  %589 = vmatprep.subr.mxu0 0.0
  %590 = vmatpush1.msra.mxu0 0.0
  %591 = vmatprep.subr.mxu0 0.0
  %592 = vmatpush1.msra.mxu0 0.0
  %593 = vmatprep.subr.mxu0 0.0
  %594 = vmatpush1.msra.mxu0 0.0
  %595 = vmatprep.subr.mxu0 0.0
  %596 = vmatpush1.msra.mxu0 0.0
  %597 = vmatprep.subr.mxu0 0.0
  %598 = vmatpush1.msra.mxu0 0.0
  %599 = vmatprep.subr.mxu0 0.0
  %600 = vmatpush1.msra.mxu0 0.0
  %601 = vmatprep.subr.mxu0 0.0
  %602 = vmatpush1.msra.mxu0 0.0
  %603 = vmatprep.subr.mxu0 0.0
  %604 = vmatpush1.msra.mxu0 0.0
  %605 = vmatprep.subr.mxu0 0.0
  %606 = vmatpush1.msra.mxu0 0.0
  %607 = vmatprep.subr.mxu0 0.0
  %608 = vmatpush1.msra.mxu0 0.0
  %609 = vmatprep.subr.mxu0 %v302
  %610 = vmatpush1.msra.mxu0 %v301
  %611 = vmatprep.subr.mxu0 %v298
  %612 = vmatpush1.msra.mxu0 %v297
  %613 = vmatprep.subr.mxu0 0.0
  %614 = vmatpush2.msra.mxu0 0.0
  %615 = vmatprep.subr.mxu0 0.0
  %616 = vmatpush2.msra.mxu0 0.0
  %617 = vmatprep.subr.mxu0 0.0
  %618 = vmatpush2.msra.mxu0 0.0
  %619 = vmatprep.subr.mxu0 0.0
  %620 = vmatpush2.msra.mxu0 0.0
  %621 = vmatprep.subr.mxu0 0.0
  %622 = vmatpush2.msra.mxu0 0.0
  %623 = vmatprep.subr.mxu0 0.0
  %624 = vmatpush2.msra.mxu0 0.0
  %625 = vmatprep.subr.mxu0 0.0
  %626 = vmatpush2.msra.mxu0 0.0
  %627 = vmatprep.subr.mxu0 0.0
  %628 = vmatpush2.msra.mxu0 0.0
  %629 = vmatprep.subr.mxu0 0.0
  %630 = vmatpush2.msra.mxu0 0.0
  %631 = vmatprep.subr.mxu0 0.0
  %632 = vmatpush2.msra.mxu0 0.0
  %633 = vmatprep.subr.mxu0 0.0
  %634 = vmatpush2.msra.mxu0 0.0
  %635 = vmatprep.subr.mxu0 0.0
  %636 = vmatpush2.msra.mxu0 0.0
  %637 = vmatprep.subr.mxu0 0.0
  %638 = vmatpush2.msra.mxu0 0.0
  %639 = vmatprep.subr.mxu0 0.0
  %640 = vmatpush2.msra.mxu0 0.0
  %641 = vmatprep.subr.mxu0 0.0
  %642 = vmatpush2.msra.mxu0 0.0
  %643 = vmatprep.subr.mxu0 0.0
  %644 = vmatpush2.msra.mxu0 0.0
  %645 = vmatprep.mubr.f32.mxu0 0.0
  %646 = vmatmul.mubr.f32.gmra.mxu0 %v508
  %v647 = vpop.f32.mrf.mxu0
  %v648 = vadd.f32 %v503, %v647
  %v649 = vpop.f32.mrf.mxu0
  %v650 = vadd.f32 %v505, %v649
  %651 = vdwg.mxu0
  %652 = vrot.lane.b32.xlu0 %v238, 15
  %v653 = vpop.permute.xlu0 %652
  %654 = vrot.lane.b32.xlu0 %v242, 15
  %v655 = vpop.permute.xlu0 %654
  %656 = vrot.lane.b32.xlu0 %v239, 15
  %v657 = vpop.permute.xlu0 %656
  %658 = vrot.lane.b32.xlu0 %v243, 15
  %v659 = vpop.permute.xlu0 %658
  %660 = vrot.lane.b32.xlu0 %v240, 15
  %v661 = vpop.permute.xlu0 %660
  %662 = vrot.lane.b32.xlu0 %v244, 15
  %v663 = vpop.permute.xlu0 %662
  %664 = vrot.lane.b32.xlu0 %v241, 15
  %v665 = vpop.permute.xlu0 %664
  %666 = vrot.lane.b32.xlu0 %v245, 15
  %v667 = vpop.permute.xlu0 %666
  %vm668 = vcmp.lt.s32.totalorder %v263, 15
  %v669 = vsel %vm668, %v661, %v665
  %v670 = vsel %vm668, %v663, %v667
  %v671 = vsel %vm668, %v657, %v661
  %v672 = vsel %vm668, %v659, %v663
  %v673 = vsel %vm668, %v653, %v657
  %v674 = vsel %vm668, %v655, %v659
  %v675 = vsel %vm668, %v665, %v653
  %v676 = vsel %vm668, %v667, %v655
  %s677 = scalar_lea.vmem %s2, 2
  %v678 = vld [vmem:[%s677] ss:$8 sm:$0xf]
  %v680 = vlaneseq
  %v681 = vshrl.u32 %v680, 7
  %v682 = vsub.s32 0, %v681
  %v683 = vrot.slane %v678, %v682
  %v684 = vlaneseq
  %v685 = vshrl.u32 %v684, 7
  %v686 = vsub.s32 1, %v685
  %v687 = vrot.slane %v678, %v686
  %v688 = vlaneseq
  %v689 = vshrl.u32 %v688, 7
  %v690 = vsub.s32 2, %v689
  %v691 = vrot.slane %v678, %v690
  %v692 = vlaneseq
  %v693 = vshrl.u32 %v692, 7
  %v694 = vsub.s32 3, %v693
  %v695 = vrot.slane %v678, %v694
  %v700 = vmul.f32 %v675, %v683
  %v701 = vmul.f32 %v673, %v687
  %v702 = vmul.f32 %v671, %v691
  %v703 = vmul.f32 %v669, %v695
  %v704 = vmul.f32 %v676, %v683
  %v705 = vmul.f32 %v674, %v687
  %v706 = vmul.f32 %v672, %v691
  %v707 = vmul.f32 %v670, %v695
  %v708 = vld [vmem:[%s1 + $0x18] sm:$0xf]
  %v710 = vsel %vm361, %v708, 0
  %712 = vmatprep.subr.mxu0 0.0
  %713 = vmatpush1.msra.mxu0 0.0
  %714 = vmatprep.subr.mxu0 0.0
  %715 = vmatpush1.msra.mxu0 0.0
  %716 = vmatprep.subr.mxu0 0.0
  %717 = vmatpush1.msra.mxu0 0.0
  %718 = vmatprep.subr.mxu0 0.0
  %719 = vmatpush1.msra.mxu0 0.0
  %720 = vmatprep.subr.mxu0 0.0
  %721 = vmatpush1.msra.mxu0 0.0
  %722 = vmatprep.subr.mxu0 0.0
  %723 = vmatpush1.msra.mxu0 0.0
  %724 = vmatprep.subr.mxu0 0.0
  %725 = vmatpush1.msra.mxu0 0.0
  %726 = vmatprep.subr.mxu0 0.0
  %727 = vmatpush1.msra.mxu0 0.0
  %728 = vmatprep.subr.mxu0 0.0
  %729 = vmatpush1.msra.mxu0 0.0
  %730 = vmatprep.subr.mxu0 0.0
  %731 = vmatpush1.msra.mxu0 0.0
  %732 = vmatprep.subr.mxu0 0.0
  %733 = vmatpush1.msra.mxu0 0.0
  %734 = vmatprep.subr.mxu0 0.0
  %735 = vmatpush1.msra.mxu0 0.0
  %736 = vmatprep.subr.mxu0 0.0
  %737 = vmatpush1.msra.mxu0 0.0
  %738 = vmatprep.subr.mxu0 0.0
  %739 = vmatpush1.msra.mxu0 0.0
  %740 = vmatprep.subr.mxu0 %v705
  %741 = vmatpush1.msra.mxu0 %v704
  %742 = vmatprep.subr.mxu0 %v701
  %743 = vmatpush1.msra.mxu0 %v700
  %744 = vmatprep.subr.mxu0 0.0
  %745 = vmatpush2.msra.mxu0 0.0
  %746 = vmatprep.subr.mxu0 0.0
  %747 = vmatpush2.msra.mxu0 0.0
  %748 = vmatprep.subr.mxu0 0.0
  %749 = vmatpush2.msra.mxu0 0.0
  %750 = vmatprep.subr.mxu0 0.0
  %751 = vmatpush2.msra.mxu0 0.0
  %752 = vmatprep.subr.mxu0 0.0
  %753 = vmatpush2.msra.mxu0 0.0
  %754 = vmatprep.subr.mxu0 0.0
  %755 = vmatpush2.msra.mxu0 0.0
  %756 = vmatprep.subr.mxu0 0.0
  %757 = vmatpush2.msra.mxu0 0.0
  %758 = vmatprep.subr.mxu0 0.0
  %759 = vmatpush2.msra.mxu0 0.0
  %760 = vmatprep.subr.mxu0 0.0
  %761 = vmatpush2.msra.mxu0 0.0
  %762 = vmatprep.subr.mxu0 0.0
  %763 = vmatpush2.msra.mxu0 0.0
  %764 = vmatprep.subr.mxu0 0.0
  %765 = vmatpush2.msra.mxu0 0.0
  %766 = vmatprep.subr.mxu0 0.0
  %767 = vmatpush2.msra.mxu0 0.0
  %768 = vmatprep.subr.mxu0 0.0
  %769 = vmatpush2.msra.mxu0 0.0
  %770 = vmatprep.subr.mxu0 0.0
  %771 = vmatpush2.msra.mxu0 0.0
  %772 = vmatprep.subr.mxu0 0.0
  %773 = vmatpush2.msra.mxu0 0.0
  %774 = vmatprep.subr.mxu0 0.0
  %775 = vmatpush2.msra.mxu0 0.0
  %776 = vmatprep.mubr.f32.mxu0 0.0
  %777 = vmatmul.mubr.f32.gmra.mxu0 %v710
  %v778 = vpop.f32.mrf.mxu0
  %v779 = vadd.f32 0.0, %v778
  %v780 = vpop.f32.mrf.mxu0
  %v781 = vadd.f32 0.0, %v780
  %782 = vdwg.mxu0
  %783 = vmatprep.subr.mxu0 0.0
  %784 = vmatpush1.msra.mxu0 0.0
  %785 = vmatprep.subr.mxu0 0.0
  %786 = vmatpush1.msra.mxu0 0.0
  %787 = vmatprep.subr.mxu0 0.0
  %788 = vmatpush1.msra.mxu0 0.0
  %789 = vmatprep.subr.mxu0 0.0
  %790 = vmatpush1.msra.mxu0 0.0
  %791 = vmatprep.subr.mxu0 0.0
  %792 = vmatpush1.msra.mxu0 0.0
  %793 = vmatprep.subr.mxu0 0.0
  %794 = vmatpush1.msra.mxu0 0.0
  %795 = vmatprep.subr.mxu0 0.0
  %796 = vmatpush1.msra.mxu0 0.0
  %797 = vmatprep.subr.mxu0 0.0
  %798 = vmatpush1.msra.mxu0 0.0
  %799 = vmatprep.subr.mxu0 0.0
  %800 = vmatpush1.msra.mxu0 0.0
  %801 = vmatprep.subr.mxu0 0.0
  %802 = vmatpush1.msra.mxu0 0.0
  %803 = vmatprep.subr.mxu0 0.0
  %804 = vmatpush1.msra.mxu0 0.0
  %805 = vmatprep.subr.mxu0 0.0
  %806 = vmatpush1.msra.mxu0 0.0
  %807 = vmatprep.subr.mxu0 0.0
  %808 = vmatpush1.msra.mxu0 0.0
  %809 = vmatprep.subr.mxu0 0.0
  %810 = vmatpush1.msra.mxu0 0.0
  %811 = vmatprep.subr.mxu0 %v707
  %812 = vmatpush1.msra.mxu0 %v706
  %813 = vmatprep.subr.mxu0 %v703
  %814 = vmatpush1.msra.mxu0 %v702
  %815 = vmatprep.subr.mxu0 0.0
  %816 = vmatpush2.msra.mxu0 0.0
  %817 = vmatprep.subr.mxu0 0.0
  %818 = vmatpush2.msra.mxu0 0.0
  %819 = vmatprep.subr.mxu0 0.0
  %820 = vmatpush2.msra.mxu0 0.0
  %821 = vmatprep.subr.mxu0 0.0
  %822 = vmatpush2.msra.mxu0 0.0
  %823 = vmatprep.subr.mxu0 0.0
  %824 = vmatpush2.msra.mxu0 0.0
  %825 = vmatprep.subr.mxu0 0.0
  %826 = vmatpush2.msra.mxu0 0.0
  %827 = vmatprep.subr.mxu0 0.0
  %828 = vmatpush2.msra.mxu0 0.0
  %829 = vmatprep.subr.mxu0 0.0
  %830 = vmatpush2.msra.mxu0 0.0
  %831 = vmatprep.subr.mxu0 0.0
  %832 = vmatpush2.msra.mxu0 0.0
  %833 = vmatprep.subr.mxu0 0.0
  %834 = vmatpush2.msra.mxu0 0.0
  %835 = vmatprep.subr.mxu0 0.0
  %836 = vmatpush2.msra.mxu0 0.0
  %837 = vmatprep.subr.mxu0 0.0
  %838 = vmatpush2.msra.mxu0 0.0
  %839 = vmatprep.subr.mxu0 0.0
  %840 = vmatpush2.msra.mxu0 0.0
  %841 = vmatprep.subr.mxu0 0.0
  %842 = vmatpush2.msra.mxu0 0.0
  %843 = vmatprep.subr.mxu0 0.0
  %844 = vmatpush2.msra.mxu0 0.0
  %845 = vmatprep.subr.mxu0 0.0
  %846 = vmatpush2.msra.mxu0 0.0
  %847 = vmatprep.mubr.f32.mxu0 0.0
  %848 = vmatmul.mubr.f32.gmra.mxu0 %v710
  %v849 = vpop.f32.mrf.mxu0
  %v850 = vadd.f32 0.0, %v849
  %v851 = vpop.f32.mrf.mxu0
  %v852 = vadd.f32 0.0, %v851
  %853 = vdwg.mxu0
  %v854 = vadd.f32 %v577, %v779
  %v855 = vadd.f32 %v579, %v781
  %v856 = vadd.f32 %v648, %v850
  %v857 = vadd.f32 %v650, %v852
  %858 = vrot.lane.b32.xlu0 %v238, 1
  %v859 = vpop.permute.xlu0 %858
  %860 = vrot.lane.b32.xlu0 %v242, 1
  %v861 = vpop.permute.xlu0 %860
  %862 = vrot.lane.b32.xlu0 %v239, 1
  %v863 = vpop.permute.xlu0 %862
  %864 = vrot.lane.b32.xlu0 %v243, 1
  %v865 = vpop.permute.xlu0 %864
  %866 = vrot.lane.b32.xlu0 %v240, 1
  %v867 = vpop.permute.xlu0 %866
  %868 = vrot.lane.b32.xlu0 %v244, 1
  %v869 = vpop.permute.xlu0 %868
  %870 = vrot.lane.b32.xlu0 %v241, 1
  %v871 = vpop.permute.xlu0 %870
  %872 = vrot.lane.b32.xlu0 %v245, 1
  %v873 = vpop.permute.xlu0 %872
  %vm874 = vcmp.lt.s32.totalorder %v263, 1
  %v875 = vsel %vm874, %v867, %v871
  %v876 = vsel %vm874, %v869, %v873
  %v877 = vsel %vm874, %v863, %v867
  %v878 = vsel %vm874, %v865, %v869
  %v879 = vsel %vm874, %v859, %v863
  %v880 = vsel %vm874, %v861, %v865
  %v881 = vsel %vm874, %v871, %v859
  %v882 = vsel %vm874, %v873, %v861
  %s883 = scalar_lea.vmem %s2, 3
  %v884 = vld [vmem:[%s883] ss:$8 sm:$0xf]
  %v886 = vlaneseq
  %v887 = vshrl.u32 %v886, 7
  %v888 = vsub.s32 0, %v887
  %v889 = vrot.slane %v884, %v888
  %v890 = vlaneseq
  %v891 = vshrl.u32 %v890, 7
  %v892 = vsub.s32 1, %v891
  %v893 = vrot.slane %v884, %v892
  %v894 = vlaneseq
  %v895 = vshrl.u32 %v894, 7
  %v896 = vsub.s32 2, %v895
  %v897 = vrot.slane %v884, %v896
  %v898 = vlaneseq
  %v899 = vshrl.u32 %v898, 7
  %v900 = vsub.s32 3, %v899
  %v901 = vrot.slane %v884, %v900
  %v906 = vmul.f32 %v881, %v889
  %v907 = vmul.f32 %v879, %v893
  %v908 = vmul.f32 %v877, %v897
  %v909 = vmul.f32 %v875, %v901
  %v910 = vmul.f32 %v882, %v889
  %v911 = vmul.f32 %v880, %v893
  %v912 = vmul.f32 %v878, %v897
  %v913 = vmul.f32 %v876, %v901
  %v914 = vld [vmem:[%s1 + $0x1c] sm:$0xf]
  %v916 = vsel %vm361, %v914, 0
  %918 = vmatprep.subr.mxu0 0.0
  %919 = vmatpush1.msra.mxu0 0.0
  %920 = vmatprep.subr.mxu0 0.0
  %921 = vmatpush1.msra.mxu0 0.0
  %922 = vmatprep.subr.mxu0 0.0
  %923 = vmatpush1.msra.mxu0 0.0
  %924 = vmatprep.subr.mxu0 0.0
  %925 = vmatpush1.msra.mxu0 0.0
  %926 = vmatprep.subr.mxu0 0.0
  %927 = vmatpush1.msra.mxu0 0.0
  %928 = vmatprep.subr.mxu0 0.0
  %929 = vmatpush1.msra.mxu0 0.0
  %930 = vmatprep.subr.mxu0 0.0
  %931 = vmatpush1.msra.mxu0 0.0
  %932 = vmatprep.subr.mxu0 0.0
  %933 = vmatpush1.msra.mxu0 0.0
  %934 = vmatprep.subr.mxu0 0.0
  %935 = vmatpush1.msra.mxu0 0.0
  %936 = vmatprep.subr.mxu0 0.0
  %937 = vmatpush1.msra.mxu0 0.0
  %938 = vmatprep.subr.mxu0 0.0
  %939 = vmatpush1.msra.mxu0 0.0
  %940 = vmatprep.subr.mxu0 0.0
  %941 = vmatpush1.msra.mxu0 0.0
  %942 = vmatprep.subr.mxu0 0.0
  %943 = vmatpush1.msra.mxu0 0.0
  %944 = vmatprep.subr.mxu0 0.0
  %945 = vmatpush1.msra.mxu0 0.0
  %946 = vmatprep.subr.mxu0 %v911
  %947 = vmatpush1.msra.mxu0 %v910
  %948 = vmatprep.subr.mxu0 %v907
  %949 = vmatpush1.msra.mxu0 %v906
  %950 = vmatprep.subr.mxu0 0.0
  %951 = vmatpush2.msra.mxu0 0.0
  %952 = vmatprep.subr.mxu0 0.0
  %953 = vmatpush2.msra.mxu0 0.0
  %954 = vmatprep.subr.mxu0 0.0
  %955 = vmatpush2.msra.mxu0 0.0
  %956 = vmatprep.subr.mxu0 0.0
  %957 = vmatpush2.msra.mxu0 0.0
  %958 = vmatprep.subr.mxu0 0.0
  %959 = vmatpush2.msra.mxu0 0.0
  %960 = vmatprep.subr.mxu0 0.0
  %961 = vmatpush2.msra.mxu0 0.0
  %962 = vmatprep.subr.mxu0 0.0
  %963 = vmatpush2.msra.mxu0 0.0
  %964 = vmatprep.subr.mxu0 0.0
  %965 = vmatpush2.msra.mxu0 0.0
  %966 = vmatprep.subr.mxu0 0.0
  %967 = vmatpush2.msra.mxu0 0.0
  %968 = vmatprep.subr.mxu0 0.0
  %969 = vmatpush2.msra.mxu0 0.0
  %970 = vmatprep.subr.mxu0 0.0
  %971 = vmatpush2.msra.mxu0 0.0
  %972 = vmatprep.subr.mxu0 0.0
  %973 = vmatpush2.msra.mxu0 0.0
  %974 = vmatprep.subr.mxu0 0.0
  %975 = vmatpush2.msra.mxu0 0.0
  %976 = vmatprep.subr.mxu0 0.0
  %977 = vmatpush2.msra.mxu0 0.0
  %978 = vmatprep.subr.mxu0 0.0
  %979 = vmatpush2.msra.mxu0 0.0
  %980 = vmatprep.subr.mxu0 0.0
  %981 = vmatpush2.msra.mxu0 0.0
  %982 = vmatprep.mubr.f32.mxu0 0.0
  %983 = vmatmul.mubr.f32.gmra.mxu0 %v916
  %v984 = vpop.f32.mrf.mxu0
  %v985 = vadd.f32 0.0, %v984
  %v986 = vpop.f32.mrf.mxu0
  %v987 = vadd.f32 0.0, %v986
  %988 = vdwg.mxu0
  %989 = vmatprep.subr.mxu0 0.0
  %990 = vmatpush1.msra.mxu0 0.0
  %991 = vmatprep.subr.mxu0 0.0
  %992 = vmatpush1.msra.mxu0 0.0
  %993 = vmatprep.subr.mxu0 0.0
  %994 = vmatpush1.msra.mxu0 0.0
  %995 = vmatprep.subr.mxu0 0.0
  %996 = vmatpush1.msra.mxu0 0.0
  %997 = vmatprep.subr.mxu0 0.0
  %998 = vmatpush1.msra.mxu0 0.0
  %999 = vmatprep.subr.mxu0 0.0
  %1000 = vmatpush1.msra.mxu0 0.0
  %1001 = vmatprep.subr.mxu0 0.0
  %1002 = vmatpush1.msra.mxu0 0.0
  %1003 = vmatprep.subr.mxu0 0.0
  %1004 = vmatpush1.msra.mxu0 0.0
  %1005 = vmatprep.subr.mxu0 0.0
  %1006 = vmatpush1.msra.mxu0 0.0
  %1007 = vmatprep.subr.mxu0 0.0
  %1008 = vmatpush1.msra.mxu0 0.0
  %1009 = vmatprep.subr.mxu0 0.0
  %1010 = vmatpush1.msra.mxu0 0.0
  %1011 = vmatprep.subr.mxu0 0.0
  %1012 = vmatpush1.msra.mxu0 0.0
  %1013 = vmatprep.subr.mxu0 0.0
  %1014 = vmatpush1.msra.mxu0 0.0
  %1015 = vmatprep.subr.mxu0 0.0
  %1016 = vmatpush1.msra.mxu0 0.0
  %1017 = vmatprep.subr.mxu0 %v913
  %1018 = vmatpush1.msra.mxu0 %v912
  %1019 = vmatprep.subr.mxu0 %v909
  %1020 = vmatpush1.msra.mxu0 %v908
  %1021 = vmatprep.subr.mxu0 0.0
  %1022 = vmatpush2.msra.mxu0 0.0
  %1023 = vmatprep.subr.mxu0 0.0
  %1024 = vmatpush2.msra.mxu0 0.0
  %1025 = vmatprep.subr.mxu0 0.0
  %1026 = vmatpush2.msra.mxu0 0.0
  %1027 = vmatprep.subr.mxu0 0.0
  %1028 = vmatpush2.msra.mxu0 0.0
  %1029 = vmatprep.subr.mxu0 0.0
  %1030 = vmatpush2.msra.mxu0 0.0
  %1031 = vmatprep.subr.mxu0 0.0
  %1032 = vmatpush2.msra.mxu0 0.0
  %1033 = vmatprep.subr.mxu0 0.0
  %1034 = vmatpush2.msra.mxu0 0.0
  %1035 = vmatprep.subr.mxu0 0.0
  %1036 = vmatpush2.msra.mxu0 0.0
  %1037 = vmatprep.subr.mxu0 0.0
  %1038 = vmatpush2.msra.mxu0 0.0
  %1039 = vmatprep.subr.mxu0 0.0
  %1040 = vmatpush2.msra.mxu0 0.0
  %1041 = vmatprep.subr.mxu0 0.0
  %1042 = vmatpush2.msra.mxu0 0.0
  %1043 = vmatprep.subr.mxu0 0.0
  %1044 = vmatpush2.msra.mxu0 0.0
  %1045 = vmatprep.subr.mxu0 0.0
  %1046 = vmatpush2.msra.mxu0 0.0
  %1047 = vmatprep.subr.mxu0 0.0
  %1048 = vmatpush2.msra.mxu0 0.0
  %1049 = vmatprep.subr.mxu0 0.0
  %1050 = vmatpush2.msra.mxu0 0.0
  %1051 = vmatprep.subr.mxu0 0.0
  %1052 = vmatpush2.msra.mxu0 0.0
  %1053 = vmatprep.mubr.f32.mxu0 0.0
  %1054 = vmatmul.mubr.f32.gmra.mxu0 %v916
  %v1055 = vpop.f32.mrf.mxu0
  %v1056 = vadd.f32 0.0, %v1055
  %v1057 = vpop.f32.mrf.mxu0
  %v1058 = vadd.f32 0.0, %v1057
  %1059 = vdwg.mxu0
  %v1060 = vadd.f32 %v854, %v985
  %v1061 = vadd.f32 %v855, %v987
  %v1062 = vadd.f32 %v856, %v1056
  %v1063 = vadd.f32 %v857, %v1058
  %v1064 = vld [vmem:[%s1 + $0x20] sm:$0xf]
  %v1066 = vsel %vm361, %v1064, 0
  %1068 = vmatprep.subr.mxu0 0.0
  %1069 = vmatpush1.msra.mxu0 0.0
  %1070 = vmatprep.subr.mxu0 0.0
  %1071 = vmatpush1.msra.mxu0 0.0
  %1072 = vmatprep.subr.mxu0 0.0
  %1073 = vmatpush1.msra.mxu0 0.0
  %1074 = vmatprep.subr.mxu0 0.0
  %1075 = vmatpush1.msra.mxu0 0.0
  %1076 = vmatprep.subr.mxu0 0.0
  %1077 = vmatpush1.msra.mxu0 0.0
  %1078 = vmatprep.subr.mxu0 0.0
  %1079 = vmatpush1.msra.mxu0 0.0
  %1080 = vmatprep.subr.mxu0 0.0
  %1081 = vmatpush1.msra.mxu0 0.0
  %1082 = vmatprep.subr.mxu0 0.0
  %1083 = vmatpush1.msra.mxu0 0.0
  %1084 = vmatprep.subr.mxu0 0.0
  %1085 = vmatpush1.msra.mxu0 0.0
  %1086 = vmatprep.subr.mxu0 0.0
  %1087 = vmatpush1.msra.mxu0 0.0
  %1088 = vmatprep.subr.mxu0 0.0
  %1089 = vmatpush1.msra.mxu0 0.0
  %1090 = vmatprep.subr.mxu0 0.0
  %1091 = vmatpush1.msra.mxu0 0.0
  %1092 = vmatprep.subr.mxu0 0.0
  %1093 = vmatpush1.msra.mxu0 0.0
  %1094 = vmatprep.subr.mxu0 0.0
  %1095 = vmatpush1.msra.mxu0 0.0
  %1096 = vmatprep.subr.mxu0 %v243
  %1097 = vmatpush1.msra.mxu0 %v242
  %1098 = vmatprep.subr.mxu0 %v239
  %1099 = vmatpush1.msra.mxu0 %v238
  %1100 = vmatprep.subr.mxu0 0.0
  %1101 = vmatpush2.msra.mxu0 0.0
  %1102 = vmatprep.subr.mxu0 0.0
  %1103 = vmatpush2.msra.mxu0 0.0
  %1104 = vmatprep.subr.mxu0 0.0
  %1105 = vmatpush2.msra.mxu0 0.0
  %1106 = vmatprep.subr.mxu0 0.0
  %1107 = vmatpush2.msra.mxu0 0.0
  %1108 = vmatprep.subr.mxu0 0.0
  %1109 = vmatpush2.msra.mxu0 0.0
  %1110 = vmatprep.subr.mxu0 0.0
  %1111 = vmatpush2.msra.mxu0 0.0
  %1112 = vmatprep.subr.mxu0 0.0
  %1113 = vmatpush2.msra.mxu0 0.0
  %1114 = vmatprep.subr.mxu0 0.0
  %1115 = vmatpush2.msra.mxu0 0.0
  %1116 = vmatprep.subr.mxu0 0.0
  %1117 = vmatpush2.msra.mxu0 0.0
  %1118 = vmatprep.subr.mxu0 0.0
  %1119 = vmatpush2.msra.mxu0 0.0
  %1120 = vmatprep.subr.mxu0 0.0
  %1121 = vmatpush2.msra.mxu0 0.0
  %1122 = vmatprep.subr.mxu0 0.0
  %1123 = vmatpush2.msra.mxu0 0.0
  %1124 = vmatprep.subr.mxu0 0.0
  %1125 = vmatpush2.msra.mxu0 0.0
  %1126 = vmatprep.subr.mxu0 0.0
  %1127 = vmatpush2.msra.mxu0 0.0
  %1128 = vmatprep.subr.mxu0 0.0
  %1129 = vmatpush2.msra.mxu0 0.0
  %1130 = vmatprep.subr.mxu0 0.0
  %1131 = vmatpush2.msra.mxu0 0.0
  %1132 = vmatprep.mubr.f32.mxu0 0.0
  %1133 = vmatmul.mubr.f32.gmra.mxu0 %v1066
  %v1134 = vpop.f32.mrf.mxu0
  %v1135 = vadd.f32 0.0, %v1134
  %v1136 = vpop.f32.mrf.mxu0
  %v1137 = vadd.f32 0.0, %v1136
  %1138 = vdwg.mxu0
  %1139 = vmatprep.subr.mxu0 0.0
  %1140 = vmatpush1.msra.mxu0 0.0
  %1141 = vmatprep.subr.mxu0 0.0
  %1142 = vmatpush1.msra.mxu0 0.0
  %1143 = vmatprep.subr.mxu0 0.0
  %1144 = vmatpush1.msra.mxu0 0.0
  %1145 = vmatprep.subr.mxu0 0.0
  %1146 = vmatpush1.msra.mxu0 0.0
  %1147 = vmatprep.subr.mxu0 0.0
  %1148 = vmatpush1.msra.mxu0 0.0
  %1149 = vmatprep.subr.mxu0 0.0
  %1150 = vmatpush1.msra.mxu0 0.0
  %1151 = vmatprep.subr.mxu0 0.0
  %1152 = vmatpush1.msra.mxu0 0.0
  %1153 = vmatprep.subr.mxu0 0.0
  %1154 = vmatpush1.msra.mxu0 0.0
  %1155 = vmatprep.subr.mxu0 0.0
  %1156 = vmatpush1.msra.mxu0 0.0
  %1157 = vmatprep.subr.mxu0 0.0
  %1158 = vmatpush1.msra.mxu0 0.0
  %1159 = vmatprep.subr.mxu0 0.0
  %1160 = vmatpush1.msra.mxu0 0.0
  %1161 = vmatprep.subr.mxu0 0.0
  %1162 = vmatpush1.msra.mxu0 0.0
  %1163 = vmatprep.subr.mxu0 0.0
  %1164 = vmatpush1.msra.mxu0 0.0
  %1165 = vmatprep.subr.mxu0 0.0
  %1166 = vmatpush1.msra.mxu0 0.0
  %1167 = vmatprep.subr.mxu0 %v245
  %1168 = vmatpush1.msra.mxu0 %v244
  %1169 = vmatprep.subr.mxu0 %v241
  %1170 = vmatpush1.msra.mxu0 %v240
  %1171 = vmatprep.subr.mxu0 0.0
  %1172 = vmatpush2.msra.mxu0 0.0
  %1173 = vmatprep.subr.mxu0 0.0
  %1174 = vmatpush2.msra.mxu0 0.0
  %1175 = vmatprep.subr.mxu0 0.0
  %1176 = vmatpush2.msra.mxu0 0.0
  %1177 = vmatprep.subr.mxu0 0.0
  %1178 = vmatpush2.msra.mxu0 0.0
  %1179 = vmatprep.subr.mxu0 0.0
  %1180 = vmatpush2.msra.mxu0 0.0
  %1181 = vmatprep.subr.mxu0 0.0
  %1182 = vmatpush2.msra.mxu0 0.0
  %1183 = vmatprep.subr.mxu0 0.0
  %1184 = vmatpush2.msra.mxu0 0.0
  %1185 = vmatprep.subr.mxu0 0.0
  %1186 = vmatpush2.msra.mxu0 0.0
  %1187 = vmatprep.subr.mxu0 0.0
  %1188 = vmatpush2.msra.mxu0 0.0
  %1189 = vmatprep.subr.mxu0 0.0
  %1190 = vmatpush2.msra.mxu0 0.0
  %1191 = vmatprep.subr.mxu0 0.0
  %1192 = vmatpush2.msra.mxu0 0.0
  %1193 = vmatprep.subr.mxu0 0.0
  %1194 = vmatpush2.msra.mxu0 0.0
  %1195 = vmatprep.subr.mxu0 0.0
  %1196 = vmatpush2.msra.mxu0 0.0
  %1197 = vmatprep.subr.mxu0 0.0
  %1198 = vmatpush2.msra.mxu0 0.0
  %1199 = vmatprep.subr.mxu0 0.0
  %1200 = vmatpush2.msra.mxu0 0.0
  %1201 = vmatprep.subr.mxu0 0.0
  %1202 = vmatpush2.msra.mxu0 0.0
  %1203 = vmatprep.mubr.f32.mxu0 0.0
  %1204 = vmatmul.mubr.f32.gmra.mxu0 %v1066
  %v1205 = vpop.f32.mrf.mxu0
  %v1206 = vadd.f32 0.0, %v1205
  %v1207 = vpop.f32.mrf.mxu0
  %v1208 = vadd.f32 0.0, %v1207
  %1209 = vdwg.mxu0
  %v1210 = vadd.f32 %v1060, %v1135
  %v1211 = vadd.f32 %v1061, %v1137
  %v1212 = vadd.f32 %v1062, %v1206
  %v1213 = vadd.f32 %v1063, %v1208
  %1214 = vrot.lane.b32.xlu0 %v238, 127
  %v1215 = vpop.permute.xlu0 %1214
  %1216 = vrot.lane.b32.xlu0 %v242, 127
  %v1217 = vpop.permute.xlu0 %1216
  %1218 = vrot.lane.b32.xlu0 %v239, 127
  %v1219 = vpop.permute.xlu0 %1218
  %1220 = vrot.lane.b32.xlu0 %v243, 127
  %v1221 = vpop.permute.xlu0 %1220
  %1222 = vrot.lane.b32.xlu0 %v240, 127
  %v1223 = vpop.permute.xlu0 %1222
  %1224 = vrot.lane.b32.xlu0 %v244, 127
  %v1225 = vpop.permute.xlu0 %1224
  %1226 = vrot.lane.b32.xlu0 %v241, 127
  %v1227 = vpop.permute.xlu0 %1226
  %1228 = vrot.lane.b32.xlu0 %v245, 127
  %v1229 = vpop.permute.xlu0 %1228
  %vm1230 = vcmp.lt.s32.totalorder %v263, 127
  %v1231 = vsel %vm1230, %v1223, %v1227
  %v1232 = vsel %vm1230, %v1225, %v1229
  %v1233 = vsel %vm1230, %v1219, %v1223
  %v1234 = vsel %vm1230, %v1221, %v1225
  %v1235 = vsel %vm1230, %v1215, %v1219
  %v1236 = vsel %vm1230, %v1217, %v1221
  %v1237 = vsel %vm1230, %v1227, %v1215
  %v1238 = vsel %vm1230, %v1229, %v1217
  %s1239 = scalar_lea.vmem %s2, 5
  %v1240 = vld [vmem:[%s1239] ss:$8 sm:$0xf]
  %v1242 = vlaneseq
  %v1243 = vshrl.u32 %v1242, 7
  %v1244 = vsub.s32 0, %v1243
  %v1245 = vrot.slane %v1240, %v1244
  %v1246 = vlaneseq
  %v1247 = vshrl.u32 %v1246, 7
  %v1248 = vsub.s32 1, %v1247
  %v1249 = vrot.slane %v1240, %v1248
  %v1250 = vlaneseq
  %v1251 = vshrl.u32 %v1250, 7
  %v1252 = vsub.s32 2, %v1251
  %v1253 = vrot.slane %v1240, %v1252
  %v1254 = vlaneseq
  %v1255 = vshrl.u32 %v1254, 7
  %v1256 = vsub.s32 3, %v1255
  %v1257 = vrot.slane %v1240, %v1256
  %v1262 = vmul.f32 %v1235, %v1245
  %v1263 = vmul.f32 %v1233, %v1249
  %v1264 = vmul.f32 %v1231, %v1253
  %v1265 = vmul.f32 %v1237, %v1257
  %v1266 = vmul.f32 %v1236, %v1245
  %v1267 = vmul.f32 %v1234, %v1249
  %v1268 = vmul.f32 %v1232, %v1253
  %v1269 = vmul.f32 %v1238, %v1257
  %v1270 = vld [vmem:[%s1 + $0x24] sm:$0xf]
  %v1272 = vsel %vm361, %v1270, 0
  %1274 = vmatprep.subr.mxu0 0.0
  %1275 = vmatpush1.msra.mxu0 0.0
  %1276 = vmatprep.subr.mxu0 0.0
  %1277 = vmatpush1.msra.mxu0 0.0
  %1278 = vmatprep.subr.mxu0 0.0
  %1279 = vmatpush1.msra.mxu0 0.0
  %1280 = vmatprep.subr.mxu0 0.0
  %1281 = vmatpush1.msra.mxu0 0.0
  %1282 = vmatprep.subr.mxu0 0.0
  %1283 = vmatpush1.msra.mxu0 0.0
  %1284 = vmatprep.subr.mxu0 0.0
  %1285 = vmatpush1.msra.mxu0 0.0
  %1286 = vmatprep.subr.mxu0 0.0
  %1287 = vmatpush1.msra.mxu0 0.0
  %1288 = vmatprep.subr.mxu0 0.0
  %1289 = vmatpush1.msra.mxu0 0.0
  %1290 = vmatprep.subr.mxu0 0.0
  %1291 = vmatpush1.msra.mxu0 0.0
  %1292 = vmatprep.subr.mxu0 0.0
  %1293 = vmatpush1.msra.mxu0 0.0
  %1294 = vmatprep.subr.mxu0 0.0
  %1295 = vmatpush1.msra.mxu0 0.0
  %1296 = vmatprep.subr.mxu0 0.0
  %1297 = vmatpush1.msra.mxu0 0.0
  %1298 = vmatprep.subr.mxu0 0.0
  %1299 = vmatpush1.msra.mxu0 0.0
  %1300 = vmatprep.subr.mxu0 0.0
  %1301 = vmatpush1.msra.mxu0 0.0
  %1302 = vmatprep.subr.mxu0 %v1267
  %1303 = vmatpush1.msra.mxu0 %v1266
  %1304 = vmatprep.subr.mxu0 %v1263
  %1305 = vmatpush1.msra.mxu0 %v1262
  %1306 = vmatprep.subr.mxu0 0.0
  %1307 = vmatpush2.msra.mxu0 0.0
  %1308 = vmatprep.subr.mxu0 0.0
  %1309 = vmatpush2.msra.mxu0 0.0
  %1310 = vmatprep.subr.mxu0 0.0
  %1311 = vmatpush2.msra.mxu0 0.0
  %1312 = vmatprep.subr.mxu0 0.0
  %1313 = vmatpush2.msra.mxu0 0.0
  %1314 = vmatprep.subr.mxu0 0.0
  %1315 = vmatpush2.msra.mxu0 0.0
  %1316 = vmatprep.subr.mxu0 0.0
  %1317 = vmatpush2.msra.mxu0 0.0
  %1318 = vmatprep.subr.mxu0 0.0
  %1319 = vmatpush2.msra.mxu0 0.0
  %1320 = vmatprep.subr.mxu0 0.0
  %1321 = vmatpush2.msra.mxu0 0.0
  %1322 = vmatprep.subr.mxu0 0.0
  %1323 = vmatpush2.msra.mxu0 0.0
  %1324 = vmatprep.subr.mxu0 0.0
  %1325 = vmatpush2.msra.mxu0 0.0
  %1326 = vmatprep.subr.mxu0 0.0
  %1327 = vmatpush2.msra.mxu0 0.0
  %1328 = vmatprep.subr.mxu0 0.0
  %1329 = vmatpush2.msra.mxu0 0.0
  %1330 = vmatprep.subr.mxu0 0.0
  %1331 = vmatpush2.msra.mxu0 0.0
  %1332 = vmatprep.subr.mxu0 0.0
  %1333 = vmatpush2.msra.mxu0 0.0
  %1334 = vmatprep.subr.mxu0 0.0
  %1335 = vmatpush2.msra.mxu0 0.0
  %1336 = vmatprep.subr.mxu0 0.0
  %1337 = vmatpush2.msra.mxu0 0.0
  %1338 = vmatprep.mubr.f32.mxu0 0.0
  %1339 = vmatmul.mubr.f32.gmra.mxu0 %v1272
  %v1340 = vpop.f32.mrf.mxu0
  %v1341 = vadd.f32 0.0, %v1340
  %v1342 = vpop.f32.mrf.mxu0
  %v1343 = vadd.f32 0.0, %v1342
  %1344 = vdwg.mxu0
  %1345 = vmatprep.subr.mxu0 0.0
  %1346 = vmatpush1.msra.mxu0 0.0
  %1347 = vmatprep.subr.mxu0 0.0
  %1348 = vmatpush1.msra.mxu0 0.0
  %1349 = vmatprep.subr.mxu0 0.0
  %1350 = vmatpush1.msra.mxu0 0.0
  %1351 = vmatprep.subr.mxu0 0.0
  %1352 = vmatpush1.msra.mxu0 0.0
  %1353 = vmatprep.subr.mxu0 0.0
  %1354 = vmatpush1.msra.mxu0 0.0
  %1355 = vmatprep.subr.mxu0 0.0
  %1356 = vmatpush1.msra.mxu0 0.0
  %1357 = vmatprep.subr.mxu0 0.0
  %1358 = vmatpush1.msra.mxu0 0.0
  %1359 = vmatprep.subr.mxu0 0.0
  %1360 = vmatpush1.msra.mxu0 0.0
  %1361 = vmatprep.subr.mxu0 0.0
  %1362 = vmatpush1.msra.mxu0 0.0
  %1363 = vmatprep.subr.mxu0 0.0
  %1364 = vmatpush1.msra.mxu0 0.0
  %1365 = vmatprep.subr.mxu0 0.0
  %1366 = vmatpush1.msra.mxu0 0.0
  %1367 = vmatprep.subr.mxu0 0.0
  %1368 = vmatpush1.msra.mxu0 0.0
  %1369 = vmatprep.subr.mxu0 0.0
  %1370 = vmatpush1.msra.mxu0 0.0
  %1371 = vmatprep.subr.mxu0 0.0
  %1372 = vmatpush1.msra.mxu0 0.0
  %1373 = vmatprep.subr.mxu0 %v1269
  %1374 = vmatpush1.msra.mxu0 %v1268
  %1375 = vmatprep.subr.mxu0 %v1265
  %1376 = vmatpush1.msra.mxu0 %v1264
  %1377 = vmatprep.subr.mxu0 0.0
  %1378 = vmatpush2.msra.mxu0 0.0
  %1379 = vmatprep.subr.mxu0 0.0
  %1380 = vmatpush2.msra.mxu0 0.0
  %1381 = vmatprep.subr.mxu0 0.0
  %1382 = vmatpush2.msra.mxu0 0.0
  %1383 = vmatprep.subr.mxu0 0.0
  %1384 = vmatpush2.msra.mxu0 0.0
  %1385 = vmatprep.subr.mxu0 0.0
  %1386 = vmatpush2.msra.mxu0 0.0
  %1387 = vmatprep.subr.mxu0 0.0
  %1388 = vmatpush2.msra.mxu0 0.0
  %1389 = vmatprep.subr.mxu0 0.0
  %1390 = vmatpush2.msra.mxu0 0.0
  %1391 = vmatprep.subr.mxu0 0.0
  %1392 = vmatpush2.msra.mxu0 0.0
  %1393 = vmatprep.subr.mxu0 0.0
  %1394 = vmatpush2.msra.mxu0 0.0
  %1395 = vmatprep.subr.mxu0 0.0
  %1396 = vmatpush2.msra.mxu0 0.0
  %1397 = vmatprep.subr.mxu0 0.0
  %1398 = vmatpush2.msra.mxu0 0.0
  %1399 = vmatprep.subr.mxu0 0.0
  %1400 = vmatpush2.msra.mxu0 0.0
  %1401 = vmatprep.subr.mxu0 0.0
  %1402 = vmatpush2.msra.mxu0 0.0
  %1403 = vmatprep.subr.mxu0 0.0
  %1404 = vmatpush2.msra.mxu0 0.0
  %1405 = vmatprep.subr.mxu0 0.0
  %1406 = vmatpush2.msra.mxu0 0.0
  %1407 = vmatprep.subr.mxu0 0.0
  %1408 = vmatpush2.msra.mxu0 0.0
  %1409 = vmatprep.mubr.f32.mxu0 0.0
  %1410 = vmatmul.mubr.f32.gmra.mxu0 %v1272
  %v1411 = vpop.f32.mrf.mxu0
  %v1412 = vadd.f32 0.0, %v1411
  %v1413 = vpop.f32.mrf.mxu0
  %v1414 = vadd.f32 0.0, %v1413
  %1415 = vdwg.mxu0
  %v1416 = vadd.f32 %v1210, %v1341
  %v1417 = vadd.f32 %v1211, %v1343
  %v1418 = vadd.f32 %v1212, %v1412
  %v1419 = vadd.f32 %v1213, %v1414
  %1420 = vrot.lane.b32.xlu0 %v238, 113
  %v1421 = vpop.permute.xlu0 %1420
  %1422 = vrot.lane.b32.xlu0 %v242, 113
  %v1423 = vpop.permute.xlu0 %1422
  %1424 = vrot.lane.b32.xlu0 %v239, 113
  %v1425 = vpop.permute.xlu0 %1424
  %1426 = vrot.lane.b32.xlu0 %v243, 113
  %v1427 = vpop.permute.xlu0 %1426
  %1428 = vrot.lane.b32.xlu0 %v240, 113
  %v1429 = vpop.permute.xlu0 %1428
  %1430 = vrot.lane.b32.xlu0 %v244, 113
  %v1431 = vpop.permute.xlu0 %1430
  %1432 = vrot.lane.b32.xlu0 %v241, 113
  %v1433 = vpop.permute.xlu0 %1432
  %1434 = vrot.lane.b32.xlu0 %v245, 113
  %v1435 = vpop.permute.xlu0 %1434
  %vm1436 = vcmp.lt.s32.totalorder %v263, 113
  %v1437 = vsel %vm1436, %v1429, %v1433
  %v1438 = vsel %vm1436, %v1431, %v1435
  %v1439 = vsel %vm1436, %v1425, %v1429
  %v1440 = vsel %vm1436, %v1427, %v1431
  %v1441 = vsel %vm1436, %v1421, %v1425
  %v1442 = vsel %vm1436, %v1423, %v1427
  %v1443 = vsel %vm1436, %v1433, %v1421
  %v1444 = vsel %vm1436, %v1435, %v1423
  %s1445 = scalar_lea.vmem %s2, 6
  %v1446 = vld [vmem:[%s1445] ss:$8 sm:$0xf]
  %v1448 = vlaneseq
  %v1449 = vshrl.u32 %v1448, 7
  %v1450 = vsub.s32 0, %v1449
  %v1451 = vrot.slane %v1446, %v1450
  %v1452 = vlaneseq
  %v1453 = vshrl.u32 %v1452, 7
  %v1454 = vsub.s32 1, %v1453
  %v1455 = vrot.slane %v1446, %v1454
  %v1456 = vlaneseq
  %v1457 = vshrl.u32 %v1456, 7
  %v1458 = vsub.s32 2, %v1457
  %v1459 = vrot.slane %v1446, %v1458
  %v1460 = vlaneseq
  %v1461 = vshrl.u32 %v1460, 7
  %v1462 = vsub.s32 3, %v1461
  %v1463 = vrot.slane %v1446, %v1462
  %v1468 = vmul.f32 %v1441, %v1451
  %v1469 = vmul.f32 %v1439, %v1455
  %v1470 = vmul.f32 %v1437, %v1459
  %v1471 = vmul.f32 %v1443, %v1463
  %v1472 = vmul.f32 %v1442, %v1451
  %v1473 = vmul.f32 %v1440, %v1455
  %v1474 = vmul.f32 %v1438, %v1459
  %v1475 = vmul.f32 %v1444, %v1463
  %v1476 = vld [vmem:[%s1 + $0x28] sm:$0xf]
  %v1478 = vsel %vm361, %v1476, 0
  %1480 = vmatprep.subr.mxu0 0.0
  %1481 = vmatpush1.msra.mxu0 0.0
  %1482 = vmatprep.subr.mxu0 0.0
  %1483 = vmatpush1.msra.mxu0 0.0
  %1484 = vmatprep.subr.mxu0 0.0
  %1485 = vmatpush1.msra.mxu0 0.0
  %1486 = vmatprep.subr.mxu0 0.0
  %1487 = vmatpush1.msra.mxu0 0.0
  %1488 = vmatprep.subr.mxu0 0.0
  %1489 = vmatpush1.msra.mxu0 0.0
  %1490 = vmatprep.subr.mxu0 0.0
  %1491 = vmatpush1.msra.mxu0 0.0
  %1492 = vmatprep.subr.mxu0 0.0
  %1493 = vmatpush1.msra.mxu0 0.0
  %1494 = vmatprep.subr.mxu0 0.0
  %1495 = vmatpush1.msra.mxu0 0.0
  %1496 = vmatprep.subr.mxu0 0.0
  %1497 = vmatpush1.msra.mxu0 0.0
  %1498 = vmatprep.subr.mxu0 0.0
  %1499 = vmatpush1.msra.mxu0 0.0
  %1500 = vmatprep.subr.mxu0 0.0
  %1501 = vmatpush1.msra.mxu0 0.0
  %1502 = vmatprep.subr.mxu0 0.0
  %1503 = vmatpush1.msra.mxu0 0.0
  %1504 = vmatprep.subr.mxu0 0.0
  %1505 = vmatpush1.msra.mxu0 0.0
  %1506 = vmatprep.subr.mxu0 0.0
  %1507 = vmatpush1.msra.mxu0 0.0
  %1508 = vmatprep.subr.mxu0 %v1473
  %1509 = vmatpush1.msra.mxu0 %v1472
  %1510 = vmatprep.subr.mxu0 %v1469
  %1511 = vmatpush1.msra.mxu0 %v1468
  %1512 = vmatprep.subr.mxu0 0.0
  %1513 = vmatpush2.msra.mxu0 0.0
  %1514 = vmatprep.subr.mxu0 0.0
  %1515 = vmatpush2.msra.mxu0 0.0
  %1516 = vmatprep.subr.mxu0 0.0
  %1517 = vmatpush2.msra.mxu0 0.0
  %1518 = vmatprep.subr.mxu0 0.0
  %1519 = vmatpush2.msra.mxu0 0.0
  %1520 = vmatprep.subr.mxu0 0.0
  %1521 = vmatpush2.msra.mxu0 0.0
  %1522 = vmatprep.subr.mxu0 0.0
  %1523 = vmatpush2.msra.mxu0 0.0
  %1524 = vmatprep.subr.mxu0 0.0
  %1525 = vmatpush2.msra.mxu0 0.0
  %1526 = vmatprep.subr.mxu0 0.0
  %1527 = vmatpush2.msra.mxu0 0.0
  %1528 = vmatprep.subr.mxu0 0.0
  %1529 = vmatpush2.msra.mxu0 0.0
  %1530 = vmatprep.subr.mxu0 0.0
  %1531 = vmatpush2.msra.mxu0 0.0
  %1532 = vmatprep.subr.mxu0 0.0
  %1533 = vmatpush2.msra.mxu0 0.0
  %1534 = vmatprep.subr.mxu0 0.0
  %1535 = vmatpush2.msra.mxu0 0.0
  %1536 = vmatprep.subr.mxu0 0.0
  %1537 = vmatpush2.msra.mxu0 0.0
  %1538 = vmatprep.subr.mxu0 0.0
  %1539 = vmatpush2.msra.mxu0 0.0
  %1540 = vmatprep.subr.mxu0 0.0
  %1541 = vmatpush2.msra.mxu0 0.0
  %1542 = vmatprep.subr.mxu0 0.0
  %1543 = vmatpush2.msra.mxu0 0.0
  %1544 = vmatprep.mubr.f32.mxu0 0.0
  %1545 = vmatmul.mubr.f32.gmra.mxu0 %v1478
  %v1546 = vpop.f32.mrf.mxu0
  %v1547 = vadd.f32 0.0, %v1546
  %v1548 = vpop.f32.mrf.mxu0
  %v1549 = vadd.f32 0.0, %v1548
  %1550 = vdwg.mxu0
  %1551 = vmatprep.subr.mxu0 0.0
  %1552 = vmatpush1.msra.mxu0 0.0
  %1553 = vmatprep.subr.mxu0 0.0
  %1554 = vmatpush1.msra.mxu0 0.0
  %1555 = vmatprep.subr.mxu0 0.0
  %1556 = vmatpush1.msra.mxu0 0.0
  %1557 = vmatprep.subr.mxu0 0.0
  %1558 = vmatpush1.msra.mxu0 0.0
  %1559 = vmatprep.subr.mxu0 0.0
  %1560 = vmatpush1.msra.mxu0 0.0
  %1561 = vmatprep.subr.mxu0 0.0
  %1562 = vmatpush1.msra.mxu0 0.0
  %1563 = vmatprep.subr.mxu0 0.0
  %1564 = vmatpush1.msra.mxu0 0.0
  %1565 = vmatprep.subr.mxu0 0.0
  %1566 = vmatpush1.msra.mxu0 0.0
  %1567 = vmatprep.subr.mxu0 0.0
  %1568 = vmatpush1.msra.mxu0 0.0
  %1569 = vmatprep.subr.mxu0 0.0
  %1570 = vmatpush1.msra.mxu0 0.0
  %1571 = vmatprep.subr.mxu0 0.0
  %1572 = vmatpush1.msra.mxu0 0.0
  %1573 = vmatprep.subr.mxu0 0.0
  %1574 = vmatpush1.msra.mxu0 0.0
  %1575 = vmatprep.subr.mxu0 0.0
  %1576 = vmatpush1.msra.mxu0 0.0
  %1577 = vmatprep.subr.mxu0 0.0
  %1578 = vmatpush1.msra.mxu0 0.0
  %1579 = vmatprep.subr.mxu0 %v1475
  %1580 = vmatpush1.msra.mxu0 %v1474
  %1581 = vmatprep.subr.mxu0 %v1471
  %1582 = vmatpush1.msra.mxu0 %v1470
  %1583 = vmatprep.subr.mxu0 0.0
  %1584 = vmatpush2.msra.mxu0 0.0
  %1585 = vmatprep.subr.mxu0 0.0
  %1586 = vmatpush2.msra.mxu0 0.0
  %1587 = vmatprep.subr.mxu0 0.0
  %1588 = vmatpush2.msra.mxu0 0.0
  %1589 = vmatprep.subr.mxu0 0.0
  %1590 = vmatpush2.msra.mxu0 0.0
  %1591 = vmatprep.subr.mxu0 0.0
  %1592 = vmatpush2.msra.mxu0 0.0
  %1593 = vmatprep.subr.mxu0 0.0
  %1594 = vmatpush2.msra.mxu0 0.0
  %1595 = vmatprep.subr.mxu0 0.0
  %1596 = vmatpush2.msra.mxu0 0.0
  %1597 = vmatprep.subr.mxu0 0.0
  %1598 = vmatpush2.msra.mxu0 0.0
  %1599 = vmatprep.subr.mxu0 0.0
  %1600 = vmatpush2.msra.mxu0 0.0
  %1601 = vmatprep.subr.mxu0 0.0
  %1602 = vmatpush2.msra.mxu0 0.0
  %1603 = vmatprep.subr.mxu0 0.0
  %1604 = vmatpush2.msra.mxu0 0.0
  %1605 = vmatprep.subr.mxu0 0.0
  %1606 = vmatpush2.msra.mxu0 0.0
  %1607 = vmatprep.subr.mxu0 0.0
  %1608 = vmatpush2.msra.mxu0 0.0
  %1609 = vmatprep.subr.mxu0 0.0
  %1610 = vmatpush2.msra.mxu0 0.0
  %1611 = vmatprep.subr.mxu0 0.0
  %1612 = vmatpush2.msra.mxu0 0.0
  %1613 = vmatprep.subr.mxu0 0.0
  %1614 = vmatpush2.msra.mxu0 0.0
  %1615 = vmatprep.mubr.f32.mxu0 0.0
  %1616 = vmatmul.mubr.f32.gmra.mxu0 %v1478
  %v1617 = vpop.f32.mrf.mxu0
  %v1618 = vadd.f32 0.0, %v1617
  %v1619 = vpop.f32.mrf.mxu0
  %v1620 = vadd.f32 0.0, %v1619
  %1621 = vdwg.mxu0
  %v1622 = vadd.f32 %v1416, %v1547
  %v1623 = vadd.f32 %v1417, %v1549
  %v1624 = vadd.f32 %v1418, %v1618
  %v1625 = vadd.f32 %v1419, %v1620
  %1626 = vrot.lane.b32.xlu0 %v238, 112
  %v1627 = vpop.permute.xlu0 %1626
  %1628 = vrot.lane.b32.xlu0 %v242, 112
  %v1629 = vpop.permute.xlu0 %1628
  %1630 = vrot.lane.b32.xlu0 %v239, 112
  %v1631 = vpop.permute.xlu0 %1630
  %1632 = vrot.lane.b32.xlu0 %v243, 112
  %v1633 = vpop.permute.xlu0 %1632
  %1634 = vrot.lane.b32.xlu0 %v240, 112
  %v1635 = vpop.permute.xlu0 %1634
  %1636 = vrot.lane.b32.xlu0 %v244, 112
  %v1637 = vpop.permute.xlu0 %1636
  %1638 = vrot.lane.b32.xlu0 %v241, 112
  %v1639 = vpop.permute.xlu0 %1638
  %1640 = vrot.lane.b32.xlu0 %v245, 112
  %v1641 = vpop.permute.xlu0 %1640
  %vm1642 = vcmp.lt.s32.totalorder %v263, 112
  %v1643 = vsel %vm1642, %v1635, %v1639
  %v1644 = vsel %vm1642, %v1637, %v1641
  %v1645 = vsel %vm1642, %v1631, %v1635
  %v1646 = vsel %vm1642, %v1633, %v1637
  %v1647 = vsel %vm1642, %v1627, %v1631
  %v1648 = vsel %vm1642, %v1629, %v1633
  %v1649 = vsel %vm1642, %v1639, %v1627
  %v1650 = vsel %vm1642, %v1641, %v1629
  %s1651 = scalar_lea.vmem %s2, 7
  %v1652 = vld [vmem:[%s1651] ss:$8 sm:$0xf]
  %v1654 = vlaneseq
  %v1655 = vshrl.u32 %v1654, 7
  %v1656 = vsub.s32 0, %v1655
  %v1657 = vrot.slane %v1652, %v1656
  %v1658 = vlaneseq
  %v1659 = vshrl.u32 %v1658, 7
  %v1660 = vsub.s32 1, %v1659
  %v1661 = vrot.slane %v1652, %v1660
  %v1662 = vlaneseq
  %v1663 = vshrl.u32 %v1662, 7
  %v1664 = vsub.s32 2, %v1663
  %v1665 = vrot.slane %v1652, %v1664
  %v1666 = vlaneseq
  %v1667 = vshrl.u32 %v1666, 7
  %v1668 = vsub.s32 3, %v1667
  %v1669 = vrot.slane %v1652, %v1668
  %v1674 = vmul.f32 %v1647, %v1657
  %v1675 = vmul.f32 %v1645, %v1661
  %v1676 = vmul.f32 %v1643, %v1665
  %v1677 = vmul.f32 %v1649, %v1669
  %v1678 = vmul.f32 %v1648, %v1657
  %v1679 = vmul.f32 %v1646, %v1661
  %v1680 = vmul.f32 %v1644, %v1665
  %v1681 = vmul.f32 %v1650, %v1669
  %v1682 = vld [vmem:[%s1 + $0x2c] sm:$0xf]
  %v1684 = vsel %vm361, %v1682, 0
  %1686 = vmatprep.subr.mxu0 0.0
  %1687 = vmatpush1.msra.mxu0 0.0
  %1688 = vmatprep.subr.mxu0 0.0
  %1689 = vmatpush1.msra.mxu0 0.0
  %1690 = vmatprep.subr.mxu0 0.0
  %1691 = vmatpush1.msra.mxu0 0.0
  %1692 = vmatprep.subr.mxu0 0.0
  %1693 = vmatpush1.msra.mxu0 0.0
  %1694 = vmatprep.subr.mxu0 0.0
  %1695 = vmatpush1.msra.mxu0 0.0
  %1696 = vmatprep.subr.mxu0 0.0
  %1697 = vmatpush1.msra.mxu0 0.0
  %1698 = vmatprep.subr.mxu0 0.0
  %1699 = vmatpush1.msra.mxu0 0.0
  %1700 = vmatprep.subr.mxu0 0.0
  %1701 = vmatpush1.msra.mxu0 0.0
  %1702 = vmatprep.subr.mxu0 0.0
  %1703 = vmatpush1.msra.mxu0 0.0
  %1704 = vmatprep.subr.mxu0 0.0
  %1705 = vmatpush1.msra.mxu0 0.0
  %1706 = vmatprep.subr.mxu0 0.0
  %1707 = vmatpush1.msra.mxu0 0.0
  %1708 = vmatprep.subr.mxu0 0.0
  %1709 = vmatpush1.msra.mxu0 0.0
  %1710 = vmatprep.subr.mxu0 0.0
  %1711 = vmatpush1.msra.mxu0 0.0
  %1712 = vmatprep.subr.mxu0 0.0
  %1713 = vmatpush1.msra.mxu0 0.0
  %1714 = vmatprep.subr.mxu0 %v1679
  %1715 = vmatpush1.msra.mxu0 %v1678
  %1716 = vmatprep.subr.mxu0 %v1675
  %1717 = vmatpush1.msra.mxu0 %v1674
  %1718 = vmatprep.subr.mxu0 0.0
  %1719 = vmatpush2.msra.mxu0 0.0
  %1720 = vmatprep.subr.mxu0 0.0
  %1721 = vmatpush2.msra.mxu0 0.0
  %1722 = vmatprep.subr.mxu0 0.0
  %1723 = vmatpush2.msra.mxu0 0.0
  %1724 = vmatprep.subr.mxu0 0.0
  %1725 = vmatpush2.msra.mxu0 0.0
  %1726 = vmatprep.subr.mxu0 0.0
  %1727 = vmatpush2.msra.mxu0 0.0
  %1728 = vmatprep.subr.mxu0 0.0
  %1729 = vmatpush2.msra.mxu0 0.0
  %1730 = vmatprep.subr.mxu0 0.0
  %1731 = vmatpush2.msra.mxu0 0.0
  %1732 = vmatprep.subr.mxu0 0.0
  %1733 = vmatpush2.msra.mxu0 0.0
  %1734 = vmatprep.subr.mxu0 0.0
  %1735 = vmatpush2.msra.mxu0 0.0
  %1736 = vmatprep.subr.mxu0 0.0
  %1737 = vmatpush2.msra.mxu0 0.0
  %1738 = vmatprep.subr.mxu0 0.0
  %1739 = vmatpush2.msra.mxu0 0.0
  %1740 = vmatprep.subr.mxu0 0.0
  %1741 = vmatpush2.msra.mxu0 0.0
  %1742 = vmatprep.subr.mxu0 0.0
  %1743 = vmatpush2.msra.mxu0 0.0
  %1744 = vmatprep.subr.mxu0 0.0
  %1745 = vmatpush2.msra.mxu0 0.0
  %1746 = vmatprep.subr.mxu0 0.0
  %1747 = vmatpush2.msra.mxu0 0.0
  %1748 = vmatprep.subr.mxu0 0.0
  %1749 = vmatpush2.msra.mxu0 0.0
  %1750 = vmatprep.mubr.f32.mxu0 0.0
  %1751 = vmatmul.mubr.f32.gmra.mxu0 %v1684
  %v1752 = vpop.f32.mrf.mxu0
  %v1753 = vadd.f32 0.0, %v1752
  %v1754 = vpop.f32.mrf.mxu0
  %v1755 = vadd.f32 0.0, %v1754
  %1756 = vdwg.mxu0
  %1757 = vmatprep.subr.mxu0 0.0
  %1758 = vmatpush1.msra.mxu0 0.0
  %1759 = vmatprep.subr.mxu0 0.0
  %1760 = vmatpush1.msra.mxu0 0.0
  %1761 = vmatprep.subr.mxu0 0.0
  %1762 = vmatpush1.msra.mxu0 0.0
  %1763 = vmatprep.subr.mxu0 0.0
  %1764 = vmatpush1.msra.mxu0 0.0
  %1765 = vmatprep.subr.mxu0 0.0
  %1766 = vmatpush1.msra.mxu0 0.0
  %1767 = vmatprep.subr.mxu0 0.0
  %1768 = vmatpush1.msra.mxu0 0.0
  %1769 = vmatprep.subr.mxu0 0.0
  %1770 = vmatpush1.msra.mxu0 0.0
  %1771 = vmatprep.subr.mxu0 0.0
  %1772 = vmatpush1.msra.mxu0 0.0
  %1773 = vmatprep.subr.mxu0 0.0
  %1774 = vmatpush1.msra.mxu0 0.0
  %1775 = vmatprep.subr.mxu0 0.0
  %1776 = vmatpush1.msra.mxu0 0.0
  %1777 = vmatprep.subr.mxu0 0.0
  %1778 = vmatpush1.msra.mxu0 0.0
  %1779 = vmatprep.subr.mxu0 0.0
  %1780 = vmatpush1.msra.mxu0 0.0
  %1781 = vmatprep.subr.mxu0 0.0
  %1782 = vmatpush1.msra.mxu0 0.0
  %1783 = vmatprep.subr.mxu0 0.0
  %1784 = vmatpush1.msra.mxu0 0.0
  %1785 = vmatprep.subr.mxu0 %v1681
  %1786 = vmatpush1.msra.mxu0 %v1680
  %1787 = vmatprep.subr.mxu0 %v1677
  %1788 = vmatpush1.msra.mxu0 %v1676
  %1789 = vmatprep.subr.mxu0 0.0
  %1790 = vmatpush2.msra.mxu0 0.0
  %1791 = vmatprep.subr.mxu0 0.0
  %1792 = vmatpush2.msra.mxu0 0.0
  %1793 = vmatprep.subr.mxu0 0.0
  %1794 = vmatpush2.msra.mxu0 0.0
  %1795 = vmatprep.subr.mxu0 0.0
  %1796 = vmatpush2.msra.mxu0 0.0
  %1797 = vmatprep.subr.mxu0 0.0
  %1798 = vmatpush2.msra.mxu0 0.0
  %1799 = vmatprep.subr.mxu0 0.0
  %1800 = vmatpush2.msra.mxu0 0.0
  %1801 = vmatprep.subr.mxu0 0.0
  %1802 = vmatpush2.msra.mxu0 0.0
  %1803 = vmatprep.subr.mxu0 0.0
  %1804 = vmatpush2.msra.mxu0 0.0
  %1805 = vmatprep.subr.mxu0 0.0
  %1806 = vmatpush2.msra.mxu0 0.0
  %1807 = vmatprep.subr.mxu0 0.0
  %1808 = vmatpush2.msra.mxu0 0.0
  %1809 = vmatprep.subr.mxu0 0.0
  %1810 = vmatpush2.msra.mxu0 0.0
  %1811 = vmatprep.subr.mxu0 0.0
  %1812 = vmatpush2.msra.mxu0 0.0
  %1813 = vmatprep.subr.mxu0 0.0
  %1814 = vmatpush2.msra.mxu0 0.0
  %1815 = vmatprep.subr.mxu0 0.0
  %1816 = vmatpush2.msra.mxu0 0.0
  %1817 = vmatprep.subr.mxu0 0.0
  %1818 = vmatpush2.msra.mxu0 0.0
  %1819 = vmatprep.subr.mxu0 0.0
  %1820 = vmatpush2.msra.mxu0 0.0
  %1821 = vmatprep.mubr.f32.mxu0 0.0
  %1822 = vmatmul.mubr.f32.gmra.mxu0 %v1684
  %v1823 = vpop.f32.mrf.mxu0
  %v1824 = vadd.f32 0.0, %v1823
  %v1825 = vpop.f32.mrf.mxu0
  %v1826 = vadd.f32 0.0, %v1825
  %1827 = vdwg.mxu0
  %v1828 = vadd.f32 %v1622, %v1753
  %v1829 = vadd.f32 %v1623, %v1755
  %v1830 = vadd.f32 %v1624, %v1824
  %v1831 = vadd.f32 %v1625, %v1826
  %1832 = vrot.lane.b32.xlu0 %v238, 111
  %v1833 = vpop.permute.xlu0 %1832
  %1834 = vrot.lane.b32.xlu0 %v242, 111
  %v1835 = vpop.permute.xlu0 %1834
  %1836 = vrot.lane.b32.xlu0 %v239, 111
  %v1837 = vpop.permute.xlu0 %1836
  %1838 = vrot.lane.b32.xlu0 %v243, 111
  %v1839 = vpop.permute.xlu0 %1838
  %1840 = vrot.lane.b32.xlu0 %v240, 111
  %v1841 = vpop.permute.xlu0 %1840
  %1842 = vrot.lane.b32.xlu0 %v244, 111
  %v1843 = vpop.permute.xlu0 %1842
  %1844 = vrot.lane.b32.xlu0 %v241, 111
  %v1845 = vpop.permute.xlu0 %1844
  %1846 = vrot.lane.b32.xlu0 %v245, 111
  %v1847 = vpop.permute.xlu0 %1846
  %vm1848 = vcmp.lt.s32.totalorder %v263, 111
  %v1849 = vsel %vm1848, %v1841, %v1845
  %v1850 = vsel %vm1848, %v1843, %v1847
  %v1851 = vsel %vm1848, %v1837, %v1841
  %v1852 = vsel %vm1848, %v1839, %v1843
  %v1853 = vsel %vm1848, %v1833, %v1837
  %v1854 = vsel %vm1848, %v1835, %v1839
  %v1855 = vsel %vm1848, %v1845, %v1833
  %v1856 = vsel %vm1848, %v1847, %v1835
  %s1857 = scalar_lea.vmem %s2, 32
  %v1858 = vld [vmem:[%s1857] ss:$8 sm:$0xf]
  %v1860 = vlaneseq
  %v1861 = vshrl.u32 %v1860, 7
  %v1862 = vsub.s32 0, %v1861
  %v1863 = vrot.slane %v1858, %v1862
  %v1864 = vlaneseq
  %v1865 = vshrl.u32 %v1864, 7
  %v1866 = vsub.s32 1, %v1865
  %v1867 = vrot.slane %v1858, %v1866
  %v1868 = vlaneseq
  %v1869 = vshrl.u32 %v1868, 7
  %v1870 = vsub.s32 2, %v1869
  %v1871 = vrot.slane %v1858, %v1870
  %v1872 = vlaneseq
  %v1873 = vshrl.u32 %v1872, 7
  %v1874 = vsub.s32 3, %v1873
  %v1875 = vrot.slane %v1858, %v1874
  %v1880 = vmul.f32 %v1853, %v1863
  %v1881 = vmul.f32 %v1851, %v1867
  %v1882 = vmul.f32 %v1849, %v1871
  %v1883 = vmul.f32 %v1855, %v1875
  %v1884 = vmul.f32 %v1854, %v1863
  %v1885 = vmul.f32 %v1852, %v1867
  %v1886 = vmul.f32 %v1850, %v1871
  %v1887 = vmul.f32 %v1856, %v1875
  %v1888 = vld [vmem:[%s1 + $0x30] sm:$0xf]
  %v1890 = vsel %vm361, %v1888, 0
  %1892 = vmatprep.subr.mxu0 0.0
  %1893 = vmatpush1.msra.mxu0 0.0
  %1894 = vmatprep.subr.mxu0 0.0
  %1895 = vmatpush1.msra.mxu0 0.0
  %1896 = vmatprep.subr.mxu0 0.0
  %1897 = vmatpush1.msra.mxu0 0.0
  %1898 = vmatprep.subr.mxu0 0.0
  %1899 = vmatpush1.msra.mxu0 0.0
  %1900 = vmatprep.subr.mxu0 0.0
  %1901 = vmatpush1.msra.mxu0 0.0
  %1902 = vmatprep.subr.mxu0 0.0
  %1903 = vmatpush1.msra.mxu0 0.0
  %1904 = vmatprep.subr.mxu0 0.0
  %1905 = vmatpush1.msra.mxu0 0.0
  %1906 = vmatprep.subr.mxu0 0.0
  %1907 = vmatpush1.msra.mxu0 0.0
  %1908 = vmatprep.subr.mxu0 0.0
  %1909 = vmatpush1.msra.mxu0 0.0
  %1910 = vmatprep.subr.mxu0 0.0
  %1911 = vmatpush1.msra.mxu0 0.0
  %1912 = vmatprep.subr.mxu0 0.0
  %1913 = vmatpush1.msra.mxu0 0.0
  %1914 = vmatprep.subr.mxu0 0.0
  %1915 = vmatpush1.msra.mxu0 0.0
  %1916 = vmatprep.subr.mxu0 0.0
  %1917 = vmatpush1.msra.mxu0 0.0
  %1918 = vmatprep.subr.mxu0 0.0
  %1919 = vmatpush1.msra.mxu0 0.0
  %1920 = vmatprep.subr.mxu0 %v1885
  %1921 = vmatpush1.msra.mxu0 %v1884
  %1922 = vmatprep.subr.mxu0 %v1881
  %1923 = vmatpush1.msra.mxu0 %v1880
  %1924 = vmatprep.subr.mxu0 0.0
  %1925 = vmatpush2.msra.mxu0 0.0
  %1926 = vmatprep.subr.mxu0 0.0
  %1927 = vmatpush2.msra.mxu0 0.0
  %1928 = vmatprep.subr.mxu0 0.0
  %1929 = vmatpush2.msra.mxu0 0.0
  %1930 = vmatprep.subr.mxu0 0.0
  %1931 = vmatpush2.msra.mxu0 0.0
  %1932 = vmatprep.subr.mxu0 0.0
  %1933 = vmatpush2.msra.mxu0 0.0
  %1934 = vmatprep.subr.mxu0 0.0
  %1935 = vmatpush2.msra.mxu0 0.0
  %1936 = vmatprep.subr.mxu0 0.0
  %1937 = vmatpush2.msra.mxu0 0.0
  %1938 = vmatprep.subr.mxu0 0.0
  %1939 = vmatpush2.msra.mxu0 0.0
  %1940 = vmatprep.subr.mxu0 0.0
  %1941 = vmatpush2.msra.mxu0 0.0
  %1942 = vmatprep.subr.mxu0 0.0
  %1943 = vmatpush2.msra.mxu0 0.0
  %1944 = vmatprep.subr.mxu0 0.0
  %1945 = vmatpush2.msra.mxu0 0.0
  %1946 = vmatprep.subr.mxu0 0.0
  %1947 = vmatpush2.msra.mxu0 0.0
  %1948 = vmatprep.subr.mxu0 0.0
  %1949 = vmatpush2.msra.mxu0 0.0
  %1950 = vmatprep.subr.mxu0 0.0
  %1951 = vmatpush2.msra.mxu0 0.0
  %1952 = vmatprep.subr.mxu0 0.0
  %1953 = vmatpush2.msra.mxu0 0.0
  %1954 = vmatprep.subr.mxu0 0.0
  %1955 = vmatpush2.msra.mxu0 0.0
  %1956 = vmatprep.mubr.f32.mxu0 0.0
  %1957 = vmatmul.mubr.f32.gmra.mxu0 %v1890
  %v1958 = vpop.f32.mrf.mxu0
  %v1959 = vadd.f32 0.0, %v1958
  %v1960 = vpop.f32.mrf.mxu0
  %v1961 = vadd.f32 0.0, %v1960
  %1962 = vdwg.mxu0
  %1963 = vmatprep.subr.mxu0 0.0
  %1964 = vmatpush1.msra.mxu0 0.0
  %1965 = vmatprep.subr.mxu0 0.0
  %1966 = vmatpush1.msra.mxu0 0.0
  %1967 = vmatprep.subr.mxu0 0.0
  %1968 = vmatpush1.msra.mxu0 0.0
  %1969 = vmatprep.subr.mxu0 0.0
  %1970 = vmatpush1.msra.mxu0 0.0
  %1971 = vmatprep.subr.mxu0 0.0
  %1972 = vmatpush1.msra.mxu0 0.0
  %1973 = vmatprep.subr.mxu0 0.0
  %1974 = vmatpush1.msra.mxu0 0.0
  %1975 = vmatprep.subr.mxu0 0.0
  %1976 = vmatpush1.msra.mxu0 0.0
  %1977 = vmatprep.subr.mxu0 0.0
  %1978 = vmatpush1.msra.mxu0 0.0
  %1979 = vmatprep.subr.mxu0 0.0
  %1980 = vmatpush1.msra.mxu0 0.0
  %1981 = vmatprep.subr.mxu0 0.0
  %1982 = vmatpush1.msra.mxu0 0.0
  %1983 = vmatprep.subr.mxu0 0.0
  %1984 = vmatpush1.msra.mxu0 0.0
  %1985 = vmatprep.subr.mxu0 0.0
  %1986 = vmatpush1.msra.mxu0 0.0
  %1987 = vmatprep.subr.mxu0 0.0
  %1988 = vmatpush1.msra.mxu0 0.0
  %1989 = vmatprep.subr.mxu0 0.0
  %1990 = vmatpush1.msra.mxu0 0.0
  %1991 = vmatprep.subr.mxu0 %v1887
  %1992 = vmatpush1.msra.mxu0 %v1886
  %1993 = vmatprep.subr.mxu0 %v1883
  %1994 = vmatpush1.msra.mxu0 %v1882
  %1995 = vmatprep.subr.mxu0 0.0
  %1996 = vmatpush2.msra.mxu0 0.0
  %1997 = vmatprep.subr.mxu0 0.0
  %1998 = vmatpush2.msra.mxu0 0.0
  %1999 = vmatprep.subr.mxu0 0.0
  %2000 = vmatpush2.msra.mxu0 0.0
  %2001 = vmatprep.subr.mxu0 0.0
  %2002 = vmatpush2.msra.mxu0 0.0
  %2003 = vmatprep.subr.mxu0 0.0
  %2004 = vmatpush2.msra.mxu0 0.0
  %2005 = vmatprep.subr.mxu0 0.0
  %2006 = vmatpush2.msra.mxu0 0.0
  %2007 = vmatprep.subr.mxu0 0.0
  %2008 = vmatpush2.msra.mxu0 0.0
  %2009 = vmatprep.subr.mxu0 0.0
  %2010 = vmatpush2.msra.mxu0 0.0
  %2011 = vmatprep.subr.mxu0 0.0
  %2012 = vmatpush2.msra.mxu0 0.0
  %2013 = vmatprep.subr.mxu0 0.0
  %2014 = vmatpush2.msra.mxu0 0.0
  %2015 = vmatprep.subr.mxu0 0.0
  %2016 = vmatpush2.msra.mxu0 0.0
  %2017 = vmatprep.subr.mxu0 0.0
  %2018 = vmatpush2.msra.mxu0 0.0
  %2019 = vmatprep.subr.mxu0 0.0
  %2020 = vmatpush2.msra.mxu0 0.0
  %2021 = vmatprep.subr.mxu0 0.0
  %2022 = vmatpush2.msra.mxu0 0.0
  %2023 = vmatprep.subr.mxu0 0.0
  %2024 = vmatpush2.msra.mxu0 0.0
  %2025 = vmatprep.subr.mxu0 0.0
  %2026 = vmatpush2.msra.mxu0 0.0
  %2027 = vmatprep.mubr.f32.mxu0 0.0
  %2028 = vmatmul.mubr.f32.gmra.mxu0 %v1890
  %v2029 = vpop.f32.mrf.mxu0
  %v2030 = vadd.f32 0.0, %v2029
  %v2031 = vpop.f32.mrf.mxu0
  %v2032 = vadd.f32 0.0, %v2031
  %2033 = vdwg.mxu0
  %v2034 = vadd.f32 %v1828, %v1959
  %v2035 = vadd.f32 %v1829, %v1961
  %v2036 = vadd.f32 %v1830, %v2030
  %v2037 = vadd.f32 %v1831, %v2032
  %2038 = vset.pattern.permute.xlu0 16
  %2039 = vperm.xlu0 %2038, %v1064
  %v2040 = vpop.permute.xlu0 %2039
  %v2042 = vadd.f32 %v2034, %v2040
  %v2043 = vadd.f32 %v2035, %v2040
  %v2044 = vadd.f32 %v2036, %v2040
  %v2045 = vadd.f32 %v2037, %v2040
  %v2046 = vmax.f32 %v2042, 0.0
  %v2047 = vmax.f32 %v2043, 0.0
  %v2048 = vmax.f32 %v2044, 0.0
  %v2049 = vmax.f32 %v2045, 0.0
  %v2054 = vrot.slane %v2046, 4
  %v2055 = vrot.slane %v2047, 4
  %v2056 = vrot.slane %v2048, 4
  %v2057 = vrot.slane %v2049, 4
  %2062 = vst [vmem:[%s3 + $0x20] sm:$0xf0] %v2054
  %2063 = vst [vmem:[%s3 + $0x28] sm:$0xf0] %v2055
  %2064 = vst [vmem:[%s3 + $0x30] sm:$0xf0] %v2056
  %2065 = vst [vmem:[%s3 + $0x38] sm:$0xf0] %v2057
  %v2066 = vrot.slane %v2046, 6
  %v2067 = vrot.slane %v2047, 6
  %v2068 = vrot.slane %v2048, 6
  %v2069 = vrot.slane %v2049, 6
  %2074 = vst [vmem:[#allocation2] sm:$0x3c] %v2066
  %2075 = vst [vmem:[#allocation2 + $0x8] sm:$0x3c] %v2067
  %2076 = vst [vmem:[#allocation2 + $0x10] sm:$0x3c] %v2068
  %2077 = vst [vmem:[#allocation2 + $0x18] sm:$0x3c] %v2069
  %v2078 = vld [vmem:[%s1 + $0x34] sm:$0xff]
  %v2079 = vld [vmem:[%s1 + $0x3c] sm:$0xff]
  %v2080 = vld [vmem:[#allocation2] sm:$0x3f]
  %v2081 = vld [vmem:[#allocation2 + $0x8] sm:$0x3f]
  %v2082 = vld [vmem:[#allocation2 + $0x10] sm:$0x3f]
  %v2083 = vld [vmem:[#allocation2 + $0x18] sm:$0x3f]
  %2085 = vset.pattern.permute.xlu0 6
  %2086 = vperm.xlu0 %2085, %v2078
  %v2087 = vpop.permute.xlu0 %2086
  %2090 = vset.pattern.permute.xlu0 6
  %2091 = vperm.xlu0 %2090, %v2079
  %v2092 = vpop.permute.xlu0 %2091
  %vm2094 = vcmask 48128
  %v2095 = vsel %vm2094, %v2078, 0
  %v2097 = vsel %vm2094, %v2079, 0
  %vm2099 = vcmask 1045504
  %v2101 = vsel %vm2099, %v2080, 0
  %v2104 = vsel %vm2099, %v2081, 0
  %v2107 = vsel %vm2099, %v2082, 0
  %v2110 = vsel %vm2099, %v2083, 0
  %2112 = vmatprep.subr.mxu0 0.0
  %2113 = vmatpush1.msra.mxu0 0.0
  %2114 = vmatprep.subr.mxu0 0.0
  %2115 = vmatpush1.msra.mxu0 0.0
  %2116 = vmatprep.subr.mxu0 0.0
  %2117 = vmatpush1.msra.mxu0 0.0
  %2118 = vmatprep.subr.mxu0 0.0
  %2119 = vmatpush1.msra.mxu0 0.0
  %2120 = vmatprep.subr.mxu0 0.0
  %2121 = vmatpush1.msra.mxu0 0.0
  %2122 = vmatprep.subr.mxu0 0.0
  %2123 = vmatpush1.msra.mxu0 0.0
  %2124 = vmatprep.subr.mxu0 0.0
  %2125 = vmatpush1.msra.mxu0 0.0
  %2126 = vmatprep.subr.mxu0 0.0
  %2127 = vmatpush1.msra.mxu0 0.0
  %2128 = vmatprep.subr.mxu0 0.0
  %2129 = vmatpush1.msra.mxu0 0.0
  %2130 = vmatprep.subr.mxu0 0.0
  %2131 = vmatpush1.msra.mxu0 0.0
  %2132 = vmatprep.subr.mxu0 0.0
  %2133 = vmatpush1.msra.mxu0 0.0
  %2134 = vmatprep.subr.mxu0 0.0
  %2135 = vmatpush1.msra.mxu0 0.0
  %2136 = vmatprep.subr.mxu0 0.0
  %2137 = vmatpush1.msra.mxu0 0.0
  %2138 = vmatprep.subr.mxu0 0.0
  %2139 = vmatpush1.msra.mxu0 0.0
  %2140 = vmatprep.subr.mxu0 0.0
  %2141 = vmatpush1.msra.mxu0 0.0
  %2142 = vmatprep.subr.mxu0 %v2104
  %2143 = vmatpush1.msra.mxu0 %v2101
  %2144 = vmatprep.subr.mxu0 0.0
  %2145 = vmatpush2.msra.mxu0 0.0
  %2146 = vmatprep.subr.mxu0 0.0
  %2147 = vmatpush2.msra.mxu0 0.0
  %2148 = vmatprep.subr.mxu0 0.0
  %2149 = vmatpush2.msra.mxu0 0.0
  %2150 = vmatprep.subr.mxu0 0.0
  %2151 = vmatpush2.msra.mxu0 0.0
  %2152 = vmatprep.subr.mxu0 0.0
  %2153 = vmatpush2.msra.mxu0 0.0
  %2154 = vmatprep.subr.mxu0 0.0
  %2155 = vmatpush2.msra.mxu0 0.0
  %2156 = vmatprep.subr.mxu0 0.0
  %2157 = vmatpush2.msra.mxu0 0.0
  %2158 = vmatprep.subr.mxu0 0.0
  %2159 = vmatpush2.msra.mxu0 0.0
  %2160 = vmatprep.subr.mxu0 0.0
  %2161 = vmatpush2.msra.mxu0 0.0
  %2162 = vmatprep.subr.mxu0 0.0
  %2163 = vmatpush2.msra.mxu0 0.0
  %2164 = vmatprep.subr.mxu0 0.0
  %2165 = vmatpush2.msra.mxu0 0.0
  %2166 = vmatprep.subr.mxu0 0.0
  %2167 = vmatpush2.msra.mxu0 0.0
  %2168 = vmatprep.subr.mxu0 0.0
  %2169 = vmatpush2.msra.mxu0 0.0
  %2170 = vmatprep.subr.mxu0 0.0
  %2171 = vmatpush2.msra.mxu0 0.0
  %2172 = vmatprep.subr.mxu0 0.0
  %2173 = vmatpush2.msra.mxu0 0.0
  %2174 = vmatprep.subr.mxu0 0.0
  %2175 = vmatpush2.msra.mxu0 0.0
  %2176 = vmatprep.mubr.f32.mxu0 0.0
  %2177 = vmatmul.mubr.f32.gmra.mxu0 %v2095
  %v2178 = vpop.f32.mrf.mxu0
  %v2179 = vadd.f32 %v2087, %v2178
  %v2180 = vpop.f32.mrf.mxu0
  %v2181 = vadd.f32 %v2087, %v2180
  %2182 = vmatprep.mubr.f32.mxu0 0.0
  %2183 = vmatmul.mubr.f32.gmra.mxu0 %v2097
  %v2184 = vpop.f32.mrf.mxu0
  %v2185 = vadd.f32 %v2092, %v2184
  %v2186 = vpop.f32.mrf.mxu0
  %v2187 = vadd.f32 %v2092, %v2186
  %2188 = vdwg.mxu0
  %2189 = vmatprep.subr.mxu0 0.0
  %2190 = vmatpush1.msra.mxu0 0.0
  %2191 = vmatprep.subr.mxu0 0.0
  %2192 = vmatpush1.msra.mxu0 0.0
  %2193 = vmatprep.subr.mxu0 0.0
  %2194 = vmatpush1.msra.mxu0 0.0
  %2195 = vmatprep.subr.mxu0 0.0
  %2196 = vmatpush1.msra.mxu0 0.0
  %2197 = vmatprep.subr.mxu0 0.0
  %2198 = vmatpush1.msra.mxu0 0.0
  %2199 = vmatprep.subr.mxu0 0.0
  %2200 = vmatpush1.msra.mxu0 0.0
  %2201 = vmatprep.subr.mxu0 0.0
  %2202 = vmatpush1.msra.mxu0 0.0
  %2203 = vmatprep.subr.mxu0 0.0
  %2204 = vmatpush1.msra.mxu0 0.0
  %2205 = vmatprep.subr.mxu0 0.0
  %2206 = vmatpush1.msra.mxu0 0.0
  %2207 = vmatprep.subr.mxu0 0.0
  %2208 = vmatpush1.msra.mxu0 0.0
  %2209 = vmatprep.subr.mxu0 0.0
  %2210 = vmatpush1.msra.mxu0 0.0
  %2211 = vmatprep.subr.mxu0 0.0
  %2212 = vmatpush1.msra.mxu0 0.0
  %2213 = vmatprep.subr.mxu0 0.0
  %2214 = vmatpush1.msra.mxu0 0.0
  %2215 = vmatprep.subr.mxu0 0.0
  %2216 = vmatpush1.msra.mxu0 0.0
  %2217 = vmatprep.subr.mxu0 0.0
  %2218 = vmatpush1.msra.mxu0 0.0
  %2219 = vmatprep.subr.mxu0 %v2110
  %2220 = vmatpush1.msra.mxu0 %v2107
  %2221 = vmatprep.subr.mxu0 0.0
  %2222 = vmatpush2.msra.mxu0 0.0
  %2223 = vmatprep.subr.mxu0 0.0
  %2224 = vmatpush2.msra.mxu0 0.0
  %2225 = vmatprep.subr.mxu0 0.0
  %2226 = vmatpush2.msra.mxu0 0.0
  %2227 = vmatprep.subr.mxu0 0.0
  %2228 = vmatpush2.msra.mxu0 0.0
  %2229 = vmatprep.subr.mxu0 0.0
  %2230 = vmatpush2.msra.mxu0 0.0
  %2231 = vmatprep.subr.mxu0 0.0
  %2232 = vmatpush2.msra.mxu0 0.0
  %2233 = vmatprep.subr.mxu0 0.0
  %2234 = vmatpush2.msra.mxu0 0.0
  %2235 = vmatprep.subr.mxu0 0.0
  %2236 = vmatpush2.msra.mxu0 0.0
  %2237 = vmatprep.subr.mxu0 0.0
  %2238 = vmatpush2.msra.mxu0 0.0
  %2239 = vmatprep.subr.mxu0 0.0
  %2240 = vmatpush2.msra.mxu0 0.0
  %2241 = vmatprep.subr.mxu0 0.0
  %2242 = vmatpush2.msra.mxu0 0.0
  %2243 = vmatprep.subr.mxu0 0.0
  %2244 = vmatpush2.msra.mxu0 0.0
  %2245 = vmatprep.subr.mxu0 0.0
  %2246 = vmatpush2.msra.mxu0 0.0
  %2247 = vmatprep.subr.mxu0 0.0
  %2248 = vmatpush2.msra.mxu0 0.0
  %2249 = vmatprep.subr.mxu0 0.0
  %2250 = vmatpush2.msra.mxu0 0.0
  %2251 = vmatprep.subr.mxu0 0.0
  %2252 = vmatpush2.msra.mxu0 0.0
  %2253 = vmatprep.mubr.f32.mxu0 0.0
  %2254 = vmatmul.mubr.f32.gmra.mxu0 %v2095
  %v2255 = vpop.f32.mrf.mxu0
  %v2256 = vadd.f32 %v2087, %v2255
  %v2257 = vpop.f32.mrf.mxu0
  %v2258 = vadd.f32 %v2087, %v2257
  %2259 = vmatprep.mubr.f32.mxu0 0.0
  %2260 = vmatmul.mubr.f32.gmra.mxu0 %v2097
  %v2261 = vpop.f32.mrf.mxu0
  %v2262 = vadd.f32 %v2092, %v2261
  %v2263 = vpop.f32.mrf.mxu0
  %v2264 = vadd.f32 %v2092, %v2263
  %2265 = vdwg.mxu0
  %v2266 = vmax.f32 %v2179, 0.0
  %v2267 = vmax.f32 %v2181, 0.0
  %v2268 = vmax.f32 %v2256, 0.0
  %v2269 = vmax.f32 %v2258, 0.0
  %v2270 = vmax.f32 %v2185, 0.0
  %v2271 = vmax.f32 %v2187, 0.0
  %v2272 = vmax.f32 %v2262, 0.0
  %v2273 = vmax.f32 %v2264, 0.0
  %2274 = vrot.lane.b32.xlu0 %v2266, 17
  %v2275 = vpop.permute.xlu0 %2274
  %2276 = vrot.lane.b32.xlu0 %v2270, 17
  %v2277 = vpop.permute.xlu0 %2276
  %2278 = vrot.lane.b32.xlu0 %v2267, 17
  %v2279 = vpop.permute.xlu0 %2278
  %2280 = vrot.lane.b32.xlu0 %v2271, 17
  %v2281 = vpop.permute.xlu0 %2280
  %2282 = vrot.lane.b32.xlu0 %v2268, 17
  %v2283 = vpop.permute.xlu0 %2282
  %2284 = vrot.lane.b32.xlu0 %v2272, 17
  %v2285 = vpop.permute.xlu0 %2284
  %2286 = vrot.lane.b32.xlu0 %v2269, 17
  %v2287 = vpop.permute.xlu0 %2286
  %2288 = vrot.lane.b32.xlu0 %v2273, 17
  %v2289 = vpop.permute.xlu0 %2288
  %v2290 = vsel %vm264, %v2283, %v2287
  %v2291 = vsel %vm264, %v2285, %v2289
  %v2292 = vsel %vm264, %v2279, %v2283
  %v2293 = vsel %vm264, %v2281, %v2285
  %v2294 = vsel %vm264, %v2275, %v2279
  %v2295 = vsel %vm264, %v2277, %v2281
  %v2296 = vsel %vm264, %v2287, %v2275
  %v2297 = vsel %vm264, %v2289, %v2277
  %v2298 = vld [vmem:[%s2] ss:$8 sm:$0xf]
  %v2300 = vlaneseq
  %v2301 = vshrl.u32 %v2300, 7
  %v2302 = vsub.s32 0, %v2301
  %v2303 = vrot.slane %v2298, %v2302
  %v2304 = vlaneseq
  %v2305 = vshrl.u32 %v2304, 7
  %v2306 = vsub.s32 1, %v2305
  %v2307 = vrot.slane %v2298, %v2306
  %v2308 = vlaneseq
  %v2309 = vshrl.u32 %v2308, 7
  %v2310 = vsub.s32 2, %v2309
  %v2311 = vrot.slane %v2298, %v2310
  %v2312 = vlaneseq
  %v2313 = vshrl.u32 %v2312, 7
  %v2314 = vsub.s32 3, %v2313
  %v2315 = vrot.slane %v2298, %v2314
  %v2320 = vmul.f32 %v2296, %v2303
  %v2321 = vmul.f32 %v2294, %v2307
  %v2322 = vmul.f32 %v2292, %v2311
  %v2323 = vmul.f32 %v2290, %v2315
  %v2324 = vmul.f32 %v2297, %v2303
  %v2325 = vmul.f32 %v2295, %v2307
  %v2326 = vmul.f32 %v2293, %v2311
  %v2327 = vmul.f32 %v2291, %v2315
  %v2328 = vld [vmem:[%s1 + $0x44] sm:$0xf]
  %2329 = vrot.lane.b32.xlu0 %v2266, 16
  %v2330 = vpop.permute.xlu0 %2329
  %2331 = vrot.lane.b32.xlu0 %v2270, 16
  %v2332 = vpop.permute.xlu0 %2331
  %2333 = vrot.lane.b32.xlu0 %v2267, 16
  %v2334 = vpop.permute.xlu0 %2333
  %2335 = vrot.lane.b32.xlu0 %v2271, 16
  %v2336 = vpop.permute.xlu0 %2335
  %2337 = vrot.lane.b32.xlu0 %v2268, 16
  %v2338 = vpop.permute.xlu0 %2337
  %2339 = vrot.lane.b32.xlu0 %v2272, 16
  %v2340 = vpop.permute.xlu0 %2339
  %2341 = vrot.lane.b32.xlu0 %v2269, 16
  %v2342 = vpop.permute.xlu0 %2341
  %2343 = vrot.lane.b32.xlu0 %v2273, 16
  %v2344 = vpop.permute.xlu0 %2343
  %v2345 = vsel %vm320, %v2338, %v2342
  %v2346 = vsel %vm320, %v2340, %v2344
  %v2347 = vsel %vm320, %v2334, %v2338
  %v2348 = vsel %vm320, %v2336, %v2340
  %v2349 = vsel %vm320, %v2330, %v2334
  %v2350 = vsel %vm320, %v2332, %v2336
  %v2351 = vsel %vm320, %v2342, %v2330
  %v2352 = vsel %vm320, %v2344, %v2332
  %v2353 = vld [vmem:[%s329] ss:$8 sm:$0xf]
  %v2355 = vlaneseq
  %v2356 = vshrl.u32 %v2355, 7
  %v2357 = vsub.s32 0, %v2356
  %v2358 = vrot.slane %v2353, %v2357
  %v2359 = vlaneseq
  %v2360 = vshrl.u32 %v2359, 7
  %v2361 = vsub.s32 1, %v2360
  %v2362 = vrot.slane %v2353, %v2361
  %v2363 = vlaneseq
  %v2364 = vshrl.u32 %v2363, 7
  %v2365 = vsub.s32 2, %v2364
  %v2366 = vrot.slane %v2353, %v2365
  %v2367 = vlaneseq
  %v2368 = vshrl.u32 %v2367, 7
  %v2369 = vsub.s32 3, %v2368
  %v2370 = vrot.slane %v2353, %v2369
  %v2375 = vmul.f32 %v2351, %v2358
  %v2376 = vmul.f32 %v2349, %v2362
  %v2377 = vmul.f32 %v2347, %v2366
  %v2378 = vmul.f32 %v2345, %v2370
  %v2379 = vmul.f32 %v2352, %v2358
  %v2380 = vmul.f32 %v2350, %v2362
  %v2381 = vmul.f32 %v2348, %v2366
  %v2382 = vmul.f32 %v2346, %v2370
  %v2383 = vld [vmem:[%s1 + $0x48] sm:$0xf]
  %v2385 = vsel %vm361, %v2383, 0
  %2387 = vmatprep.subr.mxu0 0.0
  %2388 = vmatpush1.msra.mxu0 0.0
  %2389 = vmatprep.subr.mxu0 0.0
  %2390 = vmatpush1.msra.mxu0 0.0
  %2391 = vmatprep.subr.mxu0 0.0
  %2392 = vmatpush1.msra.mxu0 0.0
  %2393 = vmatprep.subr.mxu0 0.0
  %2394 = vmatpush1.msra.mxu0 0.0
  %2395 = vmatprep.subr.mxu0 0.0
  %2396 = vmatpush1.msra.mxu0 0.0
  %2397 = vmatprep.subr.mxu0 0.0
  %2398 = vmatpush1.msra.mxu0 0.0
  %2399 = vmatprep.subr.mxu0 0.0
  %2400 = vmatpush1.msra.mxu0 0.0
  %2401 = vmatprep.subr.mxu0 0.0
  %2402 = vmatpush1.msra.mxu0 0.0
  %2403 = vmatprep.subr.mxu0 0.0
  %2404 = vmatpush1.msra.mxu0 0.0
  %2405 = vmatprep.subr.mxu0 0.0
  %2406 = vmatpush1.msra.mxu0 0.0
  %2407 = vmatprep.subr.mxu0 0.0
  %2408 = vmatpush1.msra.mxu0 0.0
  %2409 = vmatprep.subr.mxu0 0.0
  %2410 = vmatpush1.msra.mxu0 0.0
  %2411 = vmatprep.subr.mxu0 0.0
  %2412 = vmatpush1.msra.mxu0 0.0
  %2413 = vmatprep.subr.mxu0 0.0
  %2414 = vmatpush1.msra.mxu0 0.0
  %2415 = vmatprep.subr.mxu0 %v2380
  %2416 = vmatpush1.msra.mxu0 %v2379
  %2417 = vmatprep.subr.mxu0 %v2376
  %2418 = vmatpush1.msra.mxu0 %v2375
  %2419 = vmatprep.subr.mxu0 0.0
  %2420 = vmatpush2.msra.mxu0 0.0
  %2421 = vmatprep.subr.mxu0 0.0
  %2422 = vmatpush2.msra.mxu0 0.0
  %2423 = vmatprep.subr.mxu0 0.0
  %2424 = vmatpush2.msra.mxu0 0.0
  %2425 = vmatprep.subr.mxu0 0.0
  %2426 = vmatpush2.msra.mxu0 0.0
  %2427 = vmatprep.subr.mxu0 0.0
  %2428 = vmatpush2.msra.mxu0 0.0
  %2429 = vmatprep.subr.mxu0 0.0
  %2430 = vmatpush2.msra.mxu0 0.0
  %2431 = vmatprep.subr.mxu0 0.0
  %2432 = vmatpush2.msra.mxu0 0.0
  %2433 = vmatprep.subr.mxu0 0.0
  %2434 = vmatpush2.msra.mxu0 0.0
  %2435 = vmatprep.subr.mxu0 0.0
  %2436 = vmatpush2.msra.mxu0 0.0
  %2437 = vmatprep.subr.mxu0 0.0
  %2438 = vmatpush2.msra.mxu0 0.0
  %2439 = vmatprep.subr.mxu0 0.0
  %2440 = vmatpush2.msra.mxu0 0.0
  %2441 = vmatprep.subr.mxu0 0.0
  %2442 = vmatpush2.msra.mxu0 0.0
  %2443 = vmatprep.subr.mxu0 0.0
  %2444 = vmatpush2.msra.mxu0 0.0
  %2445 = vmatprep.subr.mxu0 0.0
  %2446 = vmatpush2.msra.mxu0 0.0
  %2447 = vmatprep.subr.mxu0 0.0
  %2448 = vmatpush2.msra.mxu0 0.0
  %2449 = vmatprep.subr.mxu0 0.0
  %2450 = vmatpush2.msra.mxu0 0.0
  %2451 = vmatprep.mubr.f32.mxu0 0.0
  %2452 = vmatmul.mubr.f32.gmra.mxu0 %v2385
  %v2453 = vpop.f32.mrf.mxu0
  %v2454 = vadd.f32 0.0, %v2453
  %v2455 = vpop.f32.mrf.mxu0
  %v2456 = vadd.f32 0.0, %v2455
  %2457 = vdwg.mxu0
  %2458 = vmatprep.subr.mxu0 0.0
  %2459 = vmatpush1.msra.mxu0 0.0
  %2460 = vmatprep.subr.mxu0 0.0
  %2461 = vmatpush1.msra.mxu0 0.0
  %2462 = vmatprep.subr.mxu0 0.0
  %2463 = vmatpush1.msra.mxu0 0.0
  %2464 = vmatprep.subr.mxu0 0.0
  %2465 = vmatpush1.msra.mxu0 0.0
  %2466 = vmatprep.subr.mxu0 0.0
  %2467 = vmatpush1.msra.mxu0 0.0
  %2468 = vmatprep.subr.mxu0 0.0
  %2469 = vmatpush1.msra.mxu0 0.0
  %2470 = vmatprep.subr.mxu0 0.0
  %2471 = vmatpush1.msra.mxu0 0.0
  %2472 = vmatprep.subr.mxu0 0.0
  %2473 = vmatpush1.msra.mxu0 0.0
  %2474 = vmatprep.subr.mxu0 0.0
  %2475 = vmatpush1.msra.mxu0 0.0
  %2476 = vmatprep.subr.mxu0 0.0
  %2477 = vmatpush1.msra.mxu0 0.0
  %2478 = vmatprep.subr.mxu0 0.0
  %2479 = vmatpush1.msra.mxu0 0.0
  %2480 = vmatprep.subr.mxu0 0.0
  %2481 = vmatpush1.msra.mxu0 0.0
  %2482 = vmatprep.subr.mxu0 0.0
  %2483 = vmatpush1.msra.mxu0 0.0
  %2484 = vmatprep.subr.mxu0 0.0
  %2485 = vmatpush1.msra.mxu0 0.0
  %2486 = vmatprep.subr.mxu0 %v2382
  %2487 = vmatpush1.msra.mxu0 %v2381
  %2488 = vmatprep.subr.mxu0 %v2378
  %2489 = vmatpush1.msra.mxu0 %v2377
  %2490 = vmatprep.subr.mxu0 0.0
  %2491 = vmatpush2.msra.mxu0 0.0
  %2492 = vmatprep.subr.mxu0 0.0
  %2493 = vmatpush2.msra.mxu0 0.0
  %2494 = vmatprep.subr.mxu0 0.0
  %2495 = vmatpush2.msra.mxu0 0.0
  %2496 = vmatprep.subr.mxu0 0.0
  %2497 = vmatpush2.msra.mxu0 0.0
  %2498 = vmatprep.subr.mxu0 0.0
  %2499 = vmatpush2.msra.mxu0 0.0
  %2500 = vmatprep.subr.mxu0 0.0
  %2501 = vmatpush2.msra.mxu0 0.0
  %2502 = vmatprep.subr.mxu0 0.0
  %2503 = vmatpush2.msra.mxu0 0.0
  %2504 = vmatprep.subr.mxu0 0.0
  %2505 = vmatpush2.msra.mxu0 0.0
  %2506 = vmatprep.subr.mxu0 0.0
  %2507 = vmatpush2.msra.mxu0 0.0
  %2508 = vmatprep.subr.mxu0 0.0
  %2509 = vmatpush2.msra.mxu0 0.0
  %2510 = vmatprep.subr.mxu0 0.0
  %2511 = vmatpush2.msra.mxu0 0.0
  %2512 = vmatprep.subr.mxu0 0.0
  %2513 = vmatpush2.msra.mxu0 0.0
  %2514 = vmatprep.subr.mxu0 0.0
  %2515 = vmatpush2.msra.mxu0 0.0
  %2516 = vmatprep.subr.mxu0 0.0
  %2517 = vmatpush2.msra.mxu0 0.0
  %2518 = vmatprep.subr.mxu0 0.0
  %2519 = vmatpush2.msra.mxu0 0.0
  %2520 = vmatprep.subr.mxu0 0.0
  %2521 = vmatpush2.msra.mxu0 0.0
  %2522 = vmatprep.mubr.f32.mxu0 0.0
  %2523 = vmatmul.mubr.f32.gmra.mxu0 %v2385
  %v2524 = vpop.f32.mrf.mxu0
  %v2525 = vadd.f32 0.0, %v2524
  %v2526 = vpop.f32.mrf.mxu0
  %v2527 = vadd.f32 0.0, %v2526
  %2528 = vdwg.mxu0
  %v2530 = vsel %vm361, %v2328, 0
  %2532 = vmatprep.subr.mxu0 0.0
  %2533 = vmatpush1.msra.mxu0 0.0
  %2534 = vmatprep.subr.mxu0 0.0
  %2535 = vmatpush1.msra.mxu0 0.0
  %2536 = vmatprep.subr.mxu0 0.0
  %2537 = vmatpush1.msra.mxu0 0.0
  %2538 = vmatprep.subr.mxu0 0.0
  %2539 = vmatpush1.msra.mxu0 0.0
  %2540 = vmatprep.subr.mxu0 0.0
  %2541 = vmatpush1.msra.mxu0 0.0
  %2542 = vmatprep.subr.mxu0 0.0
  %2543 = vmatpush1.msra.mxu0 0.0
  %2544 = vmatprep.subr.mxu0 0.0
  %2545 = vmatpush1.msra.mxu0 0.0
  %2546 = vmatprep.subr.mxu0 0.0
  %2547 = vmatpush1.msra.mxu0 0.0
  %2548 = vmatprep.subr.mxu0 0.0
  %2549 = vmatpush1.msra.mxu0 0.0
  %2550 = vmatprep.subr.mxu0 0.0
  %2551 = vmatpush1.msra.mxu0 0.0
  %2552 = vmatprep.subr.mxu0 0.0
  %2553 = vmatpush1.msra.mxu0 0.0
  %2554 = vmatprep.subr.mxu0 0.0
  %2555 = vmatpush1.msra.mxu0 0.0
  %2556 = vmatprep.subr.mxu0 0.0
  %2557 = vmatpush1.msra.mxu0 0.0
  %2558 = vmatprep.subr.mxu0 0.0
  %2559 = vmatpush1.msra.mxu0 0.0
  %2560 = vmatprep.subr.mxu0 %v2325
  %2561 = vmatpush1.msra.mxu0 %v2324
  %2562 = vmatprep.subr.mxu0 %v2321
  %2563 = vmatpush1.msra.mxu0 %v2320
  %2564 = vmatprep.subr.mxu0 0.0
  %2565 = vmatpush2.msra.mxu0 0.0
  %2566 = vmatprep.subr.mxu0 0.0
  %2567 = vmatpush2.msra.mxu0 0.0
  %2568 = vmatprep.subr.mxu0 0.0
  %2569 = vmatpush2.msra.mxu0 0.0
  %2570 = vmatprep.subr.mxu0 0.0
  %2571 = vmatpush2.msra.mxu0 0.0
  %2572 = vmatprep.subr.mxu0 0.0
  %2573 = vmatpush2.msra.mxu0 0.0
  %2574 = vmatprep.subr.mxu0 0.0
  %2575 = vmatpush2.msra.mxu0 0.0
  %2576 = vmatprep.subr.mxu0 0.0
  %2577 = vmatpush2.msra.mxu0 0.0
  %2578 = vmatprep.subr.mxu0 0.0
  %2579 = vmatpush2.msra.mxu0 0.0
  %2580 = vmatprep.subr.mxu0 0.0
  %2581 = vmatpush2.msra.mxu0 0.0
  %2582 = vmatprep.subr.mxu0 0.0
  %2583 = vmatpush2.msra.mxu0 0.0
  %2584 = vmatprep.subr.mxu0 0.0
  %2585 = vmatpush2.msra.mxu0 0.0
  %2586 = vmatprep.subr.mxu0 0.0
  %2587 = vmatpush2.msra.mxu0 0.0
  %2588 = vmatprep.subr.mxu0 0.0
  %2589 = vmatpush2.msra.mxu0 0.0
  %2590 = vmatprep.subr.mxu0 0.0
  %2591 = vmatpush2.msra.mxu0 0.0
  %2592 = vmatprep.subr.mxu0 0.0
  %2593 = vmatpush2.msra.mxu0 0.0
  %2594 = vmatprep.subr.mxu0 0.0
  %2595 = vmatpush2.msra.mxu0 0.0
  %2596 = vmatprep.mubr.f32.mxu0 0.0
  %2597 = vmatmul.mubr.f32.gmra.mxu0 %v2530
  %v2598 = vpop.f32.mrf.mxu0
  %v2599 = vadd.f32 %v2454, %v2598
  %v2600 = vpop.f32.mrf.mxu0
  %v2601 = vadd.f32 %v2456, %v2600
  %2602 = vdwg.mxu0
  %2603 = vmatprep.subr.mxu0 0.0
  %2604 = vmatpush1.msra.mxu0 0.0
  %2605 = vmatprep.subr.mxu0 0.0
  %2606 = vmatpush1.msra.mxu0 0.0
  %2607 = vmatprep.subr.mxu0 0.0
  %2608 = vmatpush1.msra.mxu0 0.0
  %2609 = vmatprep.subr.mxu0 0.0
  %2610 = vmatpush1.msra.mxu0 0.0
  %2611 = vmatprep.subr.mxu0 0.0
  %2612 = vmatpush1.msra.mxu0 0.0
  %2613 = vmatprep.subr.mxu0 0.0
  %2614 = vmatpush1.msra.mxu0 0.0
  %2615 = vmatprep.subr.mxu0 0.0
  %2616 = vmatpush1.msra.mxu0 0.0
  %2617 = vmatprep.subr.mxu0 0.0
  %2618 = vmatpush1.msra.mxu0 0.0
  %2619 = vmatprep.subr.mxu0 0.0
  %2620 = vmatpush1.msra.mxu0 0.0
  %2621 = vmatprep.subr.mxu0 0.0
  %2622 = vmatpush1.msra.mxu0 0.0
  %2623 = vmatprep.subr.mxu0 0.0
  %2624 = vmatpush1.msra.mxu0 0.0
  %2625 = vmatprep.subr.mxu0 0.0
  %2626 = vmatpush1.msra.mxu0 0.0
  %2627 = vmatprep.subr.mxu0 0.0
  %2628 = vmatpush1.msra.mxu0 0.0
  %2629 = vmatprep.subr.mxu0 0.0
  %2630 = vmatpush1.msra.mxu0 0.0
  %2631 = vmatprep.subr.mxu0 %v2327
  %2632 = vmatpush1.msra.mxu0 %v2326
  %2633 = vmatprep.subr.mxu0 %v2323
  %2634 = vmatpush1.msra.mxu0 %v2322
  %2635 = vmatprep.subr.mxu0 0.0
  %2636 = vmatpush2.msra.mxu0 0.0
  %2637 = vmatprep.subr.mxu0 0.0
  %2638 = vmatpush2.msra.mxu0 0.0
  %2639 = vmatprep.subr.mxu0 0.0
  %2640 = vmatpush2.msra.mxu0 0.0
  %2641 = vmatprep.subr.mxu0 0.0
  %2642 = vmatpush2.msra.mxu0 0.0
  %2643 = vmatprep.subr.mxu0 0.0
  %2644 = vmatpush2.msra.mxu0 0.0
  %2645 = vmatprep.subr.mxu0 0.0
  %2646 = vmatpush2.msra.mxu0 0.0
  %2647 = vmatprep.subr.mxu0 0.0
  %2648 = vmatpush2.msra.mxu0 0.0
  %2649 = vmatprep.subr.mxu0 0.0
  %2650 = vmatpush2.msra.mxu0 0.0
  %2651 = vmatprep.subr.mxu0 0.0
  %2652 = vmatpush2.msra.mxu0 0.0
  %2653 = vmatprep.subr.mxu0 0.0
  %2654 = vmatpush2.msra.mxu0 0.0
  %2655 = vmatprep.subr.mxu0 0.0
  %2656 = vmatpush2.msra.mxu0 0.0
  %2657 = vmatprep.subr.mxu0 0.0
  %2658 = vmatpush2.msra.mxu0 0.0
  %2659 = vmatprep.subr.mxu0 0.0
  %2660 = vmatpush2.msra.mxu0 0.0
  %2661 = vmatprep.subr.mxu0 0.0
  %2662 = vmatpush2.msra.mxu0 0.0
  %2663 = vmatprep.subr.mxu0 0.0
  %2664 = vmatpush2.msra.mxu0 0.0
  %2665 = vmatprep.subr.mxu0 0.0
  %2666 = vmatpush2.msra.mxu0 0.0
  %2667 = vmatprep.mubr.f32.mxu0 0.0
  %2668 = vmatmul.mubr.f32.gmra.mxu0 %v2530
  %v2669 = vpop.f32.mrf.mxu0
  %v2670 = vadd.f32 %v2525, %v2669
  %v2671 = vpop.f32.mrf.mxu0
  %v2672 = vadd.f32 %v2527, %v2671
  %2673 = vdwg.mxu0
  %2674 = vrot.lane.b32.xlu0 %v2266, 15
  %v2675 = vpop.permute.xlu0 %2674
  %2676 = vrot.lane.b32.xlu0 %v2270, 15
  %v2677 = vpop.permute.xlu0 %2676
  %2678 = vrot.lane.b32.xlu0 %v2267, 15
  %v2679 = vpop.permute.xlu0 %2678
  %2680 = vrot.lane.b32.xlu0 %v2271, 15
  %v2681 = vpop.permute.xlu0 %2680
  %2682 = vrot.lane.b32.xlu0 %v2268, 15
  %v2683 = vpop.permute.xlu0 %2682
  %2684 = vrot.lane.b32.xlu0 %v2272, 15
  %v2685 = vpop.permute.xlu0 %2684
  %2686 = vrot.lane.b32.xlu0 %v2269, 15
  %v2687 = vpop.permute.xlu0 %2686
  %2688 = vrot.lane.b32.xlu0 %v2273, 15
  %v2689 = vpop.permute.xlu0 %2688
  %v2690 = vsel %vm668, %v2683, %v2687
  %v2691 = vsel %vm668, %v2685, %v2689
  %v2692 = vsel %vm668, %v2679, %v2683
  %v2693 = vsel %vm668, %v2681, %v2685
  %v2694 = vsel %vm668, %v2675, %v2679
  %v2695 = vsel %vm668, %v2677, %v2681
  %v2696 = vsel %vm668, %v2687, %v2675
  %v2697 = vsel %vm668, %v2689, %v2677
  %v2698 = vld [vmem:[%s677] ss:$8 sm:$0xf]
  %v2700 = vlaneseq
  %v2701 = vshrl.u32 %v2700, 7
  %v2702 = vsub.s32 0, %v2701
  %v2703 = vrot.slane %v2698, %v2702
  %v2704 = vlaneseq
  %v2705 = vshrl.u32 %v2704, 7
  %v2706 = vsub.s32 1, %v2705
  %v2707 = vrot.slane %v2698, %v2706
  %v2708 = vlaneseq
  %v2709 = vshrl.u32 %v2708, 7
  %v2710 = vsub.s32 2, %v2709
  %v2711 = vrot.slane %v2698, %v2710
  %v2712 = vlaneseq
  %v2713 = vshrl.u32 %v2712, 7
  %v2714 = vsub.s32 3, %v2713
  %v2715 = vrot.slane %v2698, %v2714
  %v2720 = vmul.f32 %v2696, %v2703
  %v2721 = vmul.f32 %v2694, %v2707
  %v2722 = vmul.f32 %v2692, %v2711
  %v2723 = vmul.f32 %v2690, %v2715
  %v2724 = vmul.f32 %v2697, %v2703
  %v2725 = vmul.f32 %v2695, %v2707
  %v2726 = vmul.f32 %v2693, %v2711
  %v2727 = vmul.f32 %v2691, %v2715
  %v2728 = vld [vmem:[%s1 + $0x4c] sm:$0xf]
  %v2730 = vsel %vm361, %v2728, 0
  %2732 = vmatprep.subr.mxu0 0.0
  %2733 = vmatpush1.msra.mxu0 0.0
  %2734 = vmatprep.subr.mxu0 0.0
  %2735 = vmatpush1.msra.mxu0 0.0
  %2736 = vmatprep.subr.mxu0 0.0
  %2737 = vmatpush1.msra.mxu0 0.0
  %2738 = vmatprep.subr.mxu0 0.0
  %2739 = vmatpush1.msra.mxu0 0.0
  %2740 = vmatprep.subr.mxu0 0.0
  %2741 = vmatpush1.msra.mxu0 0.0
  %2742 = vmatprep.subr.mxu0 0.0
  %2743 = vmatpush1.msra.mxu0 0.0
  %2744 = vmatprep.subr.mxu0 0.0
  %2745 = vmatpush1.msra.mxu0 0.0
  %2746 = vmatprep.subr.mxu0 0.0
  %2747 = vmatpush1.msra.mxu0 0.0
  %2748 = vmatprep.subr.mxu0 0.0
  %2749 = vmatpush1.msra.mxu0 0.0
  %2750 = vmatprep.subr.mxu0 0.0
  %2751 = vmatpush1.msra.mxu0 0.0
  %2752 = vmatprep.subr.mxu0 0.0
  %2753 = vmatpush1.msra.mxu0 0.0
  %2754 = vmatprep.subr.mxu0 0.0
  %2755 = vmatpush1.msra.mxu0 0.0
  %2756 = vmatprep.subr.mxu0 0.0
  %2757 = vmatpush1.msra.mxu0 0.0
  %2758 = vmatprep.subr.mxu0 0.0
  %2759 = vmatpush1.msra.mxu0 0.0
  %2760 = vmatprep.subr.mxu0 %v2725
  %2761 = vmatpush1.msra.mxu0 %v2724
  %2762 = vmatprep.subr.mxu0 %v2721
  %2763 = vmatpush1.msra.mxu0 %v2720
  %2764 = vmatprep.subr.mxu0 0.0
  %2765 = vmatpush2.msra.mxu0 0.0
  %2766 = vmatprep.subr.mxu0 0.0
  %2767 = vmatpush2.msra.mxu0 0.0
  %2768 = vmatprep.subr.mxu0 0.0
  %2769 = vmatpush2.msra.mxu0 0.0
  %2770 = vmatprep.subr.mxu0 0.0
  %2771 = vmatpush2.msra.mxu0 0.0
  %2772 = vmatprep.subr.mxu0 0.0
  %2773 = vmatpush2.msra.mxu0 0.0
  %2774 = vmatprep.subr.mxu0 0.0
  %2775 = vmatpush2.msra.mxu0 0.0
  %2776 = vmatprep.subr.mxu0 0.0
  %2777 = vmatpush2.msra.mxu0 0.0
  %2778 = vmatprep.subr.mxu0 0.0
  %2779 = vmatpush2.msra.mxu0 0.0
  %2780 = vmatprep.subr.mxu0 0.0
  %2781 = vmatpush2.msra.mxu0 0.0
  %2782 = vmatprep.subr.mxu0 0.0
  %2783 = vmatpush2.msra.mxu0 0.0
  %2784 = vmatprep.subr.mxu0 0.0
  %2785 = vmatpush2.msra.mxu0 0.0
  %2786 = vmatprep.subr.mxu0 0.0
  %2787 = vmatpush2.msra.mxu0 0.0
  %2788 = vmatprep.subr.mxu0 0.0
  %2789 = vmatpush2.msra.mxu0 0.0
  %2790 = vmatprep.subr.mxu0 0.0
  %2791 = vmatpush2.msra.mxu0 0.0
  %2792 = vmatprep.subr.mxu0 0.0
  %2793 = vmatpush2.msra.mxu0 0.0
  %2794 = vmatprep.subr.mxu0 0.0
  %2795 = vmatpush2.msra.mxu0 0.0
  %2796 = vmatprep.mubr.f32.mxu0 0.0
  %2797 = vmatmul.mubr.f32.gmra.mxu0 %v2730
  %v2798 = vpop.f32.mrf.mxu0
  %v2799 = vadd.f32 0.0, %v2798
  %v2800 = vpop.f32.mrf.mxu0
  %v2801 = vadd.f32 0.0, %v2800
  %2802 = vdwg.mxu0
  %2803 = vmatprep.subr.mxu0 0.0
  %2804 = vmatpush1.msra.mxu0 0.0
  %2805 = vmatprep.subr.mxu0 0.0
  %2806 = vmatpush1.msra.mxu0 0.0
  %2807 = vmatprep.subr.mxu0 0.0
  %2808 = vmatpush1.msra.mxu0 0.0
  %2809 = vmatprep.subr.mxu0 0.0
  %2810 = vmatpush1.msra.mxu0 0.0
  %2811 = vmatprep.subr.mxu0 0.0
  %2812 = vmatpush1.msra.mxu0 0.0
  %2813 = vmatprep.subr.mxu0 0.0
  %2814 = vmatpush1.msra.mxu0 0.0
  %2815 = vmatprep.subr.mxu0 0.0
  %2816 = vmatpush1.msra.mxu0 0.0
  %2817 = vmatprep.subr.mxu0 0.0
  %2818 = vmatpush1.msra.mxu0 0.0
  %2819 = vmatprep.subr.mxu0 0.0
  %2820 = vmatpush1.msra.mxu0 0.0
  %2821 = vmatprep.subr.mxu0 0.0
  %2822 = vmatpush1.msra.mxu0 0.0
  %2823 = vmatprep.subr.mxu0 0.0
  %2824 = vmatpush1.msra.mxu0 0.0
  %2825 = vmatprep.subr.mxu0 0.0
  %2826 = vmatpush1.msra.mxu0 0.0
  %2827 = vmatprep.subr.mxu0 0.0
  %2828 = vmatpush1.msra.mxu0 0.0
  %2829 = vmatprep.subr.mxu0 0.0
  %2830 = vmatpush1.msra.mxu0 0.0
  %2831 = vmatprep.subr.mxu0 %v2727
  %2832 = vmatpush1.msra.mxu0 %v2726
  %2833 = vmatprep.subr.mxu0 %v2723
  %2834 = vmatpush1.msra.mxu0 %v2722
  %2835 = vmatprep.subr.mxu0 0.0
  %2836 = vmatpush2.msra.mxu0 0.0
  %2837 = vmatprep.subr.mxu0 0.0
  %2838 = vmatpush2.msra.mxu0 0.0
  %2839 = vmatprep.subr.mxu0 0.0
  %2840 = vmatpush2.msra.mxu0 0.0
  %2841 = vmatprep.subr.mxu0 0.0
  %2842 = vmatpush2.msra.mxu0 0.0
  %2843 = vmatprep.subr.mxu0 0.0
  %2844 = vmatpush2.msra.mxu0 0.0
  %2845 = vmatprep.subr.mxu0 0.0
  %2846 = vmatpush2.msra.mxu0 0.0
  %2847 = vmatprep.subr.mxu0 0.0
  %2848 = vmatpush2.msra.mxu0 0.0
  %2849 = vmatprep.subr.mxu0 0.0
  %2850 = vmatpush2.msra.mxu0 0.0
  %2851 = vmatprep.subr.mxu0 0.0
  %2852 = vmatpush2.msra.mxu0 0.0
  %2853 = vmatprep.subr.mxu0 0.0
  %2854 = vmatpush2.msra.mxu0 0.0
  %2855 = vmatprep.subr.mxu0 0.0
  %2856 = vmatpush2.msra.mxu0 0.0
  %2857 = vmatprep.subr.mxu0 0.0
  %2858 = vmatpush2.msra.mxu0 0.0
  %2859 = vmatprep.subr.mxu0 0.0
  %2860 = vmatpush2.msra.mxu0 0.0
  %2861 = vmatprep.subr.mxu0 0.0
  %2862 = vmatpush2.msra.mxu0 0.0
  %2863 = vmatprep.subr.mxu0 0.0
  %2864 = vmatpush2.msra.mxu0 0.0
  %2865 = vmatprep.subr.mxu0 0.0
  %2866 = vmatpush2.msra.mxu0 0.0
  %2867 = vmatprep.mubr.f32.mxu0 0.0
  %2868 = vmatmul.mubr.f32.gmra.mxu0 %v2730
  %v2869 = vpop.f32.mrf.mxu0
  %v2870 = vadd.f32 0.0, %v2869
  %v2871 = vpop.f32.mrf.mxu0
  %v2872 = vadd.f32 0.0, %v2871
  %2873 = vdwg.mxu0
  %v2874 = vadd.f32 %v2599, %v2799
  %v2875 = vadd.f32 %v2601, %v2801
  %v2876 = vadd.f32 %v2670, %v2870
  %v2877 = vadd.f32 %v2672, %v2872
  %2878 = vrot.lane.b32.xlu0 %v2266, 1
  %v2879 = vpop.permute.xlu0 %2878
  %2880 = vrot.lane.b32.xlu0 %v2270, 1
  %v2881 = vpop.permute.xlu0 %2880
  %2882 = vrot.lane.b32.xlu0 %v2267, 1
  %v2883 = vpop.permute.xlu0 %2882
  %2884 = vrot.lane.b32.xlu0 %v2271, 1
  %v2885 = vpop.permute.xlu0 %2884
  %2886 = vrot.lane.b32.xlu0 %v2268, 1
  %v2887 = vpop.permute.xlu0 %2886
  %2888 = vrot.lane.b32.xlu0 %v2272, 1
  %v2889 = vpop.permute.xlu0 %2888
  %2890 = vrot.lane.b32.xlu0 %v2269, 1
  %v2891 = vpop.permute.xlu0 %2890
  %2892 = vrot.lane.b32.xlu0 %v2273, 1
  %v2893 = vpop.permute.xlu0 %2892
  %v2894 = vsel %vm874, %v2887, %v2891
  %v2895 = vsel %vm874, %v2889, %v2893
  %v2896 = vsel %vm874, %v2883, %v2887
  %v2897 = vsel %vm874, %v2885, %v2889
  %v2898 = vsel %vm874, %v2879, %v2883
  %v2899 = vsel %vm874, %v2881, %v2885
  %v2900 = vsel %vm874, %v2891, %v2879
  %v2901 = vsel %vm874, %v2893, %v2881
  %v2902 = vld [vmem:[%s883] ss:$8 sm:$0xf]
  %v2904 = vlaneseq
  %v2905 = vshrl.u32 %v2904, 7
  %v2906 = vsub.s32 0, %v2905
  %v2907 = vrot.slane %v2902, %v2906
  %v2908 = vlaneseq
  %v2909 = vshrl.u32 %v2908, 7
  %v2910 = vsub.s32 1, %v2909
  %v2911 = vrot.slane %v2902, %v2910
  %v2912 = vlaneseq
  %v2913 = vshrl.u32 %v2912, 7
  %v2914 = vsub.s32 2, %v2913
  %v2915 = vrot.slane %v2902, %v2914
  %v2916 = vlaneseq
  %v2917 = vshrl.u32 %v2916, 7
  %v2918 = vsub.s32 3, %v2917
  %v2919 = vrot.slane %v2902, %v2918
  %v2924 = vmul.f32 %v2900, %v2907
  %v2925 = vmul.f32 %v2898, %v2911
  %v2926 = vmul.f32 %v2896, %v2915
  %v2927 = vmul.f32 %v2894, %v2919
  %v2928 = vmul.f32 %v2901, %v2907
  %v2929 = vmul.f32 %v2899, %v2911
  %v2930 = vmul.f32 %v2897, %v2915
  %v2931 = vmul.f32 %v2895, %v2919
  %v2932 = vld [vmem:[%s1 + $0x50] sm:$0xf]
  %v2934 = vsel %vm361, %v2932, 0
  %2936 = vmatprep.subr.mxu0 0.0
  %2937 = vmatpush1.msra.mxu0 0.0
  %2938 = vmatprep.subr.mxu0 0.0
  %2939 = vmatpush1.msra.mxu0 0.0
  %2940 = vmatprep.subr.mxu0 0.0
  %2941 = vmatpush1.msra.mxu0 0.0
  %2942 = vmatprep.subr.mxu0 0.0
  %2943 = vmatpush1.msra.mxu0 0.0
  %2944 = vmatprep.subr.mxu0 0.0
  %2945 = vmatpush1.msra.mxu0 0.0
  %2946 = vmatprep.subr.mxu0 0.0
  %2947 = vmatpush1.msra.mxu0 0.0
  %2948 = vmatprep.subr.mxu0 0.0
  %2949 = vmatpush1.msra.mxu0 0.0
  %2950 = vmatprep.subr.mxu0 0.0
  %2951 = vmatpush1.msra.mxu0 0.0
  %2952 = vmatprep.subr.mxu0 0.0
  %2953 = vmatpush1.msra.mxu0 0.0
  %2954 = vmatprep.subr.mxu0 0.0
  %2955 = vmatpush1.msra.mxu0 0.0
  %2956 = vmatprep.subr.mxu0 0.0
  %2957 = vmatpush1.msra.mxu0 0.0
  %2958 = vmatprep.subr.mxu0 0.0
  %2959 = vmatpush1.msra.mxu0 0.0
  %2960 = vmatprep.subr.mxu0 0.0
  %2961 = vmatpush1.msra.mxu0 0.0
  %2962 = vmatprep.subr.mxu0 0.0
  %2963 = vmatpush1.msra.mxu0 0.0
  %2964 = vmatprep.subr.mxu0 %v2929
  %2965 = vmatpush1.msra.mxu0 %v2928
  %2966 = vmatprep.subr.mxu0 %v2925
  %2967 = vmatpush1.msra.mxu0 %v2924
  %2968 = vmatprep.subr.mxu0 0.0
  %2969 = vmatpush2.msra.mxu0 0.0
  %2970 = vmatprep.subr.mxu0 0.0
  %2971 = vmatpush2.msra.mxu0 0.0
  %2972 = vmatprep.subr.mxu0 0.0
  %2973 = vmatpush2.msra.mxu0 0.0
  %2974 = vmatprep.subr.mxu0 0.0
  %2975 = vmatpush2.msra.mxu0 0.0
  %2976 = vmatprep.subr.mxu0 0.0
  %2977 = vmatpush2.msra.mxu0 0.0
  %2978 = vmatprep.subr.mxu0 0.0
  %2979 = vmatpush2.msra.mxu0 0.0
  %2980 = vmatprep.subr.mxu0 0.0
  %2981 = vmatpush2.msra.mxu0 0.0
  %2982 = vmatprep.subr.mxu0 0.0
  %2983 = vmatpush2.msra.mxu0 0.0
  %2984 = vmatprep.subr.mxu0 0.0
  %2985 = vmatpush2.msra.mxu0 0.0
  %2986 = vmatprep.subr.mxu0 0.0
  %2987 = vmatpush2.msra.mxu0 0.0
  %2988 = vmatprep.subr.mxu0 0.0
  %2989 = vmatpush2.msra.mxu0 0.0
  %2990 = vmatprep.subr.mxu0 0.0
  %2991 = vmatpush2.msra.mxu0 0.0
  %2992 = vmatprep.subr.mxu0 0.0
  %2993 = vmatpush2.msra.mxu0 0.0
  %2994 = vmatprep.subr.mxu0 0.0
  %2995 = vmatpush2.msra.mxu0 0.0
  %2996 = vmatprep.subr.mxu0 0.0
  %2997 = vmatpush2.msra.mxu0 0.0
  %2998 = vmatprep.subr.mxu0 0.0
  %2999 = vmatpush2.msra.mxu0 0.0
  %3000 = vmatprep.mubr.f32.mxu0 0.0
  %3001 = vmatmul.mubr.f32.gmra.mxu0 %v2934
  %v3002 = vpop.f32.mrf.mxu0
  %v3003 = vadd.f32 0.0, %v3002
  %v3004 = vpop.f32.mrf.mxu0
  %v3005 = vadd.f32 0.0, %v3004
  %3006 = vdwg.mxu0
  %3007 = vmatprep.subr.mxu0 0.0
  %3008 = vmatpush1.msra.mxu0 0.0
  %3009 = vmatprep.subr.mxu0 0.0
  %3010 = vmatpush1.msra.mxu0 0.0
  %3011 = vmatprep.subr.mxu0 0.0
  %3012 = vmatpush1.msra.mxu0 0.0
  %3013 = vmatprep.subr.mxu0 0.0
  %3014 = vmatpush1.msra.mxu0 0.0
  %3015 = vmatprep.subr.mxu0 0.0
  %3016 = vmatpush1.msra.mxu0 0.0
  %3017 = vmatprep.subr.mxu0 0.0
  %3018 = vmatpush1.msra.mxu0 0.0
  %3019 = vmatprep.subr.mxu0 0.0
  %3020 = vmatpush1.msra.mxu0 0.0
  %3021 = vmatprep.subr.mxu0 0.0
  %3022 = vmatpush1.msra.mxu0 0.0
  %3023 = vmatprep.subr.mxu0 0.0
  %3024 = vmatpush1.msra.mxu0 0.0
  %3025 = vmatprep.subr.mxu0 0.0
  %3026 = vmatpush1.msra.mxu0 0.0
  %3027 = vmatprep.subr.mxu0 0.0
  %3028 = vmatpush1.msra.mxu0 0.0
  %3029 = vmatprep.subr.mxu0 0.0
  %3030 = vmatpush1.msra.mxu0 0.0
  %3031 = vmatprep.subr.mxu0 0.0
  %3032 = vmatpush1.msra.mxu0 0.0
  %3033 = vmatprep.subr.mxu0 0.0
  %3034 = vmatpush1.msra.mxu0 0.0
  %3035 = vmatprep.subr.mxu0 %v2931
  %3036 = vmatpush1.msra.mxu0 %v2930
  %3037 = vmatprep.subr.mxu0 %v2927
  %3038 = vmatpush1.msra.mxu0 %v2926
  %3039 = vmatprep.subr.mxu0 0.0
  %3040 = vmatpush2.msra.mxu0 0.0
  %3041 = vmatprep.subr.mxu0 0.0
  %3042 = vmatpush2.msra.mxu0 0.0
  %3043 = vmatprep.subr.mxu0 0.0
  %3044 = vmatpush2.msra.mxu0 0.0
  %3045 = vmatprep.subr.mxu0 0.0
  %3046 = vmatpush2.msra.mxu0 0.0
  %3047 = vmatprep.subr.mxu0 0.0
  %3048 = vmatpush2.msra.mxu0 0.0
  %3049 = vmatprep.subr.mxu0 0.0
  %3050 = vmatpush2.msra.mxu0 0.0
  %3051 = vmatprep.subr.mxu0 0.0
  %3052 = vmatpush2.msra.mxu0 0.0
  %3053 = vmatprep.subr.mxu0 0.0
  %3054 = vmatpush2.msra.mxu0 0.0
  %3055 = vmatprep.subr.mxu0 0.0
  %3056 = vmatpush2.msra.mxu0 0.0
  %3057 = vmatprep.subr.mxu0 0.0
  %3058 = vmatpush2.msra.mxu0 0.0
  %3059 = vmatprep.subr.mxu0 0.0
  %3060 = vmatpush2.msra.mxu0 0.0
  %3061 = vmatprep.subr.mxu0 0.0
  %3062 = vmatpush2.msra.mxu0 0.0
  %3063 = vmatprep.subr.mxu0 0.0
  %3064 = vmatpush2.msra.mxu0 0.0
  %3065 = vmatprep.subr.mxu0 0.0
  %3066 = vmatpush2.msra.mxu0 0.0
  %3067 = vmatprep.subr.mxu0 0.0
  %3068 = vmatpush2.msra.mxu0 0.0
  %3069 = vmatprep.subr.mxu0 0.0
  %3070 = vmatpush2.msra.mxu0 0.0
  %3071 = vmatprep.mubr.f32.mxu0 0.0
  %3072 = vmatmul.mubr.f32.gmra.mxu0 %v2934
  %v3073 = vpop.f32.mrf.mxu0
  %v3074 = vadd.f32 0.0, %v3073
  %v3075 = vpop.f32.mrf.mxu0
  %v3076 = vadd.f32 0.0, %v3075
  %3077 = vdwg.mxu0
  %v3078 = vadd.f32 %v2874, %v3003
  %v3079 = vadd.f32 %v2875, %v3005
  %v3080 = vadd.f32 %v2876, %v3074
  %v3081 = vadd.f32 %v2877, %v3076
  %v3082 = vld [vmem:[%s1 + $0x54] sm:$0xf]
  %v3084 = vsel %vm361, %v3082, 0
  %3086 = vmatprep.subr.mxu0 0.0
  %3087 = vmatpush1.msra.mxu0 0.0
  %3088 = vmatprep.subr.mxu0 0.0
  %3089 = vmatpush1.msra.mxu0 0.0
  %3090 = vmatprep.subr.mxu0 0.0
  %3091 = vmatpush1.msra.mxu0 0.0
  %3092 = vmatprep.subr.mxu0 0.0
  %3093 = vmatpush1.msra.mxu0 0.0
  %3094 = vmatprep.subr.mxu0 0.0
  %3095 = vmatpush1.msra.mxu0 0.0
  %3096 = vmatprep.subr.mxu0 0.0
  %3097 = vmatpush1.msra.mxu0 0.0
  %3098 = vmatprep.subr.mxu0 0.0
  %3099 = vmatpush1.msra.mxu0 0.0
  %3100 = vmatprep.subr.mxu0 0.0
  %3101 = vmatpush1.msra.mxu0 0.0
  %3102 = vmatprep.subr.mxu0 0.0
  %3103 = vmatpush1.msra.mxu0 0.0
  %3104 = vmatprep.subr.mxu0 0.0
  %3105 = vmatpush1.msra.mxu0 0.0
  %3106 = vmatprep.subr.mxu0 0.0
  %3107 = vmatpush1.msra.mxu0 0.0
  %3108 = vmatprep.subr.mxu0 0.0
  %3109 = vmatpush1.msra.mxu0 0.0
  %3110 = vmatprep.subr.mxu0 0.0
  %3111 = vmatpush1.msra.mxu0 0.0
  %3112 = vmatprep.subr.mxu0 0.0
  %3113 = vmatpush1.msra.mxu0 0.0
  %3114 = vmatprep.subr.mxu0 %v2271
  %3115 = vmatpush1.msra.mxu0 %v2270
  %3116 = vmatprep.subr.mxu0 %v2267
  %3117 = vmatpush1.msra.mxu0 %v2266
  %3118 = vmatprep.subr.mxu0 0.0
  %3119 = vmatpush2.msra.mxu0 0.0
  %3120 = vmatprep.subr.mxu0 0.0
  %3121 = vmatpush2.msra.mxu0 0.0
  %3122 = vmatprep.subr.mxu0 0.0
  %3123 = vmatpush2.msra.mxu0 0.0
  %3124 = vmatprep.subr.mxu0 0.0
  %3125 = vmatpush2.msra.mxu0 0.0
  %3126 = vmatprep.subr.mxu0 0.0
  %3127 = vmatpush2.msra.mxu0 0.0
  %3128 = vmatprep.subr.mxu0 0.0
  %3129 = vmatpush2.msra.mxu0 0.0
  %3130 = vmatprep.subr.mxu0 0.0
  %3131 = vmatpush2.msra.mxu0 0.0
  %3132 = vmatprep.subr.mxu0 0.0
  %3133 = vmatpush2.msra.mxu0 0.0
  %3134 = vmatprep.subr.mxu0 0.0
  %3135 = vmatpush2.msra.mxu0 0.0
  %3136 = vmatprep.subr.mxu0 0.0
  %3137 = vmatpush2.msra.mxu0 0.0
  %3138 = vmatprep.subr.mxu0 0.0
  %3139 = vmatpush2.msra.mxu0 0.0
  %3140 = vmatprep.subr.mxu0 0.0
  %3141 = vmatpush2.msra.mxu0 0.0
  %3142 = vmatprep.subr.mxu0 0.0
  %3143 = vmatpush2.msra.mxu0 0.0
  %3144 = vmatprep.subr.mxu0 0.0
  %3145 = vmatpush2.msra.mxu0 0.0
  %3146 = vmatprep.subr.mxu0 0.0
  %3147 = vmatpush2.msra.mxu0 0.0
  %3148 = vmatprep.subr.mxu0 0.0
  %3149 = vmatpush2.msra.mxu0 0.0
  %3150 = vmatprep.mubr.f32.mxu0 0.0
  %3151 = vmatmul.mubr.f32.gmra.mxu0 %v3084
  %v3152 = vpop.f32.mrf.mxu0
  %v3153 = vadd.f32 0.0, %v3152
  %v3154 = vpop.f32.mrf.mxu0
  %v3155 = vadd.f32 0.0, %v3154
  %3156 = vdwg.mxu0
  %3157 = vmatprep.subr.mxu0 0.0
  %3158 = vmatpush1.msra.mxu0 0.0
  %3159 = vmatprep.subr.mxu0 0.0
  %3160 = vmatpush1.msra.mxu0 0.0
  %3161 = vmatprep.subr.mxu0 0.0
  %3162 = vmatpush1.msra.mxu0 0.0
  %3163 = vmatprep.subr.mxu0 0.0
  %3164 = vmatpush1.msra.mxu0 0.0
  %3165 = vmatprep.subr.mxu0 0.0
  %3166 = vmatpush1.msra.mxu0 0.0
  %3167 = vmatprep.subr.mxu0 0.0
  %3168 = vmatpush1.msra.mxu0 0.0
  %3169 = vmatprep.subr.mxu0 0.0
  %3170 = vmatpush1.msra.mxu0 0.0
  %3171 = vmatprep.subr.mxu0 0.0
  %3172 = vmatpush1.msra.mxu0 0.0
  %3173 = vmatprep.subr.mxu0 0.0
  %3174 = vmatpush1.msra.mxu0 0.0
  %3175 = vmatprep.subr.mxu0 0.0
  %3176 = vmatpush1.msra.mxu0 0.0
  %3177 = vmatprep.subr.mxu0 0.0
  %3178 = vmatpush1.msra.mxu0 0.0
  %3179 = vmatprep.subr.mxu0 0.0
  %3180 = vmatpush1.msra.mxu0 0.0
  %3181 = vmatprep.subr.mxu0 0.0
  %3182 = vmatpush1.msra.mxu0 0.0
  %3183 = vmatprep.subr.mxu0 0.0
  %3184 = vmatpush1.msra.mxu0 0.0
  %3185 = vmatprep.subr.mxu0 %v2273
  %3186 = vmatpush1.msra.mxu0 %v2272
  %3187 = vmatprep.subr.mxu0 %v2269
  %3188 = vmatpush1.msra.mxu0 %v2268
  %3189 = vmatprep.subr.mxu0 0.0
  %3190 = vmatpush2.msra.mxu0 0.0
  %3191 = vmatprep.subr.mxu0 0.0
  %3192 = vmatpush2.msra.mxu0 0.0
  %3193 = vmatprep.subr.mxu0 0.0
  %3194 = vmatpush2.msra.mxu0 0.0
  %3195 = vmatprep.subr.mxu0 0.0
  %3196 = vmatpush2.msra.mxu0 0.0
  %3197 = vmatprep.subr.mxu0 0.0
  %3198 = vmatpush2.msra.mxu0 0.0
  %3199 = vmatprep.subr.mxu0 0.0
  %3200 = vmatpush2.msra.mxu0 0.0
  %3201 = vmatprep.subr.mxu0 0.0
  %3202 = vmatpush2.msra.mxu0 0.0
  %3203 = vmatprep.subr.mxu0 0.0
  %3204 = vmatpush2.msra.mxu0 0.0
  %3205 = vmatprep.subr.mxu0 0.0
  %3206 = vmatpush2.msra.mxu0 0.0
  %3207 = vmatprep.subr.mxu0 0.0
  %3208 = vmatpush2.msra.mxu0 0.0
  %3209 = vmatprep.subr.mxu0 0.0
  %3210 = vmatpush2.msra.mxu0 0.0
  %3211 = vmatprep.subr.mxu0 0.0
  %3212 = vmatpush2.msra.mxu0 0.0
  %3213 = vmatprep.subr.mxu0 0.0
  %3214 = vmatpush2.msra.mxu0 0.0
  %3215 = vmatprep.subr.mxu0 0.0
  %3216 = vmatpush2.msra.mxu0 0.0
  %3217 = vmatprep.subr.mxu0 0.0
  %3218 = vmatpush2.msra.mxu0 0.0
  %3219 = vmatprep.subr.mxu0 0.0
  %3220 = vmatpush2.msra.mxu0 0.0
  %3221 = vmatprep.mubr.f32.mxu0 0.0
  %3222 = vmatmul.mubr.f32.gmra.mxu0 %v3084
  %v3223 = vpop.f32.mrf.mxu0
  %v3224 = vadd.f32 0.0, %v3223
  %v3225 = vpop.f32.mrf.mxu0
  %v3226 = vadd.f32 0.0, %v3225
  %3227 = vdwg.mxu0
  %v3228 = vadd.f32 %v3078, %v3153
  %v3229 = vadd.f32 %v3079, %v3155
  %v3230 = vadd.f32 %v3080, %v3224
  %v3231 = vadd.f32 %v3081, %v3226
  %3232 = vrot.lane.b32.xlu0 %v2266, 127
  %v3233 = vpop.permute.xlu0 %3232
  %3234 = vrot.lane.b32.xlu0 %v2270, 127
  %v3235 = vpop.permute.xlu0 %3234
  %3236 = vrot.lane.b32.xlu0 %v2267, 127
  %v3237 = vpop.permute.xlu0 %3236
  %3238 = vrot.lane.b32.xlu0 %v2271, 127
  %v3239 = vpop.permute.xlu0 %3238
  %3240 = vrot.lane.b32.xlu0 %v2268, 127
  %v3241 = vpop.permute.xlu0 %3240
  %3242 = vrot.lane.b32.xlu0 %v2272, 127
  %v3243 = vpop.permute.xlu0 %3242
  %3244 = vrot.lane.b32.xlu0 %v2269, 127
  %v3245 = vpop.permute.xlu0 %3244
  %3246 = vrot.lane.b32.xlu0 %v2273, 127
  %v3247 = vpop.permute.xlu0 %3246
  %v3248 = vsel %vm1230, %v3241, %v3245
  %v3249 = vsel %vm1230, %v3243, %v3247
  %v3250 = vsel %vm1230, %v3237, %v3241
  %v3251 = vsel %vm1230, %v3239, %v3243
  %v3252 = vsel %vm1230, %v3233, %v3237
  %v3253 = vsel %vm1230, %v3235, %v3239
  %v3254 = vsel %vm1230, %v3245, %v3233
  %v3255 = vsel %vm1230, %v3247, %v3235
  %v3256 = vld [vmem:[%s1239] ss:$8 sm:$0xf]
  %v3258 = vlaneseq
  %v3259 = vshrl.u32 %v3258, 7
  %v3260 = vsub.s32 0, %v3259
  %v3261 = vrot.slane %v3256, %v3260
  %v3262 = vlaneseq
  %v3263 = vshrl.u32 %v3262, 7
  %v3264 = vsub.s32 1, %v3263
  %v3265 = vrot.slane %v3256, %v3264
  %v3266 = vlaneseq
  %v3267 = vshrl.u32 %v3266, 7
  %v3268 = vsub.s32 2, %v3267
  %v3269 = vrot.slane %v3256, %v3268
  %v3270 = vlaneseq
  %v3271 = vshrl.u32 %v3270, 7
  %v3272 = vsub.s32 3, %v3271
  %v3273 = vrot.slane %v3256, %v3272
  %v3278 = vmul.f32 %v3252, %v3261
  %v3279 = vmul.f32 %v3250, %v3265
  %v3280 = vmul.f32 %v3248, %v3269
  %v3281 = vmul.f32 %v3254, %v3273
  %v3282 = vmul.f32 %v3253, %v3261
  %v3283 = vmul.f32 %v3251, %v3265
  %v3284 = vmul.f32 %v3249, %v3269
  %v3285 = vmul.f32 %v3255, %v3273
  %v3286 = vld [vmem:[%s1 + $0x58] sm:$0xf]
  %v3288 = vsel %vm361, %v3286, 0
  %3290 = vmatprep.subr.mxu0 0.0
  %3291 = vmatpush1.msra.mxu0 0.0
  %3292 = vmatprep.subr.mxu0 0.0
  %3293 = vmatpush1.msra.mxu0 0.0
  %3294 = vmatprep.subr.mxu0 0.0
  %3295 = vmatpush1.msra.mxu0 0.0
  %3296 = vmatprep.subr.mxu0 0.0
  %3297 = vmatpush1.msra.mxu0 0.0
  %3298 = vmatprep.subr.mxu0 0.0
  %3299 = vmatpush1.msra.mxu0 0.0
  %3300 = vmatprep.subr.mxu0 0.0
  %3301 = vmatpush1.msra.mxu0 0.0
  %3302 = vmatprep.subr.mxu0 0.0
  %3303 = vmatpush1.msra.mxu0 0.0
  %3304 = vmatprep.subr.mxu0 0.0
  %3305 = vmatpush1.msra.mxu0 0.0
  %3306 = vmatprep.subr.mxu0 0.0
  %3307 = vmatpush1.msra.mxu0 0.0
  %3308 = vmatprep.subr.mxu0 0.0
  %3309 = vmatpush1.msra.mxu0 0.0
  %3310 = vmatprep.subr.mxu0 0.0
  %3311 = vmatpush1.msra.mxu0 0.0
  %3312 = vmatprep.subr.mxu0 0.0
  %3313 = vmatpush1.msra.mxu0 0.0
  %3314 = vmatprep.subr.mxu0 0.0
  %3315 = vmatpush1.msra.mxu0 0.0
  %3316 = vmatprep.subr.mxu0 0.0
  %3317 = vmatpush1.msra.mxu0 0.0
  %3318 = vmatprep.subr.mxu0 %v3283
  %3319 = vmatpush1.msra.mxu0 %v3282
  %3320 = vmatprep.subr.mxu0 %v3279
  %3321 = vmatpush1.msra.mxu0 %v3278
  %3322 = vmatprep.subr.mxu0 0.0
  %3323 = vmatpush2.msra.mxu0 0.0
  %3324 = vmatprep.subr.mxu0 0.0
  %3325 = vmatpush2.msra.mxu0 0.0
  %3326 = vmatprep.subr.mxu0 0.0
  %3327 = vmatpush2.msra.mxu0 0.0
  %3328 = vmatprep.subr.mxu0 0.0
  %3329 = vmatpush2.msra.mxu0 0.0
  %3330 = vmatprep.subr.mxu0 0.0
  %3331 = vmatpush2.msra.mxu0 0.0
  %3332 = vmatprep.subr.mxu0 0.0
  %3333 = vmatpush2.msra.mxu0 0.0
  %3334 = vmatprep.subr.mxu0 0.0
  %3335 = vmatpush2.msra.mxu0 0.0
  %3336 = vmatprep.subr.mxu0 0.0
  %3337 = vmatpush2.msra.mxu0 0.0
  %3338 = vmatprep.subr.mxu0 0.0
  %3339 = vmatpush2.msra.mxu0 0.0
  %3340 = vmatprep.subr.mxu0 0.0
  %3341 = vmatpush2.msra.mxu0 0.0
  %3342 = vmatprep.subr.mxu0 0.0
  %3343 = vmatpush2.msra.mxu0 0.0
  %3344 = vmatprep.subr.mxu0 0.0
  %3345 = vmatpush2.msra.mxu0 0.0
  %3346 = vmatprep.subr.mxu0 0.0
  %3347 = vmatpush2.msra.mxu0 0.0
  %3348 = vmatprep.subr.mxu0 0.0
  %3349 = vmatpush2.msra.mxu0 0.0
  %3350 = vmatprep.subr.mxu0 0.0
  %3351 = vmatpush2.msra.mxu0 0.0
  %3352 = vmatprep.subr.mxu0 0.0
  %3353 = vmatpush2.msra.mxu0 0.0
  %3354 = vmatprep.mubr.f32.mxu0 0.0
  %3355 = vmatmul.mubr.f32.gmra.mxu0 %v3288
  %v3356 = vpop.f32.mrf.mxu0
  %v3357 = vadd.f32 0.0, %v3356
  %v3358 = vpop.f32.mrf.mxu0
  %v3359 = vadd.f32 0.0, %v3358
  %3360 = vdwg.mxu0
  %3361 = vmatprep.subr.mxu0 0.0
  %3362 = vmatpush1.msra.mxu0 0.0
  %3363 = vmatprep.subr.mxu0 0.0
  %3364 = vmatpush1.msra.mxu0 0.0
  %3365 = vmatprep.subr.mxu0 0.0
  %3366 = vmatpush1.msra.mxu0 0.0
  %3367 = vmatprep.subr.mxu0 0.0
  %3368 = vmatpush1.msra.mxu0 0.0
  %3369 = vmatprep.subr.mxu0 0.0
  %3370 = vmatpush1.msra.mxu0 0.0
  %3371 = vmatprep.subr.mxu0 0.0
  %3372 = vmatpush1.msra.mxu0 0.0
  %3373 = vmatprep.subr.mxu0 0.0
  %3374 = vmatpush1.msra.mxu0 0.0
  %3375 = vmatprep.subr.mxu0 0.0
  %3376 = vmatpush1.msra.mxu0 0.0
  %3377 = vmatprep.subr.mxu0 0.0
  %3378 = vmatpush1.msra.mxu0 0.0
  %3379 = vmatprep.subr.mxu0 0.0
  %3380 = vmatpush1.msra.mxu0 0.0
  %3381 = vmatprep.subr.mxu0 0.0
  %3382 = vmatpush1.msra.mxu0 0.0
  %3383 = vmatprep.subr.mxu0 0.0
  %3384 = vmatpush1.msra.mxu0 0.0
  %3385 = vmatprep.subr.mxu0 0.0
  %3386 = vmatpush1.msra.mxu0 0.0
  %3387 = vmatprep.subr.mxu0 0.0
  %3388 = vmatpush1.msra.mxu0 0.0
  %3389 = vmatprep.subr.mxu0 %v3285
  %3390 = vmatpush1.msra.mxu0 %v3284
  %3391 = vmatprep.subr.mxu0 %v3281
  %3392 = vmatpush1.msra.mxu0 %v3280
  %3393 = vmatprep.subr.mxu0 0.0
  %3394 = vmatpush2.msra.mxu0 0.0
  %3395 = vmatprep.subr.mxu0 0.0
  %3396 = vmatpush2.msra.mxu0 0.0
  %3397 = vmatprep.subr.mxu0 0.0
  %3398 = vmatpush2.msra.mxu0 0.0
  %3399 = vmatprep.subr.mxu0 0.0
  %3400 = vmatpush2.msra.mxu0 0.0
  %3401 = vmatprep.subr.mxu0 0.0
  %3402 = vmatpush2.msra.mxu0 0.0
  %3403 = vmatprep.subr.mxu0 0.0
  %3404 = vmatpush2.msra.mxu0 0.0
  %3405 = vmatprep.subr.mxu0 0.0
  %3406 = vmatpush2.msra.mxu0 0.0
  %3407 = vmatprep.subr.mxu0 0.0
  %3408 = vmatpush2.msra.mxu0 0.0
  %3409 = vmatprep.subr.mxu0 0.0
  %3410 = vmatpush2.msra.mxu0 0.0
  %3411 = vmatprep.subr.mxu0 0.0
  %3412 = vmatpush2.msra.mxu0 0.0
  %3413 = vmatprep.subr.mxu0 0.0
  %3414 = vmatpush2.msra.mxu0 0.0
  %3415 = vmatprep.subr.mxu0 0.0
  %3416 = vmatpush2.msra.mxu0 0.0
  %3417 = vmatprep.subr.mxu0 0.0
  %3418 = vmatpush2.msra.mxu0 0.0
  %3419 = vmatprep.subr.mxu0 0.0
  %3420 = vmatpush2.msra.mxu0 0.0
  %3421 = vmatprep.subr.mxu0 0.0
  %3422 = vmatpush2.msra.mxu0 0.0
  %3423 = vmatprep.subr.mxu0 0.0
  %3424 = vmatpush2.msra.mxu0 0.0
  %3425 = vmatprep.mubr.f32.mxu0 0.0
  %3426 = vmatmul.mubr.f32.gmra.mxu0 %v3288
  %v3427 = vpop.f32.mrf.mxu0
  %v3428 = vadd.f32 0.0, %v3427
  %v3429 = vpop.f32.mrf.mxu0
  %v3430 = vadd.f32 0.0, %v3429
  %3431 = vdwg.mxu0
  %v3432 = vadd.f32 %v3228, %v3357
  %v3433 = vadd.f32 %v3229, %v3359
  %v3434 = vadd.f32 %v3230, %v3428
  %v3435 = vadd.f32 %v3231, %v3430
  %3436 = vrot.lane.b32.xlu0 %v2266, 113
  %v3437 = vpop.permute.xlu0 %3436
  %3438 = vrot.lane.b32.xlu0 %v2270, 113
  %v3439 = vpop.permute.xlu0 %3438
  %3440 = vrot.lane.b32.xlu0 %v2267, 113
  %v3441 = vpop.permute.xlu0 %3440
  %3442 = vrot.lane.b32.xlu0 %v2271, 113
  %v3443 = vpop.permute.xlu0 %3442
  %3444 = vrot.lane.b32.xlu0 %v2268, 113
  %v3445 = vpop.permute.xlu0 %3444
  %3446 = vrot.lane.b32.xlu0 %v2272, 113
  %v3447 = vpop.permute.xlu0 %3446
  %3448 = vrot.lane.b32.xlu0 %v2269, 113
  %v3449 = vpop.permute.xlu0 %3448
  %3450 = vrot.lane.b32.xlu0 %v2273, 113
  %v3451 = vpop.permute.xlu0 %3450
  %v3452 = vsel %vm1436, %v3445, %v3449
  %v3453 = vsel %vm1436, %v3447, %v3451
  %v3454 = vsel %vm1436, %v3441, %v3445
  %v3455 = vsel %vm1436, %v3443, %v3447
  %v3456 = vsel %vm1436, %v3437, %v3441
  %v3457 = vsel %vm1436, %v3439, %v3443
  %v3458 = vsel %vm1436, %v3449, %v3437
  %v3459 = vsel %vm1436, %v3451, %v3439
  %v3460 = vld [vmem:[%s1445] ss:$8 sm:$0xf]
  %v3462 = vlaneseq
  %v3463 = vshrl.u32 %v3462, 7
  %v3464 = vsub.s32 0, %v3463
  %v3465 = vrot.slane %v3460, %v3464
  %v3466 = vlaneseq
  %v3467 = vshrl.u32 %v3466, 7
  %v3468 = vsub.s32 1, %v3467
  %v3469 = vrot.slane %v3460, %v3468
  %v3470 = vlaneseq
  %v3471 = vshrl.u32 %v3470, 7
  %v3472 = vsub.s32 2, %v3471
  %v3473 = vrot.slane %v3460, %v3472
  %v3474 = vlaneseq
  %v3475 = vshrl.u32 %v3474, 7
  %v3476 = vsub.s32 3, %v3475
  %v3477 = vrot.slane %v3460, %v3476
  %v3482 = vmul.f32 %v3456, %v3465
  %v3483 = vmul.f32 %v3454, %v3469
  %v3484 = vmul.f32 %v3452, %v3473
  %v3485 = vmul.f32 %v3458, %v3477
  %v3486 = vmul.f32 %v3457, %v3465
  %v3487 = vmul.f32 %v3455, %v3469
  %v3488 = vmul.f32 %v3453, %v3473
  %v3489 = vmul.f32 %v3459, %v3477
  %v3490 = vld [vmem:[%s1 + $0x5c] sm:$0xf]
  %v3492 = vsel %vm361, %v3490, 0
  %3494 = vmatprep.subr.mxu0 0.0
  %3495 = vmatpush1.msra.mxu0 0.0
  %3496 = vmatprep.subr.mxu0 0.0
  %3497 = vmatpush1.msra.mxu0 0.0
  %3498 = vmatprep.subr.mxu0 0.0
  %3499 = vmatpush1.msra.mxu0 0.0
  %3500 = vmatprep.subr.mxu0 0.0
  %3501 = vmatpush1.msra.mxu0 0.0
  %3502 = vmatprep.subr.mxu0 0.0
  %3503 = vmatpush1.msra.mxu0 0.0
  %3504 = vmatprep.subr.mxu0 0.0
  %3505 = vmatpush1.msra.mxu0 0.0
  %3506 = vmatprep.subr.mxu0 0.0
  %3507 = vmatpush1.msra.mxu0 0.0
  %3508 = vmatprep.subr.mxu0 0.0
  %3509 = vmatpush1.msra.mxu0 0.0
  %3510 = vmatprep.subr.mxu0 0.0
  %3511 = vmatpush1.msra.mxu0 0.0
  %3512 = vmatprep.subr.mxu0 0.0
  %3513 = vmatpush1.msra.mxu0 0.0
  %3514 = vmatprep.subr.mxu0 0.0
  %3515 = vmatpush1.msra.mxu0 0.0
  %3516 = vmatprep.subr.mxu0 0.0
  %3517 = vmatpush1.msra.mxu0 0.0
  %3518 = vmatprep.subr.mxu0 0.0
  %3519 = vmatpush1.msra.mxu0 0.0
  %3520 = vmatprep.subr.mxu0 0.0
  %3521 = vmatpush1.msra.mxu0 0.0
  %3522 = vmatprep.subr.mxu0 %v3487
  %3523 = vmatpush1.msra.mxu0 %v3486
  %3524 = vmatprep.subr.mxu0 %v3483
  %3525 = vmatpush1.msra.mxu0 %v3482
  %3526 = vmatprep.subr.mxu0 0.0
  %3527 = vmatpush2.msra.mxu0 0.0
  %3528 = vmatprep.subr.mxu0 0.0
  %3529 = vmatpush2.msra.mxu0 0.0
  %3530 = vmatprep.subr.mxu0 0.0
  %3531 = vmatpush2.msra.mxu0 0.0
  %3532 = vmatprep.subr.mxu0 0.0
  %3533 = vmatpush2.msra.mxu0 0.0
  %3534 = vmatprep.subr.mxu0 0.0
  %3535 = vmatpush2.msra.mxu0 0.0
  %3536 = vmatprep.subr.mxu0 0.0
  %3537 = vmatpush2.msra.mxu0 0.0
  %3538 = vmatprep.subr.mxu0 0.0
  %3539 = vmatpush2.msra.mxu0 0.0
  %3540 = vmatprep.subr.mxu0 0.0
  %3541 = vmatpush2.msra.mxu0 0.0
  %3542 = vmatprep.subr.mxu0 0.0
  %3543 = vmatpush2.msra.mxu0 0.0
  %3544 = vmatprep.subr.mxu0 0.0
  %3545 = vmatpush2.msra.mxu0 0.0
  %3546 = vmatprep.subr.mxu0 0.0
  %3547 = vmatpush2.msra.mxu0 0.0
  %3548 = vmatprep.subr.mxu0 0.0
  %3549 = vmatpush2.msra.mxu0 0.0
  %3550 = vmatprep.subr.mxu0 0.0
  %3551 = vmatpush2.msra.mxu0 0.0
  %3552 = vmatprep.subr.mxu0 0.0
  %3553 = vmatpush2.msra.mxu0 0.0
  %3554 = vmatprep.subr.mxu0 0.0
  %3555 = vmatpush2.msra.mxu0 0.0
  %3556 = vmatprep.subr.mxu0 0.0
  %3557 = vmatpush2.msra.mxu0 0.0
  %3558 = vmatprep.mubr.f32.mxu0 0.0
  %3559 = vmatmul.mubr.f32.gmra.mxu0 %v3492
  %v3560 = vpop.f32.mrf.mxu0
  %v3561 = vadd.f32 0.0, %v3560
  %v3562 = vpop.f32.mrf.mxu0
  %v3563 = vadd.f32 0.0, %v3562
  %3564 = vdwg.mxu0
  %3565 = vmatprep.subr.mxu0 0.0
  %3566 = vmatpush1.msra.mxu0 0.0
  %3567 = vmatprep.subr.mxu0 0.0
  %3568 = vmatpush1.msra.mxu0 0.0
  %3569 = vmatprep.subr.mxu0 0.0
  %3570 = vmatpush1.msra.mxu0 0.0
  %3571 = vmatprep.subr.mxu0 0.0
  %3572 = vmatpush1.msra.mxu0 0.0
  %3573 = vmatprep.subr.mxu0 0.0
  %3574 = vmatpush1.msra.mxu0 0.0
  %3575 = vmatprep.subr.mxu0 0.0
  %3576 = vmatpush1.msra.mxu0 0.0
  %3577 = vmatprep.subr.mxu0 0.0
  %3578 = vmatpush1.msra.mxu0 0.0
  %3579 = vmatprep.subr.mxu0 0.0
  %3580 = vmatpush1.msra.mxu0 0.0
  %3581 = vmatprep.subr.mxu0 0.0
  %3582 = vmatpush1.msra.mxu0 0.0
  %3583 = vmatprep.subr.mxu0 0.0
  %3584 = vmatpush1.msra.mxu0 0.0
  %3585 = vmatprep.subr.mxu0 0.0
  %3586 = vmatpush1.msra.mxu0 0.0
  %3587 = vmatprep.subr.mxu0 0.0
  %3588 = vmatpush1.msra.mxu0 0.0
  %3589 = vmatprep.subr.mxu0 0.0
  %3590 = vmatpush1.msra.mxu0 0.0
  %3591 = vmatprep.subr.mxu0 0.0
  %3592 = vmatpush1.msra.mxu0 0.0
  %3593 = vmatprep.subr.mxu0 %v3489
  %3594 = vmatpush1.msra.mxu0 %v3488
  %3595 = vmatprep.subr.mxu0 %v3485
  %3596 = vmatpush1.msra.mxu0 %v3484
  %3597 = vmatprep.subr.mxu0 0.0
  %3598 = vmatpush2.msra.mxu0 0.0
  %3599 = vmatprep.subr.mxu0 0.0
  %3600 = vmatpush2.msra.mxu0 0.0
  %3601 = vmatprep.subr.mxu0 0.0
  %3602 = vmatpush2.msra.mxu0 0.0
  %3603 = vmatprep.subr.mxu0 0.0
  %3604 = vmatpush2.msra.mxu0 0.0
  %3605 = vmatprep.subr.mxu0 0.0
  %3606 = vmatpush2.msra.mxu0 0.0
  %3607 = vmatprep.subr.mxu0 0.0
  %3608 = vmatpush2.msra.mxu0 0.0
  %3609 = vmatprep.subr.mxu0 0.0
  %3610 = vmatpush2.msra.mxu0 0.0
  %3611 = vmatprep.subr.mxu0 0.0
  %3612 = vmatpush2.msra.mxu0 0.0
  %3613 = vmatprep.subr.mxu0 0.0
  %3614 = vmatpush2.msra.mxu0 0.0
  %3615 = vmatprep.subr.mxu0 0.0
  %3616 = vmatpush2.msra.mxu0 0.0
  %3617 = vmatprep.subr.mxu0 0.0
  %3618 = vmatpush2.msra.mxu0 0.0
  %3619 = vmatprep.subr.mxu0 0.0
  %3620 = vmatpush2.msra.mxu0 0.0
  %3621 = vmatprep.subr.mxu0 0.0
  %3622 = vmatpush2.msra.mxu0 0.0
  %3623 = vmatprep.subr.mxu0 0.0
  %3624 = vmatpush2.msra.mxu0 0.0
  %3625 = vmatprep.subr.mxu0 0.0
  %3626 = vmatpush2.msra.mxu0 0.0
  %3627 = vmatprep.subr.mxu0 0.0
  %3628 = vmatpush2.msra.mxu0 0.0
  %3629 = vmatprep.mubr.f32.mxu0 0.0
  %3630 = vmatmul.mubr.f32.gmra.mxu0 %v3492
  %v3631 = vpop.f32.mrf.mxu0
  %v3632 = vadd.f32 0.0, %v3631
  %v3633 = vpop.f32.mrf.mxu0
  %v3634 = vadd.f32 0.0, %v3633
  %3635 = vdwg.mxu0
  %v3636 = vadd.f32 %v3432, %v3561
  %v3637 = vadd.f32 %v3433, %v3563
  %v3638 = vadd.f32 %v3434, %v3632
  %v3639 = vadd.f32 %v3435, %v3634
  %3640 = vrot.lane.b32.xlu0 %v2266, 112
  %v3641 = vpop.permute.xlu0 %3640
  %3642 = vrot.lane.b32.xlu0 %v2270, 112
  %v3643 = vpop.permute.xlu0 %3642
  %3644 = vrot.lane.b32.xlu0 %v2267, 112
  %v3645 = vpop.permute.xlu0 %3644
  %3646 = vrot.lane.b32.xlu0 %v2271, 112
  %v3647 = vpop.permute.xlu0 %3646
  %3648 = vrot.lane.b32.xlu0 %v2268, 112
  %v3649 = vpop.permute.xlu0 %3648
  %3650 = vrot.lane.b32.xlu0 %v2272, 112
  %v3651 = vpop.permute.xlu0 %3650
  %3652 = vrot.lane.b32.xlu0 %v2269, 112
  %v3653 = vpop.permute.xlu0 %3652
  %3654 = vrot.lane.b32.xlu0 %v2273, 112
  %v3655 = vpop.permute.xlu0 %3654
  %v3656 = vsel %vm1642, %v3649, %v3653
  %v3657 = vsel %vm1642, %v3651, %v3655
  %v3658 = vsel %vm1642, %v3645, %v3649
  %v3659 = vsel %vm1642, %v3647, %v3651
  %v3660 = vsel %vm1642, %v3641, %v3645
  %v3661 = vsel %vm1642, %v3643, %v3647
  %v3662 = vsel %vm1642, %v3653, %v3641
  %v3663 = vsel %vm1642, %v3655, %v3643
  %v3664 = vld [vmem:[%s1651] ss:$8 sm:$0xf]
  %v3666 = vlaneseq
  %v3667 = vshrl.u32 %v3666, 7
  %v3668 = vsub.s32 0, %v3667
  %v3669 = vrot.slane %v3664, %v3668
  %v3670 = vlaneseq
  %v3671 = vshrl.u32 %v3670, 7
  %v3672 = vsub.s32 1, %v3671
  %v3673 = vrot.slane %v3664, %v3672
  %v3674 = vlaneseq
  %v3675 = vshrl.u32 %v3674, 7
  %v3676 = vsub.s32 2, %v3675
  %v3677 = vrot.slane %v3664, %v3676
  %v3678 = vlaneseq
  %v3679 = vshrl.u32 %v3678, 7
  %v3680 = vsub.s32 3, %v3679
  %v3681 = vrot.slane %v3664, %v3680
  %v3686 = vmul.f32 %v3660, %v3669
  %v3687 = vmul.f32 %v3658, %v3673
  %v3688 = vmul.f32 %v3656, %v3677
  %v3689 = vmul.f32 %v3662, %v3681
  %v3690 = vmul.f32 %v3661, %v3669
  %v3691 = vmul.f32 %v3659, %v3673
  %v3692 = vmul.f32 %v3657, %v3677
  %v3693 = vmul.f32 %v3663, %v3681
  %v3694 = vld [vmem:[%s1 + $0x60] sm:$0xf]
  %v3696 = vsel %vm361, %v3694, 0
  %3698 = vmatprep.subr.mxu0 0.0
  %3699 = vmatpush1.msra.mxu0 0.0
  %3700 = vmatprep.subr.mxu0 0.0
  %3701 = vmatpush1.msra.mxu0 0.0
  %3702 = vmatprep.subr.mxu0 0.0
  %3703 = vmatpush1.msra.mxu0 0.0
  %3704 = vmatprep.subr.mxu0 0.0
  %3705 = vmatpush1.msra.mxu0 0.0
  %3706 = vmatprep.subr.mxu0 0.0
  %3707 = vmatpush1.msra.mxu0 0.0
  %3708 = vmatprep.subr.mxu0 0.0
  %3709 = vmatpush1.msra.mxu0 0.0
  %3710 = vmatprep.subr.mxu0 0.0
  %3711 = vmatpush1.msra.mxu0 0.0
  %3712 = vmatprep.subr.mxu0 0.0
  %3713 = vmatpush1.msra.mxu0 0.0
  %3714 = vmatprep.subr.mxu0 0.0
  %3715 = vmatpush1.msra.mxu0 0.0
  %3716 = vmatprep.subr.mxu0 0.0
  %3717 = vmatpush1.msra.mxu0 0.0
  %3718 = vmatprep.subr.mxu0 0.0
  %3719 = vmatpush1.msra.mxu0 0.0
  %3720 = vmatprep.subr.mxu0 0.0
  %3721 = vmatpush1.msra.mxu0 0.0
  %3722 = vmatprep.subr.mxu0 0.0
  %3723 = vmatpush1.msra.mxu0 0.0
  %3724 = vmatprep.subr.mxu0 0.0
  %3725 = vmatpush1.msra.mxu0 0.0
  %3726 = vmatprep.subr.mxu0 %v3691
  %3727 = vmatpush1.msra.mxu0 %v3690
  %3728 = vmatprep.subr.mxu0 %v3687
  %3729 = vmatpush1.msra.mxu0 %v3686
  %3730 = vmatprep.subr.mxu0 0.0
  %3731 = vmatpush2.msra.mxu0 0.0
  %3732 = vmatprep.subr.mxu0 0.0
  %3733 = vmatpush2.msra.mxu0 0.0
  %3734 = vmatprep.subr.mxu0 0.0
  %3735 = vmatpush2.msra.mxu0 0.0
  %3736 = vmatprep.subr.mxu0 0.0
  %3737 = vmatpush2.msra.mxu0 0.0
  %3738 = vmatprep.subr.mxu0 0.0
  %3739 = vmatpush2.msra.mxu0 0.0
  %3740 = vmatprep.subr.mxu0 0.0
  %3741 = vmatpush2.msra.mxu0 0.0
  %3742 = vmatprep.subr.mxu0 0.0
  %3743 = vmatpush2.msra.mxu0 0.0
  %3744 = vmatprep.subr.mxu0 0.0
  %3745 = vmatpush2.msra.mxu0 0.0
  %3746 = vmatprep.subr.mxu0 0.0
  %3747 = vmatpush2.msra.mxu0 0.0
  %3748 = vmatprep.subr.mxu0 0.0
  %3749 = vmatpush2.msra.mxu0 0.0
  %3750 = vmatprep.subr.mxu0 0.0
  %3751 = vmatpush2.msra.mxu0 0.0
  %3752 = vmatprep.subr.mxu0 0.0
  %3753 = vmatpush2.msra.mxu0 0.0
  %3754 = vmatprep.subr.mxu0 0.0
  %3755 = vmatpush2.msra.mxu0 0.0
  %3756 = vmatprep.subr.mxu0 0.0
  %3757 = vmatpush2.msra.mxu0 0.0
  %3758 = vmatprep.subr.mxu0 0.0
  %3759 = vmatpush2.msra.mxu0 0.0
  %3760 = vmatprep.subr.mxu0 0.0
  %3761 = vmatpush2.msra.mxu0 0.0
  %3762 = vmatprep.mubr.f32.mxu0 0.0
  %3763 = vmatmul.mubr.f32.gmra.mxu0 %v3696
  %v3764 = vpop.f32.mrf.mxu0
  %v3765 = vadd.f32 0.0, %v3764
  %v3766 = vpop.f32.mrf.mxu0
  %v3767 = vadd.f32 0.0, %v3766
  %3768 = vdwg.mxu0
  %3769 = vmatprep.subr.mxu0 0.0
  %3770 = vmatpush1.msra.mxu0 0.0
  %3771 = vmatprep.subr.mxu0 0.0
  %3772 = vmatpush1.msra.mxu0 0.0
  %3773 = vmatprep.subr.mxu0 0.0
  %3774 = vmatpush1.msra.mxu0 0.0
  %3775 = vmatprep.subr.mxu0 0.0
  %3776 = vmatpush1.msra.mxu0 0.0
  %3777 = vmatprep.subr.mxu0 0.0
  %3778 = vmatpush1.msra.mxu0 0.0
  %3779 = vmatprep.subr.mxu0 0.0
  %3780 = vmatpush1.msra.mxu0 0.0
  %3781 = vmatprep.subr.mxu0 0.0
  %3782 = vmatpush1.msra.mxu0 0.0
  %3783 = vmatprep.subr.mxu0 0.0
  %3784 = vmatpush1.msra.mxu0 0.0
  %3785 = vmatprep.subr.mxu0 0.0
  %3786 = vmatpush1.msra.mxu0 0.0
  %3787 = vmatprep.subr.mxu0 0.0
  %3788 = vmatpush1.msra.mxu0 0.0
  %3789 = vmatprep.subr.mxu0 0.0
  %3790 = vmatpush1.msra.mxu0 0.0
  %3791 = vmatprep.subr.mxu0 0.0
  %3792 = vmatpush1.msra.mxu0 0.0
  %3793 = vmatprep.subr.mxu0 0.0
  %3794 = vmatpush1.msra.mxu0 0.0
  %3795 = vmatprep.subr.mxu0 0.0
  %3796 = vmatpush1.msra.mxu0 0.0
  %3797 = vmatprep.subr.mxu0 %v3693
  %3798 = vmatpush1.msra.mxu0 %v3692
  %3799 = vmatprep.subr.mxu0 %v3689
  %3800 = vmatpush1.msra.mxu0 %v3688
  %3801 = vmatprep.subr.mxu0 0.0
  %3802 = vmatpush2.msra.mxu0 0.0
  %3803 = vmatprep.subr.mxu0 0.0
  %3804 = vmatpush2.msra.mxu0 0.0
  %3805 = vmatprep.subr.mxu0 0.0
  %3806 = vmatpush2.msra.mxu0 0.0
  %3807 = vmatprep.subr.mxu0 0.0
  %3808 = vmatpush2.msra.mxu0 0.0
  %3809 = vmatprep.subr.mxu0 0.0
  %3810 = vmatpush2.msra.mxu0 0.0
  %3811 = vmatprep.subr.mxu0 0.0
  %3812 = vmatpush2.msra.mxu0 0.0
  %3813 = vmatprep.subr.mxu0 0.0
  %3814 = vmatpush2.msra.mxu0 0.0
  %3815 = vmatprep.subr.mxu0 0.0
  %3816 = vmatpush2.msra.mxu0 0.0
  %3817 = vmatprep.subr.mxu0 0.0
  %3818 = vmatpush2.msra.mxu0 0.0
  %3819 = vmatprep.subr.mxu0 0.0
  %3820 = vmatpush2.msra.mxu0 0.0
  %3821 = vmatprep.subr.mxu0 0.0
  %3822 = vmatpush2.msra.mxu0 0.0
  %3823 = vmatprep.subr.mxu0 0.0
  %3824 = vmatpush2.msra.mxu0 0.0
  %3825 = vmatprep.subr.mxu0 0.0
  %3826 = vmatpush2.msra.mxu0 0.0
  %3827 = vmatprep.subr.mxu0 0.0
  %3828 = vmatpush2.msra.mxu0 0.0
  %3829 = vmatprep.subr.mxu0 0.0
  %3830 = vmatpush2.msra.mxu0 0.0
  %3831 = vmatprep.subr.mxu0 0.0
  %3832 = vmatpush2.msra.mxu0 0.0
  %3833 = vmatprep.mubr.f32.mxu0 0.0
  %3834 = vmatmul.mubr.f32.gmra.mxu0 %v3696
  %v3835 = vpop.f32.mrf.mxu0
  %v3836 = vadd.f32 0.0, %v3835
  %v3837 = vpop.f32.mrf.mxu0
  %v3838 = vadd.f32 0.0, %v3837
  %3839 = vdwg.mxu0
  %v3840 = vadd.f32 %v3636, %v3765
  %v3841 = vadd.f32 %v3637, %v3767
  %v3842 = vadd.f32 %v3638, %v3836
  %v3843 = vadd.f32 %v3639, %v3838
  %3844 = vrot.lane.b32.xlu0 %v2266, 111
  %v3845 = vpop.permute.xlu0 %3844
  %3846 = vrot.lane.b32.xlu0 %v2270, 111
  %v3847 = vpop.permute.xlu0 %3846
  %3848 = vrot.lane.b32.xlu0 %v2267, 111
  %v3849 = vpop.permute.xlu0 %3848
  %3850 = vrot.lane.b32.xlu0 %v2271, 111
  %v3851 = vpop.permute.xlu0 %3850
  %3852 = vrot.lane.b32.xlu0 %v2268, 111
  %v3853 = vpop.permute.xlu0 %3852
  %3854 = vrot.lane.b32.xlu0 %v2272, 111
  %v3855 = vpop.permute.xlu0 %3854
  %3856 = vrot.lane.b32.xlu0 %v2269, 111
  %v3857 = vpop.permute.xlu0 %3856
  %3858 = vrot.lane.b32.xlu0 %v2273, 111
  %v3859 = vpop.permute.xlu0 %3858
  %v3860 = vsel %vm1848, %v3853, %v3857
  %v3861 = vsel %vm1848, %v3855, %v3859
  %v3862 = vsel %vm1848, %v3849, %v3853
  %v3863 = vsel %vm1848, %v3851, %v3855
  %v3864 = vsel %vm1848, %v3845, %v3849
  %v3865 = vsel %vm1848, %v3847, %v3851
  %v3866 = vsel %vm1848, %v3857, %v3845
  %v3867 = vsel %vm1848, %v3859, %v3847
  %v3868 = vld [vmem:[%s1857] ss:$8 sm:$0xf]
  %v3870 = vlaneseq
  %v3871 = vshrl.u32 %v3870, 7
  %v3872 = vsub.s32 0, %v3871
  %v3873 = vrot.slane %v3868, %v3872
  %v3874 = vlaneseq
  %v3875 = vshrl.u32 %v3874, 7
  %v3876 = vsub.s32 1, %v3875
  %v3877 = vrot.slane %v3868, %v3876
  %v3878 = vlaneseq
  %v3879 = vshrl.u32 %v3878, 7
  %v3880 = vsub.s32 2, %v3879
  %v3881 = vrot.slane %v3868, %v3880
  %v3882 = vlaneseq
  %v3883 = vshrl.u32 %v3882, 7
  %v3884 = vsub.s32 3, %v3883
  %v3885 = vrot.slane %v3868, %v3884
  %v3890 = vmul.f32 %v3864, %v3873
  %v3891 = vmul.f32 %v3862, %v3877
  %v3892 = vmul.f32 %v3860, %v3881
  %v3893 = vmul.f32 %v3866, %v3885
  %v3894 = vmul.f32 %v3865, %v3873
  %v3895 = vmul.f32 %v3863, %v3877
  %v3896 = vmul.f32 %v3861, %v3881
  %v3897 = vmul.f32 %v3867, %v3885
  %v3898 = vld [vmem:[%s1 + $0x64] sm:$0xf]
  %v3900 = vsel %vm361, %v3898, 0
  %3902 = vmatprep.subr.mxu0 0.0
  %3903 = vmatpush1.msra.mxu0 0.0
  %3904 = vmatprep.subr.mxu0 0.0
  %3905 = vmatpush1.msra.mxu0 0.0
  %3906 = vmatprep.subr.mxu0 0.0
  %3907 = vmatpush1.msra.mxu0 0.0
  %3908 = vmatprep.subr.mxu0 0.0
  %3909 = vmatpush1.msra.mxu0 0.0
  %3910 = vmatprep.subr.mxu0 0.0
  %3911 = vmatpush1.msra.mxu0 0.0
  %3912 = vmatprep.subr.mxu0 0.0
  %3913 = vmatpush1.msra.mxu0 0.0
  %3914 = vmatprep.subr.mxu0 0.0
  %3915 = vmatpush1.msra.mxu0 0.0
  %3916 = vmatprep.subr.mxu0 0.0
  %3917 = vmatpush1.msra.mxu0 0.0
  %3918 = vmatprep.subr.mxu0 0.0
  %3919 = vmatpush1.msra.mxu0 0.0
  %3920 = vmatprep.subr.mxu0 0.0
  %3921 = vmatpush1.msra.mxu0 0.0
  %3922 = vmatprep.subr.mxu0 0.0
  %3923 = vmatpush1.msra.mxu0 0.0
  %3924 = vmatprep.subr.mxu0 0.0
  %3925 = vmatpush1.msra.mxu0 0.0
  %3926 = vmatprep.subr.mxu0 0.0
  %3927 = vmatpush1.msra.mxu0 0.0
  %3928 = vmatprep.subr.mxu0 0.0
  %3929 = vmatpush1.msra.mxu0 0.0
  %3930 = vmatprep.subr.mxu0 %v3895
  %3931 = vmatpush1.msra.mxu0 %v3894
  %3932 = vmatprep.subr.mxu0 %v3891
  %3933 = vmatpush1.msra.mxu0 %v3890
  %3934 = vmatprep.subr.mxu0 0.0
  %3935 = vmatpush2.msra.mxu0 0.0
  %3936 = vmatprep.subr.mxu0 0.0
  %3937 = vmatpush2.msra.mxu0 0.0
  %3938 = vmatprep.subr.mxu0 0.0
  %3939 = vmatpush2.msra.mxu0 0.0
  %3940 = vmatprep.subr.mxu0 0.0
  %3941 = vmatpush2.msra.mxu0 0.0
  %3942 = vmatprep.subr.mxu0 0.0
  %3943 = vmatpush2.msra.mxu0 0.0
  %3944 = vmatprep.subr.mxu0 0.0
  %3945 = vmatpush2.msra.mxu0 0.0
  %3946 = vmatprep.subr.mxu0 0.0
  %3947 = vmatpush2.msra.mxu0 0.0
  %3948 = vmatprep.subr.mxu0 0.0
  %3949 = vmatpush2.msra.mxu0 0.0
  %3950 = vmatprep.subr.mxu0 0.0
  %3951 = vmatpush2.msra.mxu0 0.0
  %3952 = vmatprep.subr.mxu0 0.0
  %3953 = vmatpush2.msra.mxu0 0.0
  %3954 = vmatprep.subr.mxu0 0.0
  %3955 = vmatpush2.msra.mxu0 0.0
  %3956 = vmatprep.subr.mxu0 0.0
  %3957 = vmatpush2.msra.mxu0 0.0
  %3958 = vmatprep.subr.mxu0 0.0
  %3959 = vmatpush2.msra.mxu0 0.0
  %3960 = vmatprep.subr.mxu0 0.0
  %3961 = vmatpush2.msra.mxu0 0.0
  %3962 = vmatprep.subr.mxu0 0.0
  %3963 = vmatpush2.msra.mxu0 0.0
  %3964 = vmatprep.subr.mxu0 0.0
  %3965 = vmatpush2.msra.mxu0 0.0
  %3966 = vmatprep.mubr.f32.mxu0 0.0
  %3967 = vmatmul.mubr.f32.gmra.mxu0 %v3900
  %v3968 = vpop.f32.mrf.mxu0
  %v3969 = vadd.f32 0.0, %v3968
  %v3970 = vpop.f32.mrf.mxu0
  %v3971 = vadd.f32 0.0, %v3970
  %3972 = vdwg.mxu0
  %3973 = vmatprep.subr.mxu0 0.0
  %3974 = vmatpush1.msra.mxu0 0.0
  %3975 = vmatprep.subr.mxu0 0.0
  %3976 = vmatpush1.msra.mxu0 0.0
  %3977 = vmatprep.subr.mxu0 0.0
  %3978 = vmatpush1.msra.mxu0 0.0
  %3979 = vmatprep.subr.mxu0 0.0
  %3980 = vmatpush1.msra.mxu0 0.0
  %3981 = vmatprep.subr.mxu0 0.0
  %3982 = vmatpush1.msra.mxu0 0.0
  %3983 = vmatprep.subr.mxu0 0.0
  %3984 = vmatpush1.msra.mxu0 0.0
  %3985 = vmatprep.subr.mxu0 0.0
  %3986 = vmatpush1.msra.mxu0 0.0
  %3987 = vmatprep.subr.mxu0 0.0
  %3988 = vmatpush1.msra.mxu0 0.0
  %3989 = vmatprep.subr.mxu0 0.0
  %3990 = vmatpush1.msra.mxu0 0.0
  %3991 = vmatprep.subr.mxu0 0.0
  %3992 = vmatpush1.msra.mxu0 0.0
  %3993 = vmatprep.subr.mxu0 0.0
  %3994 = vmatpush1.msra.mxu0 0.0
  %3995 = vmatprep.subr.mxu0 0.0
  %3996 = vmatpush1.msra.mxu0 0.0
  %3997 = vmatprep.subr.mxu0 0.0
  %3998 = vmatpush1.msra.mxu0 0.0
  %3999 = vmatprep.subr.mxu0 0.0
  %4000 = vmatpush1.msra.mxu0 0.0
  %4001 = vmatprep.subr.mxu0 %v3897
  %4002 = vmatpush1.msra.mxu0 %v3896
  %4003 = vmatprep.subr.mxu0 %v3893
  %4004 = vmatpush1.msra.mxu0 %v3892
  %4005 = vmatprep.subr.mxu0 0.0
  %4006 = vmatpush2.msra.mxu0 0.0
  %4007 = vmatprep.subr.mxu0 0.0
  %4008 = vmatpush2.msra.mxu0 0.0
  %4009 = vmatprep.subr.mxu0 0.0
  %4010 = vmatpush2.msra.mxu0 0.0
  %4011 = vmatprep.subr.mxu0 0.0
  %4012 = vmatpush2.msra.mxu0 0.0
  %4013 = vmatprep.subr.mxu0 0.0
  %4014 = vmatpush2.msra.mxu0 0.0
  %4015 = vmatprep.subr.mxu0 0.0
  %4016 = vmatpush2.msra.mxu0 0.0
  %4017 = vmatprep.subr.mxu0 0.0
  %4018 = vmatpush2.msra.mxu0 0.0
  %4019 = vmatprep.subr.mxu0 0.0
  %4020 = vmatpush2.msra.mxu0 0.0
  %4021 = vmatprep.subr.mxu0 0.0
  %4022 = vmatpush2.msra.mxu0 0.0
  %4023 = vmatprep.subr.mxu0 0.0
  %4024 = vmatpush2.msra.mxu0 0.0
  %4025 = vmatprep.subr.mxu0 0.0
  %4026 = vmatpush2.msra.mxu0 0.0
  %4027 = vmatprep.subr.mxu0 0.0
  %4028 = vmatpush2.msra.mxu0 0.0
  %4029 = vmatprep.subr.mxu0 0.0
  %4030 = vmatpush2.msra.mxu0 0.0
  %4031 = vmatprep.subr.mxu0 0.0
  %4032 = vmatpush2.msra.mxu0 0.0
  %4033 = vmatprep.subr.mxu0 0.0
  %4034 = vmatpush2.msra.mxu0 0.0
  %4035 = vmatprep.subr.mxu0 0.0
  %4036 = vmatpush2.msra.mxu0 0.0
  %4037 = vmatprep.mubr.f32.mxu0 0.0
  %4038 = vmatmul.mubr.f32.gmra.mxu0 %v3900
  %v4039 = vpop.f32.mrf.mxu0
  %v4040 = vadd.f32 0.0, %v4039
  %v4041 = vpop.f32.mrf.mxu0
  %v4042 = vadd.f32 0.0, %v4041
  %4043 = vdwg.mxu0
  %v4044 = vadd.f32 %v3840, %v3969
  %v4045 = vadd.f32 %v3841, %v3971
  %v4046 = vadd.f32 %v3842, %v4040
  %v4047 = vadd.f32 %v3843, %v4042
  %4048 = vset.pattern.permute.xlu0 16
  %4049 = vperm.xlu0 %4048, %v3082
  %v4050 = vpop.permute.xlu0 %4049
  %v4052 = vadd.f32 %v4044, %v4050
  %v4053 = vadd.f32 %v4045, %v4050
  %v4054 = vadd.f32 %v4046, %v4050
  %v4055 = vadd.f32 %v4047, %v4050
  %v4056 = vmax.f32 %v4052, 0.0
  %v4057 = vmax.f32 %v4053, 0.0
  %v4058 = vmax.f32 %v4054, 0.0
  %v4059 = vmax.f32 %v4055, 0.0
  %v4064 = vrot.slane %v4056, 2
  %v4065 = vrot.slane %v4057, 2
  %v4066 = vrot.slane %v4058, 2
  %v4067 = vrot.slane %v4059, 2
  %4072 = vst [vmem:[%s3] sm:$0xc0] %v4064
  %4073 = vst [vmem:[%s3 + $0x8] sm:$0xc0] %v4065
  %4074 = vst [vmem:[%s3 + $0x10] sm:$0xc0] %v4066
  %4075 = vst [vmem:[%s3 + $0x18] sm:$0xc0] %v4067
  %4076 = vst [vmem:[%s3 + $0x20] sm:$0x3] %v4064
  %4077 = vst [vmem:[%s3 + $0x28] sm:$0x3] %v4065
  %4078 = vst [vmem:[%s3 + $0x30] sm:$0x3] %v4066
  %4079 = vst [vmem:[%s3 + $0x38] sm:$0x3] %v4067
  %4080 = vst [vmem:[#allocation2] sm:$0xc0] %v4064
  %4081 = vst [vmem:[#allocation2 + $0x8] sm:$0xc0] %v4065
  %4082 = vst [vmem:[#allocation2 + $0x10] sm:$0xc0] %v4066
  %4083 = vst [vmem:[#allocation2 + $0x18] sm:$0xc0] %v4067
  %4084 = vst [vmem:[#allocation2 + $0x20] sm:$0x3] %v4064
  %4085 = vst [vmem:[#allocation2 + $0x28] sm:$0x3] %v4065
  %4086 = vst [vmem:[#allocation2 + $0x30] sm:$0x3] %v4066
  %4087 = vst [vmem:[#allocation2 + $0x38] sm:$0x3] %v4067
  %v4088 = vld [vmem:[%s1 + $0x68] sm:$0xff]
  %v4089 = vld [vmem:[%s1 + $0x70] sm:$0xff]
  %v4090 = vld [vmem:[#allocation2] sm:$0xff]
  %v4091 = vld [vmem:[#allocation2 + $0x8] sm:$0xff]
  %v4092 = vld [vmem:[#allocation2 + $0x10] sm:$0xff]
  %v4093 = vld [vmem:[#allocation2 + $0x18] sm:$0xff]
  %v4094 = vld [vmem:[#allocation2 + $0x20] sm:$0x3]
  %v4095 = vld [vmem:[#allocation2 + $0x28] sm:$0x3]
  %v4096 = vld [vmem:[#allocation2 + $0x30] sm:$0x3]
  %v4097 = vld [vmem:[#allocation2 + $0x38] sm:$0x3]
  %4099 = vset.pattern.permute.xlu0 10
  %4100 = vperm.xlu0 %4099, %v4088
  %v4101 = vpop.permute.xlu0 %4100
  %4104 = vset.pattern.permute.xlu0 10
  %4105 = vperm.xlu0 %4104, %v4089
  %v4106 = vpop.permute.xlu0 %4105
  %vm4108 = vcmask 80896
  %v4109 = vsel %vm4108, %v4088, 0
  %v4111 = vsel %vm4108, %v4089, 0
  %v4114 = vsel %vm71, %v4094, 0
  %v4117 = vsel %vm71, %v4095, 0
  %v4120 = vsel %vm71, %v4096, 0
  %v4123 = vsel %vm71, %v4097, 0
  %4125 = vmatprep.subr.mxu0 0.0
  %4126 = vmatpush1.msra.mxu0 0.0
  %4127 = vmatprep.subr.mxu0 0.0
  %4128 = vmatpush1.msra.mxu0 0.0
  %4129 = vmatprep.subr.mxu0 0.0
  %4130 = vmatpush1.msra.mxu0 0.0
  %4131 = vmatprep.subr.mxu0 0.0
  %4132 = vmatpush1.msra.mxu0 0.0
  %4133 = vmatprep.subr.mxu0 0.0
  %4134 = vmatpush1.msra.mxu0 0.0
  %4135 = vmatprep.subr.mxu0 0.0
  %4136 = vmatpush1.msra.mxu0 0.0
  %4137 = vmatprep.subr.mxu0 0.0
  %4138 = vmatpush1.msra.mxu0 0.0
  %4139 = vmatprep.subr.mxu0 0.0
  %4140 = vmatpush1.msra.mxu0 0.0
  %4141 = vmatprep.subr.mxu0 0.0
  %4142 = vmatpush1.msra.mxu0 0.0
  %4143 = vmatprep.subr.mxu0 0.0
  %4144 = vmatpush1.msra.mxu0 0.0
  %4145 = vmatprep.subr.mxu0 0.0
  %4146 = vmatpush1.msra.mxu0 0.0
  %4147 = vmatprep.subr.mxu0 0.0
  %4148 = vmatpush1.msra.mxu0 0.0
  %4149 = vmatprep.subr.mxu0 0.0
  %4150 = vmatpush1.msra.mxu0 0.0
  %4151 = vmatprep.subr.mxu0 0.0
  %4152 = vmatpush1.msra.mxu0 0.0
  %4153 = vmatprep.subr.mxu0 %v4117
  %4154 = vmatpush1.msra.mxu0 %v4114
  %4155 = vmatprep.subr.mxu0 %v4091
  %4156 = vmatpush1.msra.mxu0 %v4090
  %4157 = vmatprep.subr.mxu0 0.0
  %4158 = vmatpush2.msra.mxu0 0.0
  %4159 = vmatprep.subr.mxu0 0.0
  %4160 = vmatpush2.msra.mxu0 0.0
  %4161 = vmatprep.subr.mxu0 0.0
  %4162 = vmatpush2.msra.mxu0 0.0
  %4163 = vmatprep.subr.mxu0 0.0
  %4164 = vmatpush2.msra.mxu0 0.0
  %4165 = vmatprep.subr.mxu0 0.0
  %4166 = vmatpush2.msra.mxu0 0.0
  %4167 = vmatprep.subr.mxu0 0.0
  %4168 = vmatpush2.msra.mxu0 0.0
  %4169 = vmatprep.subr.mxu0 0.0
  %4170 = vmatpush2.msra.mxu0 0.0
  %4171 = vmatprep.subr.mxu0 0.0
  %4172 = vmatpush2.msra.mxu0 0.0
  %4173 = vmatprep.subr.mxu0 0.0
  %4174 = vmatpush2.msra.mxu0 0.0
  %4175 = vmatprep.subr.mxu0 0.0
  %4176 = vmatpush2.msra.mxu0 0.0
  %4177 = vmatprep.subr.mxu0 0.0
  %4178 = vmatpush2.msra.mxu0 0.0
  %4179 = vmatprep.subr.mxu0 0.0
  %4180 = vmatpush2.msra.mxu0 0.0
  %4181 = vmatprep.subr.mxu0 0.0
  %4182 = vmatpush2.msra.mxu0 0.0
  %4183 = vmatprep.subr.mxu0 0.0
  %4184 = vmatpush2.msra.mxu0 0.0
  %4185 = vmatprep.subr.mxu0 0.0
  %4186 = vmatpush2.msra.mxu0 0.0
  %4187 = vmatprep.subr.mxu0 0.0
  %4188 = vmatpush2.msra.mxu0 0.0
  %4189 = vmatprep.mubr.f32.mxu0 0.0
  %4190 = vmatmul.mubr.f32.gmra.mxu0 %v4109
  %v4191 = vpop.f32.mrf.mxu0
  %v4192 = vadd.f32 %v4101, %v4191
  %v4193 = vpop.f32.mrf.mxu0
  %v4194 = vadd.f32 %v4101, %v4193
  %4195 = vmatprep.mubr.f32.mxu0 0.0
  %4196 = vmatmul.mubr.f32.gmra.mxu0 %v4111
  %v4197 = vpop.f32.mrf.mxu0
  %v4198 = vadd.f32 %v4106, %v4197
  %v4199 = vpop.f32.mrf.mxu0
  %v4200 = vadd.f32 %v4106, %v4199
  %4201 = vdwg.mxu0
  %4202 = vmatprep.subr.mxu0 0.0
  %4203 = vmatpush1.msra.mxu0 0.0
  %4204 = vmatprep.subr.mxu0 0.0
  %4205 = vmatpush1.msra.mxu0 0.0
  %4206 = vmatprep.subr.mxu0 0.0
  %4207 = vmatpush1.msra.mxu0 0.0
  %4208 = vmatprep.subr.mxu0 0.0
  %4209 = vmatpush1.msra.mxu0 0.0
  %4210 = vmatprep.subr.mxu0 0.0
  %4211 = vmatpush1.msra.mxu0 0.0
  %4212 = vmatprep.subr.mxu0 0.0
  %4213 = vmatpush1.msra.mxu0 0.0
  %4214 = vmatprep.subr.mxu0 0.0
  %4215 = vmatpush1.msra.mxu0 0.0
  %4216 = vmatprep.subr.mxu0 0.0
  %4217 = vmatpush1.msra.mxu0 0.0
  %4218 = vmatprep.subr.mxu0 0.0
  %4219 = vmatpush1.msra.mxu0 0.0
  %4220 = vmatprep.subr.mxu0 0.0
  %4221 = vmatpush1.msra.mxu0 0.0
  %4222 = vmatprep.subr.mxu0 0.0
  %4223 = vmatpush1.msra.mxu0 0.0
  %4224 = vmatprep.subr.mxu0 0.0
  %4225 = vmatpush1.msra.mxu0 0.0
  %4226 = vmatprep.subr.mxu0 0.0
  %4227 = vmatpush1.msra.mxu0 0.0
  %4228 = vmatprep.subr.mxu0 0.0
  %4229 = vmatpush1.msra.mxu0 0.0
  %4230 = vmatprep.subr.mxu0 %v4123
  %4231 = vmatpush1.msra.mxu0 %v4120
  %4232 = vmatprep.subr.mxu0 %v4093
  %4233 = vmatpush1.msra.mxu0 %v4092
  %4234 = vmatprep.subr.mxu0 0.0
  %4235 = vmatpush2.msra.mxu0 0.0
  %4236 = vmatprep.subr.mxu0 0.0
  %4237 = vmatpush2.msra.mxu0 0.0
  %4238 = vmatprep.subr.mxu0 0.0
  %4239 = vmatpush2.msra.mxu0 0.0
  %4240 = vmatprep.subr.mxu0 0.0
  %4241 = vmatpush2.msra.mxu0 0.0
  %4242 = vmatprep.subr.mxu0 0.0
  %4243 = vmatpush2.msra.mxu0 0.0
  %4244 = vmatprep.subr.mxu0 0.0
  %4245 = vmatpush2.msra.mxu0 0.0
  %4246 = vmatprep.subr.mxu0 0.0
  %4247 = vmatpush2.msra.mxu0 0.0
  %4248 = vmatprep.subr.mxu0 0.0
  %4249 = vmatpush2.msra.mxu0 0.0
  %4250 = vmatprep.subr.mxu0 0.0
  %4251 = vmatpush2.msra.mxu0 0.0
  %4252 = vmatprep.subr.mxu0 0.0
  %4253 = vmatpush2.msra.mxu0 0.0
  %4254 = vmatprep.subr.mxu0 0.0
  %4255 = vmatpush2.msra.mxu0 0.0
  %4256 = vmatprep.subr.mxu0 0.0
  %4257 = vmatpush2.msra.mxu0 0.0
  %4258 = vmatprep.subr.mxu0 0.0
  %4259 = vmatpush2.msra.mxu0 0.0
  %4260 = vmatprep.subr.mxu0 0.0
  %4261 = vmatpush2.msra.mxu0 0.0
  %4262 = vmatprep.subr.mxu0 0.0
  %4263 = vmatpush2.msra.mxu0 0.0
  %4264 = vmatprep.subr.mxu0 0.0
  %4265 = vmatpush2.msra.mxu0 0.0
  %4266 = vmatprep.mubr.f32.mxu0 0.0
  %4267 = vmatmul.mubr.f32.gmra.mxu0 %v4109
  %v4268 = vpop.f32.mrf.mxu0
  %v4269 = vadd.f32 %v4101, %v4268
  %v4270 = vpop.f32.mrf.mxu0
  %v4271 = vadd.f32 %v4101, %v4270
  %4272 = vmatprep.mubr.f32.mxu0 0.0
  %4273 = vmatmul.mubr.f32.gmra.mxu0 %v4111
  %v4274 = vpop.f32.mrf.mxu0
  %v4275 = vadd.f32 %v4106, %v4274
  %v4276 = vpop.f32.mrf.mxu0
  %v4277 = vadd.f32 %v4106, %v4276
  %4278 = vdwg.mxu0
  %v4279 = vmax.f32 %v4192, 0.0
  %v4280 = vmax.f32 %v4194, 0.0
  %v4281 = vmax.f32 %v4269, 0.0
  %v4282 = vmax.f32 %v4271, 0.0
  %v4283 = vmax.f32 %v4198, 0.0
  %v4284 = vmax.f32 %v4200, 0.0
  %v4285 = vmax.f32 %v4275, 0.0
  %v4286 = vmax.f32 %v4277, 0.0
  %4287 = vrot.lane.b32.xlu0 %v4279, 17
  %v4288 = vpop.permute.xlu0 %4287
  %4289 = vrot.lane.b32.xlu0 %v4283, 17
  %v4290 = vpop.permute.xlu0 %4289
  %4291 = vrot.lane.b32.xlu0 %v4280, 17
  %v4292 = vpop.permute.xlu0 %4291
  %4293 = vrot.lane.b32.xlu0 %v4284, 17
  %v4294 = vpop.permute.xlu0 %4293
  %4295 = vrot.lane.b32.xlu0 %v4281, 17
  %v4296 = vpop.permute.xlu0 %4295
  %4297 = vrot.lane.b32.xlu0 %v4285, 17
  %v4298 = vpop.permute.xlu0 %4297
  %4299 = vrot.lane.b32.xlu0 %v4282, 17
  %v4300 = vpop.permute.xlu0 %4299
  %4301 = vrot.lane.b32.xlu0 %v4286, 17
  %v4302 = vpop.permute.xlu0 %4301
  %v4303 = vsel %vm264, %v4296, %v4300
  %v4304 = vsel %vm264, %v4298, %v4302
  %v4305 = vsel %vm264, %v4292, %v4296
  %v4306 = vsel %vm264, %v4294, %v4298
  %v4307 = vsel %vm264, %v4288, %v4292
  %v4308 = vsel %vm264, %v4290, %v4294
  %v4309 = vsel %vm264, %v4300, %v4288
  %v4310 = vsel %vm264, %v4302, %v4290
  %v4311 = vld [vmem:[%s2] ss:$8 sm:$0xf]
  %v4313 = vlaneseq
  %v4314 = vshrl.u32 %v4313, 7
  %v4315 = vsub.s32 0, %v4314
  %v4316 = vrot.slane %v4311, %v4315
  %v4317 = vlaneseq
  %v4318 = vshrl.u32 %v4317, 7
  %v4319 = vsub.s32 1, %v4318
  %v4320 = vrot.slane %v4311, %v4319
  %v4321 = vlaneseq
  %v4322 = vshrl.u32 %v4321, 7
  %v4323 = vsub.s32 2, %v4322
  %v4324 = vrot.slane %v4311, %v4323
  %v4325 = vlaneseq
  %v4326 = vshrl.u32 %v4325, 7
  %v4327 = vsub.s32 3, %v4326
  %v4328 = vrot.slane %v4311, %v4327
  %v4333 = vmul.f32 %v4309, %v4316
  %v4334 = vmul.f32 %v4307, %v4320
  %v4335 = vmul.f32 %v4305, %v4324
  %v4336 = vmul.f32 %v4303, %v4328
  %v4337 = vmul.f32 %v4310, %v4316
  %v4338 = vmul.f32 %v4308, %v4320
  %v4339 = vmul.f32 %v4306, %v4324
  %v4340 = vmul.f32 %v4304, %v4328
  %v4341 = vld [vmem:[%s1 + $0x78] sm:$0xf]
  %4342 = vrot.lane.b32.xlu0 %v4279, 16
  %v4343 = vpop.permute.xlu0 %4342
  %4344 = vrot.lane.b32.xlu0 %v4283, 16
  %v4345 = vpop.permute.xlu0 %4344
  %4346 = vrot.lane.b32.xlu0 %v4280, 16
  %v4347 = vpop.permute.xlu0 %4346
  %4348 = vrot.lane.b32.xlu0 %v4284, 16
  %v4349 = vpop.permute.xlu0 %4348
  %4350 = vrot.lane.b32.xlu0 %v4281, 16
  %v4351 = vpop.permute.xlu0 %4350
  %4352 = vrot.lane.b32.xlu0 %v4285, 16
  %v4353 = vpop.permute.xlu0 %4352
  %4354 = vrot.lane.b32.xlu0 %v4282, 16
  %v4355 = vpop.permute.xlu0 %4354
  %4356 = vrot.lane.b32.xlu0 %v4286, 16
  %v4357 = vpop.permute.xlu0 %4356
  %v4358 = vsel %vm320, %v4351, %v4355
  %v4359 = vsel %vm320, %v4353, %v4357
  %v4360 = vsel %vm320, %v4347, %v4351
  %v4361 = vsel %vm320, %v4349, %v4353
  %v4362 = vsel %vm320, %v4343, %v4347
  %v4363 = vsel %vm320, %v4345, %v4349
  %v4364 = vsel %vm320, %v4355, %v4343
  %v4365 = vsel %vm320, %v4357, %v4345
  %v4366 = vld [vmem:[%s329] ss:$8 sm:$0xf]
  %v4368 = vlaneseq
  %v4369 = vshrl.u32 %v4368, 7
  %v4370 = vsub.s32 0, %v4369
  %v4371 = vrot.slane %v4366, %v4370
  %v4372 = vlaneseq
  %v4373 = vshrl.u32 %v4372, 7
  %v4374 = vsub.s32 1, %v4373
  %v4375 = vrot.slane %v4366, %v4374
  %v4376 = vlaneseq
  %v4377 = vshrl.u32 %v4376, 7
  %v4378 = vsub.s32 2, %v4377
  %v4379 = vrot.slane %v4366, %v4378
  %v4380 = vlaneseq
  %v4381 = vshrl.u32 %v4380, 7
  %v4382 = vsub.s32 3, %v4381
  %v4383 = vrot.slane %v4366, %v4382
  %v4388 = vmul.f32 %v4364, %v4371
  %v4389 = vmul.f32 %v4362, %v4375
  %v4390 = vmul.f32 %v4360, %v4379
  %v4391 = vmul.f32 %v4358, %v4383
  %v4392 = vmul.f32 %v4365, %v4371
  %v4393 = vmul.f32 %v4363, %v4375
  %v4394 = vmul.f32 %v4361, %v4379
  %v4395 = vmul.f32 %v4359, %v4383
  %v4396 = vld [vmem:[%s1 + $0x7c] sm:$0xf]
  %v4398 = vsel %vm361, %v4396, 0
  %4400 = vmatprep.subr.mxu0 0.0
  %4401 = vmatpush1.msra.mxu0 0.0
  %4402 = vmatprep.subr.mxu0 0.0
  %4403 = vmatpush1.msra.mxu0 0.0
  %4404 = vmatprep.subr.mxu0 0.0
  %4405 = vmatpush1.msra.mxu0 0.0
  %4406 = vmatprep.subr.mxu0 0.0
  %4407 = vmatpush1.msra.mxu0 0.0
  %4408 = vmatprep.subr.mxu0 0.0
  %4409 = vmatpush1.msra.mxu0 0.0
  %4410 = vmatprep.subr.mxu0 0.0
  %4411 = vmatpush1.msra.mxu0 0.0
  %4412 = vmatprep.subr.mxu0 0.0
  %4413 = vmatpush1.msra.mxu0 0.0
  %4414 = vmatprep.subr.mxu0 0.0
  %4415 = vmatpush1.msra.mxu0 0.0
  %4416 = vmatprep.subr.mxu0 0.0
  %4417 = vmatpush1.msra.mxu0 0.0
  %4418 = vmatprep.subr.mxu0 0.0
  %4419 = vmatpush1.msra.mxu0 0.0
  %4420 = vmatprep.subr.mxu0 0.0
  %4421 = vmatpush1.msra.mxu0 0.0
  %4422 = vmatprep.subr.mxu0 0.0
  %4423 = vmatpush1.msra.mxu0 0.0
  %4424 = vmatprep.subr.mxu0 0.0
  %4425 = vmatpush1.msra.mxu0 0.0
  %4426 = vmatprep.subr.mxu0 0.0
  %4427 = vmatpush1.msra.mxu0 0.0
  %4428 = vmatprep.subr.mxu0 %v4393
  %4429 = vmatpush1.msra.mxu0 %v4392
  %4430 = vmatprep.subr.mxu0 %v4389
  %4431 = vmatpush1.msra.mxu0 %v4388
  %4432 = vmatprep.subr.mxu0 0.0
  %4433 = vmatpush2.msra.mxu0 0.0
  %4434 = vmatprep.subr.mxu0 0.0
  %4435 = vmatpush2.msra.mxu0 0.0
  %4436 = vmatprep.subr.mxu0 0.0
  %4437 = vmatpush2.msra.mxu0 0.0
  %4438 = vmatprep.subr.mxu0 0.0
  %4439 = vmatpush2.msra.mxu0 0.0
  %4440 = vmatprep.subr.mxu0 0.0
  %4441 = vmatpush2.msra.mxu0 0.0
  %4442 = vmatprep.subr.mxu0 0.0
  %4443 = vmatpush2.msra.mxu0 0.0
  %4444 = vmatprep.subr.mxu0 0.0
  %4445 = vmatpush2.msra.mxu0 0.0
  %4446 = vmatprep.subr.mxu0 0.0
  %4447 = vmatpush2.msra.mxu0 0.0
  %4448 = vmatprep.subr.mxu0 0.0
  %4449 = vmatpush2.msra.mxu0 0.0
  %4450 = vmatprep.subr.mxu0 0.0
  %4451 = vmatpush2.msra.mxu0 0.0
  %4452 = vmatprep.subr.mxu0 0.0
  %4453 = vmatpush2.msra.mxu0 0.0
  %4454 = vmatprep.subr.mxu0 0.0
  %4455 = vmatpush2.msra.mxu0 0.0
  %4456 = vmatprep.subr.mxu0 0.0
  %4457 = vmatpush2.msra.mxu0 0.0
  %4458 = vmatprep.subr.mxu0 0.0
  %4459 = vmatpush2.msra.mxu0 0.0
  %4460 = vmatprep.subr.mxu0 0.0
  %4461 = vmatpush2.msra.mxu0 0.0
  %4462 = vmatprep.subr.mxu0 0.0
  %4463 = vmatpush2.msra.mxu0 0.0
  %4464 = vmatprep.mubr.f32.mxu0 0.0
  %4465 = vmatmul.mubr.f32.gmra.mxu0 %v4398
  %v4466 = vpop.f32.mrf.mxu0
  %v4467 = vadd.f32 0.0, %v4466
  %v4468 = vpop.f32.mrf.mxu0
  %v4469 = vadd.f32 0.0, %v4468
  %4470 = vdwg.mxu0
  %4471 = vmatprep.subr.mxu0 0.0
  %4472 = vmatpush1.msra.mxu0 0.0
  %4473 = vmatprep.subr.mxu0 0.0
  %4474 = vmatpush1.msra.mxu0 0.0
  %4475 = vmatprep.subr.mxu0 0.0
  %4476 = vmatpush1.msra.mxu0 0.0
  %4477 = vmatprep.subr.mxu0 0.0
  %4478 = vmatpush1.msra.mxu0 0.0
  %4479 = vmatprep.subr.mxu0 0.0
  %4480 = vmatpush1.msra.mxu0 0.0
  %4481 = vmatprep.subr.mxu0 0.0
  %4482 = vmatpush1.msra.mxu0 0.0
  %4483 = vmatprep.subr.mxu0 0.0
  %4484 = vmatpush1.msra.mxu0 0.0
  %4485 = vmatprep.subr.mxu0 0.0
  %4486 = vmatpush1.msra.mxu0 0.0
  %4487 = vmatprep.subr.mxu0 0.0
  %4488 = vmatpush1.msra.mxu0 0.0
  %4489 = vmatprep.subr.mxu0 0.0
  %4490 = vmatpush1.msra.mxu0 0.0
  %4491 = vmatprep.subr.mxu0 0.0
  %4492 = vmatpush1.msra.mxu0 0.0
  %4493 = vmatprep.subr.mxu0 0.0
  %4494 = vmatpush1.msra.mxu0 0.0
  %4495 = vmatprep.subr.mxu0 0.0
  %4496 = vmatpush1.msra.mxu0 0.0
  %4497 = vmatprep.subr.mxu0 0.0
  %4498 = vmatpush1.msra.mxu0 0.0
  %4499 = vmatprep.subr.mxu0 %v4395
  %4500 = vmatpush1.msra.mxu0 %v4394
  %4501 = vmatprep.subr.mxu0 %v4391
  %4502 = vmatpush1.msra.mxu0 %v4390
  %4503 = vmatprep.subr.mxu0 0.0
  %4504 = vmatpush2.msra.mxu0 0.0
  %4505 = vmatprep.subr.mxu0 0.0
  %4506 = vmatpush2.msra.mxu0 0.0
  %4507 = vmatprep.subr.mxu0 0.0
  %4508 = vmatpush2.msra.mxu0 0.0
  %4509 = vmatprep.subr.mxu0 0.0
  %4510 = vmatpush2.msra.mxu0 0.0
  %4511 = vmatprep.subr.mxu0 0.0
  %4512 = vmatpush2.msra.mxu0 0.0
  %4513 = vmatprep.subr.mxu0 0.0
  %4514 = vmatpush2.msra.mxu0 0.0
  %4515 = vmatprep.subr.mxu0 0.0
  %4516 = vmatpush2.msra.mxu0 0.0
  %4517 = vmatprep.subr.mxu0 0.0
  %4518 = vmatpush2.msra.mxu0 0.0
  %4519 = vmatprep.subr.mxu0 0.0
  %4520 = vmatpush2.msra.mxu0 0.0
  %4521 = vmatprep.subr.mxu0 0.0
  %4522 = vmatpush2.msra.mxu0 0.0
  %4523 = vmatprep.subr.mxu0 0.0
  %4524 = vmatpush2.msra.mxu0 0.0
  %4525 = vmatprep.subr.mxu0 0.0
  %4526 = vmatpush2.msra.mxu0 0.0
  %4527 = vmatprep.subr.mxu0 0.0
  %4528 = vmatpush2.msra.mxu0 0.0
  %4529 = vmatprep.subr.mxu0 0.0
  %4530 = vmatpush2.msra.mxu0 0.0
  %4531 = vmatprep.subr.mxu0 0.0
  %4532 = vmatpush2.msra.mxu0 0.0
  %4533 = vmatprep.subr.mxu0 0.0
  %4534 = vmatpush2.msra.mxu0 0.0
  %4535 = vmatprep.mubr.f32.mxu0 0.0
  %4536 = vmatmul.mubr.f32.gmra.mxu0 %v4398
  %v4537 = vpop.f32.mrf.mxu0
  %v4538 = vadd.f32 0.0, %v4537
  %v4539 = vpop.f32.mrf.mxu0
  %v4540 = vadd.f32 0.0, %v4539
  %4541 = vdwg.mxu0
  %v4543 = vsel %vm361, %v4341, 0
  %4545 = vmatprep.subr.mxu0 0.0
  %4546 = vmatpush1.msra.mxu0 0.0
  %4547 = vmatprep.subr.mxu0 0.0
  %4548 = vmatpush1.msra.mxu0 0.0
  %4549 = vmatprep.subr.mxu0 0.0
  %4550 = vmatpush1.msra.mxu0 0.0
  %4551 = vmatprep.subr.mxu0 0.0
  %4552 = vmatpush1.msra.mxu0 0.0
  %4553 = vmatprep.subr.mxu0 0.0
  %4554 = vmatpush1.msra.mxu0 0.0
  %4555 = vmatprep.subr.mxu0 0.0
  %4556 = vmatpush1.msra.mxu0 0.0
  %4557 = vmatprep.subr.mxu0 0.0
  %4558 = vmatpush1.msra.mxu0 0.0
  %4559 = vmatprep.subr.mxu0 0.0
  %4560 = vmatpush1.msra.mxu0 0.0
  %4561 = vmatprep.subr.mxu0 0.0
  %4562 = vmatpush1.msra.mxu0 0.0
  %4563 = vmatprep.subr.mxu0 0.0
  %4564 = vmatpush1.msra.mxu0 0.0
  %4565 = vmatprep.subr.mxu0 0.0
  %4566 = vmatpush1.msra.mxu0 0.0
  %4567 = vmatprep.subr.mxu0 0.0
  %4568 = vmatpush1.msra.mxu0 0.0
  %4569 = vmatprep.subr.mxu0 0.0
  %4570 = vmatpush1.msra.mxu0 0.0
  %4571 = vmatprep.subr.mxu0 0.0
  %4572 = vmatpush1.msra.mxu0 0.0
  %4573 = vmatprep.subr.mxu0 %v4338
  %4574 = vmatpush1.msra.mxu0 %v4337
  %4575 = vmatprep.subr.mxu0 %v4334
  %4576 = vmatpush1.msra.mxu0 %v4333
  %4577 = vmatprep.subr.mxu0 0.0
  %4578 = vmatpush2.msra.mxu0 0.0
  %4579 = vmatprep.subr.mxu0 0.0
  %4580 = vmatpush2.msra.mxu0 0.0
  %4581 = vmatprep.subr.mxu0 0.0
  %4582 = vmatpush2.msra.mxu0 0.0
  %4583 = vmatprep.subr.mxu0 0.0
  %4584 = vmatpush2.msra.mxu0 0.0
  %4585 = vmatprep.subr.mxu0 0.0
  %4586 = vmatpush2.msra.mxu0 0.0
  %4587 = vmatprep.subr.mxu0 0.0
  %4588 = vmatpush2.msra.mxu0 0.0
  %4589 = vmatprep.subr.mxu0 0.0
  %4590 = vmatpush2.msra.mxu0 0.0
  %4591 = vmatprep.subr.mxu0 0.0
  %4592 = vmatpush2.msra.mxu0 0.0
  %4593 = vmatprep.subr.mxu0 0.0
  %4594 = vmatpush2.msra.mxu0 0.0
  %4595 = vmatprep.subr.mxu0 0.0
  %4596 = vmatpush2.msra.mxu0 0.0
  %4597 = vmatprep.subr.mxu0 0.0
  %4598 = vmatpush2.msra.mxu0 0.0
  %4599 = vmatprep.subr.mxu0 0.0
  %4600 = vmatpush2.msra.mxu0 0.0
  %4601 = vmatprep.subr.mxu0 0.0
  %4602 = vmatpush2.msra.mxu0 0.0
  %4603 = vmatprep.subr.mxu0 0.0
  %4604 = vmatpush2.msra.mxu0 0.0
  %4605 = vmatprep.subr.mxu0 0.0
  %4606 = vmatpush2.msra.mxu0 0.0
  %4607 = vmatprep.subr.mxu0 0.0
  %4608 = vmatpush2.msra.mxu0 0.0
  %4609 = vmatprep.mubr.f32.mxu0 0.0
  %4610 = vmatmul.mubr.f32.gmra.mxu0 %v4543
  %v4611 = vpop.f32.mrf.mxu0
  %v4612 = vadd.f32 %v4467, %v4611
  %v4613 = vpop.f32.mrf.mxu0
  %v4614 = vadd.f32 %v4469, %v4613
  %4615 = vdwg.mxu0
  %4616 = vmatprep.subr.mxu0 0.0
  %4617 = vmatpush1.msra.mxu0 0.0
  %4618 = vmatprep.subr.mxu0 0.0
  %4619 = vmatpush1.msra.mxu0 0.0
  %4620 = vmatprep.subr.mxu0 0.0
  %4621 = vmatpush1.msra.mxu0 0.0
  %4622 = vmatprep.subr.mxu0 0.0
  %4623 = vmatpush1.msra.mxu0 0.0
  %4624 = vmatprep.subr.mxu0 0.0
  %4625 = vmatpush1.msra.mxu0 0.0
  %4626 = vmatprep.subr.mxu0 0.0
  %4627 = vmatpush1.msra.mxu0 0.0
  %4628 = vmatprep.subr.mxu0 0.0
  %4629 = vmatpush1.msra.mxu0 0.0
  %4630 = vmatprep.subr.mxu0 0.0
  %4631 = vmatpush1.msra.mxu0 0.0
  %4632 = vmatprep.subr.mxu0 0.0
  %4633 = vmatpush1.msra.mxu0 0.0
  %4634 = vmatprep.subr.mxu0 0.0
  %4635 = vmatpush1.msra.mxu0 0.0
  %4636 = vmatprep.subr.mxu0 0.0
  %4637 = vmatpush1.msra.mxu0 0.0
  %4638 = vmatprep.subr.mxu0 0.0
  %4639 = vmatpush1.msra.mxu0 0.0
  %4640 = vmatprep.subr.mxu0 0.0
  %4641 = vmatpush1.msra.mxu0 0.0
  %4642 = vmatprep.subr.mxu0 0.0
  %4643 = vmatpush1.msra.mxu0 0.0
  %4644 = vmatprep.subr.mxu0 %v4340
  %4645 = vmatpush1.msra.mxu0 %v4339
  %4646 = vmatprep.subr.mxu0 %v4336
  %4647 = vmatpush1.msra.mxu0 %v4335
  %4648 = vmatprep.subr.mxu0 0.0
  %4649 = vmatpush2.msra.mxu0 0.0
  %4650 = vmatprep.subr.mxu0 0.0
  %4651 = vmatpush2.msra.mxu0 0.0
  %4652 = vmatprep.subr.mxu0 0.0
  %4653 = vmatpush2.msra.mxu0 0.0
  %4654 = vmatprep.subr.mxu0 0.0
  %4655 = vmatpush2.msra.mxu0 0.0
  %4656 = vmatprep.subr.mxu0 0.0
  %4657 = vmatpush2.msra.mxu0 0.0
  %4658 = vmatprep.subr.mxu0 0.0
  %4659 = vmatpush2.msra.mxu0 0.0
  %4660 = vmatprep.subr.mxu0 0.0
  %4661 = vmatpush2.msra.mxu0 0.0
  %4662 = vmatprep.subr.mxu0 0.0
  %4663 = vmatpush2.msra.mxu0 0.0
  %4664 = vmatprep.subr.mxu0 0.0
  %4665 = vmatpush2.msra.mxu0 0.0
  %4666 = vmatprep.subr.mxu0 0.0
  %4667 = vmatpush2.msra.mxu0 0.0
  %4668 = vmatprep.subr.mxu0 0.0
  %4669 = vmatpush2.msra.mxu0 0.0
  %4670 = vmatprep.subr.mxu0 0.0
  %4671 = vmatpush2.msra.mxu0 0.0
  %4672 = vmatprep.subr.mxu0 0.0
  %4673 = vmatpush2.msra.mxu0 0.0
  %4674 = vmatprep.subr.mxu0 0.0
  %4675 = vmatpush2.msra.mxu0 0.0
  %4676 = vmatprep.subr.mxu0 0.0
  %4677 = vmatpush2.msra.mxu0 0.0
  %4678 = vmatprep.subr.mxu0 0.0
  %4679 = vmatpush2.msra.mxu0 0.0
  %4680 = vmatprep.mubr.f32.mxu0 0.0
  %4681 = vmatmul.mubr.f32.gmra.mxu0 %v4543
  %v4682 = vpop.f32.mrf.mxu0
  %v4683 = vadd.f32 %v4538, %v4682
  %v4684 = vpop.f32.mrf.mxu0
  %v4685 = vadd.f32 %v4540, %v4684
  %4686 = vdwg.mxu0
  %4687 = vrot.lane.b32.xlu0 %v4279, 15
  %v4688 = vpop.permute.xlu0 %4687
  %4689 = vrot.lane.b32.xlu0 %v4283, 15
  %v4690 = vpop.permute.xlu0 %4689
  %4691 = vrot.lane.b32.xlu0 %v4280, 15
  %v4692 = vpop.permute.xlu0 %4691
  %4693 = vrot.lane.b32.xlu0 %v4284, 15
  %v4694 = vpop.permute.xlu0 %4693
  %4695 = vrot.lane.b32.xlu0 %v4281, 15
  %v4696 = vpop.permute.xlu0 %4695
  %4697 = vrot.lane.b32.xlu0 %v4285, 15
  %v4698 = vpop.permute.xlu0 %4697
  %4699 = vrot.lane.b32.xlu0 %v4282, 15
  %v4700 = vpop.permute.xlu0 %4699
  %4701 = vrot.lane.b32.xlu0 %v4286, 15
  %v4702 = vpop.permute.xlu0 %4701
  %v4703 = vsel %vm668, %v4696, %v4700
  %v4704 = vsel %vm668, %v4698, %v4702
  %v4705 = vsel %vm668, %v4692, %v4696
  %v4706 = vsel %vm668, %v4694, %v4698
  %v4707 = vsel %vm668, %v4688, %v4692
  %v4708 = vsel %vm668, %v4690, %v4694
  %v4709 = vsel %vm668, %v4700, %v4688
  %v4710 = vsel %vm668, %v4702, %v4690
  %v4711 = vld [vmem:[%s677] ss:$8 sm:$0xf]
  %v4713 = vlaneseq
  %v4714 = vshrl.u32 %v4713, 7
  %v4715 = vsub.s32 0, %v4714
  %v4716 = vrot.slane %v4711, %v4715
  %v4717 = vlaneseq
  %v4718 = vshrl.u32 %v4717, 7
  %v4719 = vsub.s32 1, %v4718
  %v4720 = vrot.slane %v4711, %v4719
  %v4721 = vlaneseq
  %v4722 = vshrl.u32 %v4721, 7
  %v4723 = vsub.s32 2, %v4722
  %v4724 = vrot.slane %v4711, %v4723
  %v4725 = vlaneseq
  %v4726 = vshrl.u32 %v4725, 7
  %v4727 = vsub.s32 3, %v4726
  %v4728 = vrot.slane %v4711, %v4727
  %v4733 = vmul.f32 %v4709, %v4716
  %v4734 = vmul.f32 %v4707, %v4720
  %v4735 = vmul.f32 %v4705, %v4724
  %v4736 = vmul.f32 %v4703, %v4728
  %v4737 = vmul.f32 %v4710, %v4716
  %v4738 = vmul.f32 %v4708, %v4720
  %v4739 = vmul.f32 %v4706, %v4724
  %v4740 = vmul.f32 %v4704, %v4728
  %v4741 = vld [vmem:[%s1 + $0x80] sm:$0xf]
  %v4743 = vsel %vm361, %v4741, 0
  %4745 = vmatprep.subr.mxu0 0.0
  %4746 = vmatpush1.msra.mxu0 0.0
  %4747 = vmatprep.subr.mxu0 0.0
  %4748 = vmatpush1.msra.mxu0 0.0
  %4749 = vmatprep.subr.mxu0 0.0
  %4750 = vmatpush1.msra.mxu0 0.0
  %4751 = vmatprep.subr.mxu0 0.0
  %4752 = vmatpush1.msra.mxu0 0.0
  %4753 = vmatprep.subr.mxu0 0.0
  %4754 = vmatpush1.msra.mxu0 0.0
  %4755 = vmatprep.subr.mxu0 0.0
  %4756 = vmatpush1.msra.mxu0 0.0
  %4757 = vmatprep.subr.mxu0 0.0
  %4758 = vmatpush1.msra.mxu0 0.0
  %4759 = vmatprep.subr.mxu0 0.0
  %4760 = vmatpush1.msra.mxu0 0.0
  %4761 = vmatprep.subr.mxu0 0.0
  %4762 = vmatpush1.msra.mxu0 0.0
  %4763 = vmatprep.subr.mxu0 0.0
  %4764 = vmatpush1.msra.mxu0 0.0
  %4765 = vmatprep.subr.mxu0 0.0
  %4766 = vmatpush1.msra.mxu0 0.0
  %4767 = vmatprep.subr.mxu0 0.0
  %4768 = vmatpush1.msra.mxu0 0.0
  %4769 = vmatprep.subr.mxu0 0.0
  %4770 = vmatpush1.msra.mxu0 0.0
  %4771 = vmatprep.subr.mxu0 0.0
  %4772 = vmatpush1.msra.mxu0 0.0
  %4773 = vmatprep.subr.mxu0 %v4738
  %4774 = vmatpush1.msra.mxu0 %v4737
  %4775 = vmatprep.subr.mxu0 %v4734
  %4776 = vmatpush1.msra.mxu0 %v4733
  %4777 = vmatprep.subr.mxu0 0.0
  %4778 = vmatpush2.msra.mxu0 0.0
  %4779 = vmatprep.subr.mxu0 0.0
  %4780 = vmatpush2.msra.mxu0 0.0
  %4781 = vmatprep.subr.mxu0 0.0
  %4782 = vmatpush2.msra.mxu0 0.0
  %4783 = vmatprep.subr.mxu0 0.0
  %4784 = vmatpush2.msra.mxu0 0.0
  %4785 = vmatprep.subr.mxu0 0.0
  %4786 = vmatpush2.msra.mxu0 0.0
  %4787 = vmatprep.subr.mxu0 0.0
  %4788 = vmatpush2.msra.mxu0 0.0
  %4789 = vmatprep.subr.mxu0 0.0
  %4790 = vmatpush2.msra.mxu0 0.0
  %4791 = vmatprep.subr.mxu0 0.0
  %4792 = vmatpush2.msra.mxu0 0.0
  %4793 = vmatprep.subr.mxu0 0.0
  %4794 = vmatpush2.msra.mxu0 0.0
  %4795 = vmatprep.subr.mxu0 0.0
  %4796 = vmatpush2.msra.mxu0 0.0
  %4797 = vmatprep.subr.mxu0 0.0
  %4798 = vmatpush2.msra.mxu0 0.0
  %4799 = vmatprep.subr.mxu0 0.0
  %4800 = vmatpush2.msra.mxu0 0.0
  %4801 = vmatprep.subr.mxu0 0.0
  %4802 = vmatpush2.msra.mxu0 0.0
  %4803 = vmatprep.subr.mxu0 0.0
  %4804 = vmatpush2.msra.mxu0 0.0
  %4805 = vmatprep.subr.mxu0 0.0
  %4806 = vmatpush2.msra.mxu0 0.0
  %4807 = vmatprep.subr.mxu0 0.0
  %4808 = vmatpush2.msra.mxu0 0.0
  %4809 = vmatprep.mubr.f32.mxu0 0.0
  %4810 = vmatmul.mubr.f32.gmra.mxu0 %v4743
  %v4811 = vpop.f32.mrf.mxu0
  %v4812 = vadd.f32 0.0, %v4811
  %v4813 = vpop.f32.mrf.mxu0
  %v4814 = vadd.f32 0.0, %v4813
  %4815 = vdwg.mxu0
  %4816 = vmatprep.subr.mxu0 0.0
  %4817 = vmatpush1.msra.mxu0 0.0
  %4818 = vmatprep.subr.mxu0 0.0
  %4819 = vmatpush1.msra.mxu0 0.0
  %4820 = vmatprep.subr.mxu0 0.0
  %4821 = vmatpush1.msra.mxu0 0.0
  %4822 = vmatprep.subr.mxu0 0.0
  %4823 = vmatpush1.msra.mxu0 0.0
  %4824 = vmatprep.subr.mxu0 0.0
  %4825 = vmatpush1.msra.mxu0 0.0
  %4826 = vmatprep.subr.mxu0 0.0
  %4827 = vmatpush1.msra.mxu0 0.0
  %4828 = vmatprep.subr.mxu0 0.0
  %4829 = vmatpush1.msra.mxu0 0.0
  %4830 = vmatprep.subr.mxu0 0.0
  %4831 = vmatpush1.msra.mxu0 0.0
  %4832 = vmatprep.subr.mxu0 0.0
  %4833 = vmatpush1.msra.mxu0 0.0
  %4834 = vmatprep.subr.mxu0 0.0
  %4835 = vmatpush1.msra.mxu0 0.0
  %4836 = vmatprep.subr.mxu0 0.0
  %4837 = vmatpush1.msra.mxu0 0.0
  %4838 = vmatprep.subr.mxu0 0.0
  %4839 = vmatpush1.msra.mxu0 0.0
  %4840 = vmatprep.subr.mxu0 0.0
  %4841 = vmatpush1.msra.mxu0 0.0
  %4842 = vmatprep.subr.mxu0 0.0
  %4843 = vmatpush1.msra.mxu0 0.0
  %4844 = vmatprep.subr.mxu0 %v4740
  %4845 = vmatpush1.msra.mxu0 %v4739
  %4846 = vmatprep.subr.mxu0 %v4736
  %4847 = vmatpush1.msra.mxu0 %v4735
  %4848 = vmatprep.subr.mxu0 0.0
  %4849 = vmatpush2.msra.mxu0 0.0
  %4850 = vmatprep.subr.mxu0 0.0
  %4851 = vmatpush2.msra.mxu0 0.0
  %4852 = vmatprep.subr.mxu0 0.0
  %4853 = vmatpush2.msra.mxu0 0.0
  %4854 = vmatprep.subr.mxu0 0.0
  %4855 = vmatpush2.msra.mxu0 0.0
  %4856 = vmatprep.subr.mxu0 0.0
  %4857 = vmatpush2.msra.mxu0 0.0
  %4858 = vmatprep.subr.mxu0 0.0
  %4859 = vmatpush2.msra.mxu0 0.0
  %4860 = vmatprep.subr.mxu0 0.0
  %4861 = vmatpush2.msra.mxu0 0.0
  %4862 = vmatprep.subr.mxu0 0.0
  %4863 = vmatpush2.msra.mxu0 0.0
  %4864 = vmatprep.subr.mxu0 0.0
  %4865 = vmatpush2.msra.mxu0 0.0
  %4866 = vmatprep.subr.mxu0 0.0
  %4867 = vmatpush2.msra.mxu0 0.0
  %4868 = vmatprep.subr.mxu0 0.0
  %4869 = vmatpush2.msra.mxu0 0.0
  %4870 = vmatprep.subr.mxu0 0.0
  %4871 = vmatpush2.msra.mxu0 0.0
  %4872 = vmatprep.subr.mxu0 0.0
  %4873 = vmatpush2.msra.mxu0 0.0
  %4874 = vmatprep.subr.mxu0 0.0
  %4875 = vmatpush2.msra.mxu0 0.0
  %4876 = vmatprep.subr.mxu0 0.0
  %4877 = vmatpush2.msra.mxu0 0.0
  %4878 = vmatprep.subr.mxu0 0.0
  %4879 = vmatpush2.msra.mxu0 0.0
  %4880 = vmatprep.mubr.f32.mxu0 0.0
  %4881 = vmatmul.mubr.f32.gmra.mxu0 %v4743
  %v4882 = vpop.f32.mrf.mxu0
  %v4883 = vadd.f32 0.0, %v4882
  %v4884 = vpop.f32.mrf.mxu0
  %v4885 = vadd.f32 0.0, %v4884
  %4886 = vdwg.mxu0
  %v4887 = vadd.f32 %v4612, %v4812
  %v4888 = vadd.f32 %v4614, %v4814
  %v4889 = vadd.f32 %v4683, %v4883
  %v4890 = vadd.f32 %v4685, %v4885
  %4891 = vrot.lane.b32.xlu0 %v4279, 1
  %v4892 = vpop.permute.xlu0 %4891
  %4893 = vrot.lane.b32.xlu0 %v4283, 1
  %v4894 = vpop.permute.xlu0 %4893
  %4895 = vrot.lane.b32.xlu0 %v4280, 1
  %v4896 = vpop.permute.xlu0 %4895
  %4897 = vrot.lane.b32.xlu0 %v4284, 1
  %v4898 = vpop.permute.xlu0 %4897
  %4899 = vrot.lane.b32.xlu0 %v4281, 1
  %v4900 = vpop.permute.xlu0 %4899
  %4901 = vrot.lane.b32.xlu0 %v4285, 1
  %v4902 = vpop.permute.xlu0 %4901
  %4903 = vrot.lane.b32.xlu0 %v4282, 1
  %v4904 = vpop.permute.xlu0 %4903
  %4905 = vrot.lane.b32.xlu0 %v4286, 1
  %v4906 = vpop.permute.xlu0 %4905
  %v4907 = vsel %vm874, %v4900, %v4904
  %v4908 = vsel %vm874, %v4902, %v4906
  %v4909 = vsel %vm874, %v4896, %v4900
  %v4910 = vsel %vm874, %v4898, %v4902
  %v4911 = vsel %vm874, %v4892, %v4896
  %v4912 = vsel %vm874, %v4894, %v4898
  %v4913 = vsel %vm874, %v4904, %v4892
  %v4914 = vsel %vm874, %v4906, %v4894
  %v4915 = vld [vmem:[%s883] ss:$8 sm:$0xf]
  %v4917 = vlaneseq
  %v4918 = vshrl.u32 %v4917, 7
  %v4919 = vsub.s32 0, %v4918
  %v4920 = vrot.slane %v4915, %v4919
  %v4921 = vlaneseq
  %v4922 = vshrl.u32 %v4921, 7
  %v4923 = vsub.s32 1, %v4922
  %v4924 = vrot.slane %v4915, %v4923
  %v4925 = vlaneseq
  %v4926 = vshrl.u32 %v4925, 7
  %v4927 = vsub.s32 2, %v4926
  %v4928 = vrot.slane %v4915, %v4927
  %v4929 = vlaneseq
  %v4930 = vshrl.u32 %v4929, 7
  %v4931 = vsub.s32 3, %v4930
  %v4932 = vrot.slane %v4915, %v4931
  %v4937 = vmul.f32 %v4913, %v4920
  %v4938 = vmul.f32 %v4911, %v4924
  %v4939 = vmul.f32 %v4909, %v4928
  %v4940 = vmul.f32 %v4907, %v4932
  %v4941 = vmul.f32 %v4914, %v4920
  %v4942 = vmul.f32 %v4912, %v4924
  %v4943 = vmul.f32 %v4910, %v4928
  %v4944 = vmul.f32 %v4908, %v4932
  %v4945 = vld [vmem:[%s1 + $0x84] sm:$0xf]
  %v4947 = vsel %vm361, %v4945, 0
  %4949 = vmatprep.subr.mxu0 0.0
  %4950 = vmatpush1.msra.mxu0 0.0
  %4951 = vmatprep.subr.mxu0 0.0
  %4952 = vmatpush1.msra.mxu0 0.0
  %4953 = vmatprep.subr.mxu0 0.0
  %4954 = vmatpush1.msra.mxu0 0.0
  %4955 = vmatprep.subr.mxu0 0.0
  %4956 = vmatpush1.msra.mxu0 0.0
  %4957 = vmatprep.subr.mxu0 0.0
  %4958 = vmatpush1.msra.mxu0 0.0
  %4959 = vmatprep.subr.mxu0 0.0
  %4960 = vmatpush1.msra.mxu0 0.0
  %4961 = vmatprep.subr.mxu0 0.0
  %4962 = vmatpush1.msra.mxu0 0.0
  %4963 = vmatprep.subr.mxu0 0.0
  %4964 = vmatpush1.msra.mxu0 0.0
  %4965 = vmatprep.subr.mxu0 0.0
  %4966 = vmatpush1.msra.mxu0 0.0
  %4967 = vmatprep.subr.mxu0 0.0
  %4968 = vmatpush1.msra.mxu0 0.0
  %4969 = vmatprep.subr.mxu0 0.0
  %4970 = vmatpush1.msra.mxu0 0.0
  %4971 = vmatprep.subr.mxu0 0.0
  %4972 = vmatpush1.msra.mxu0 0.0
  %4973 = vmatprep.subr.mxu0 0.0
  %4974 = vmatpush1.msra.mxu0 0.0
  %4975 = vmatprep.subr.mxu0 0.0
  %4976 = vmatpush1.msra.mxu0 0.0
  %4977 = vmatprep.subr.mxu0 %v4942
  %4978 = vmatpush1.msra.mxu0 %v4941
  %4979 = vmatprep.subr.mxu0 %v4938
  %4980 = vmatpush1.msra.mxu0 %v4937
  %4981 = vmatprep.subr.mxu0 0.0
  %4982 = vmatpush2.msra.mxu0 0.0
  %4983 = vmatprep.subr.mxu0 0.0
  %4984 = vmatpush2.msra.mxu0 0.0
  %4985 = vmatprep.subr.mxu0 0.0
  %4986 = vmatpush2.msra.mxu0 0.0
  %4987 = vmatprep.subr.mxu0 0.0
  %4988 = vmatpush2.msra.mxu0 0.0
  %4989 = vmatprep.subr.mxu0 0.0
  %4990 = vmatpush2.msra.mxu0 0.0
  %4991 = vmatprep.subr.mxu0 0.0
  %4992 = vmatpush2.msra.mxu0 0.0
  %4993 = vmatprep.subr.mxu0 0.0
  %4994 = vmatpush2.msra.mxu0 0.0
  %4995 = vmatprep.subr.mxu0 0.0
  %4996 = vmatpush2.msra.mxu0 0.0
  %4997 = vmatprep.subr.mxu0 0.0
  %4998 = vmatpush2.msra.mxu0 0.0
  %4999 = vmatprep.subr.mxu0 0.0
  %5000 = vmatpush2.msra.mxu0 0.0
  %5001 = vmatprep.subr.mxu0 0.0
  %5002 = vmatpush2.msra.mxu0 0.0
  %5003 = vmatprep.subr.mxu0 0.0
  %5004 = vmatpush2.msra.mxu0 0.0
  %5005 = vmatprep.subr.mxu0 0.0
  %5006 = vmatpush2.msra.mxu0 0.0
  %5007 = vmatprep.subr.mxu0 0.0
  %5008 = vmatpush2.msra.mxu0 0.0
  %5009 = vmatprep.subr.mxu0 0.0
  %5010 = vmatpush2.msra.mxu0 0.0
  %5011 = vmatprep.subr.mxu0 0.0
  %5012 = vmatpush2.msra.mxu0 0.0
  %5013 = vmatprep.mubr.f32.mxu0 0.0
  %5014 = vmatmul.mubr.f32.gmra.mxu0 %v4947
  %v5015 = vpop.f32.mrf.mxu0
  %v5016 = vadd.f32 0.0, %v5015
  %v5017 = vpop.f32.mrf.mxu0
  %v5018 = vadd.f32 0.0, %v5017
  %5019 = vdwg.mxu0
  %5020 = vmatprep.subr.mxu0 0.0
  %5021 = vmatpush1.msra.mxu0 0.0
  %5022 = vmatprep.subr.mxu0 0.0
  %5023 = vmatpush1.msra.mxu0 0.0
  %5024 = vmatprep.subr.mxu0 0.0
  %5025 = vmatpush1.msra.mxu0 0.0
  %5026 = vmatprep.subr.mxu0 0.0
  %5027 = vmatpush1.msra.mxu0 0.0
  %5028 = vmatprep.subr.mxu0 0.0
  %5029 = vmatpush1.msra.mxu0 0.0
  %5030 = vmatprep.subr.mxu0 0.0
  %5031 = vmatpush1.msra.mxu0 0.0
  %5032 = vmatprep.subr.mxu0 0.0
  %5033 = vmatpush1.msra.mxu0 0.0
  %5034 = vmatprep.subr.mxu0 0.0
  %5035 = vmatpush1.msra.mxu0 0.0
  %5036 = vmatprep.subr.mxu0 0.0
  %5037 = vmatpush1.msra.mxu0 0.0
  %5038 = vmatprep.subr.mxu0 0.0
  %5039 = vmatpush1.msra.mxu0 0.0
  %5040 = vmatprep.subr.mxu0 0.0
  %5041 = vmatpush1.msra.mxu0 0.0
  %5042 = vmatprep.subr.mxu0 0.0
  %5043 = vmatpush1.msra.mxu0 0.0
  %5044 = vmatprep.subr.mxu0 0.0
  %5045 = vmatpush1.msra.mxu0 0.0
  %5046 = vmatprep.subr.mxu0 0.0
  %5047 = vmatpush1.msra.mxu0 0.0
  %5048 = vmatprep.subr.mxu0 %v4944
  %5049 = vmatpush1.msra.mxu0 %v4943
  %5050 = vmatprep.subr.mxu0 %v4940
  %5051 = vmatpush1.msra.mxu0 %v4939
  %5052 = vmatprep.subr.mxu0 0.0
  %5053 = vmatpush2.msra.mxu0 0.0
  %5054 = vmatprep.subr.mxu0 0.0
  %5055 = vmatpush2.msra.mxu0 0.0
  %5056 = vmatprep.subr.mxu0 0.0
  %5057 = vmatpush2.msra.mxu0 0.0
  %5058 = vmatprep.subr.mxu0 0.0
  %5059 = vmatpush2.msra.mxu0 0.0
  %5060 = vmatprep.subr.mxu0 0.0
  %5061 = vmatpush2.msra.mxu0 0.0
  %5062 = vmatprep.subr.mxu0 0.0
  %5063 = vmatpush2.msra.mxu0 0.0
  %5064 = vmatprep.subr.mxu0 0.0
  %5065 = vmatpush2.msra.mxu0 0.0
  %5066 = vmatprep.subr.mxu0 0.0
  %5067 = vmatpush2.msra.mxu0 0.0
  %5068 = vmatprep.subr.mxu0 0.0
  %5069 = vmatpush2.msra.mxu0 0.0
  %5070 = vmatprep.subr.mxu0 0.0
  %5071 = vmatpush2.msra.mxu0 0.0
  %5072 = vmatprep.subr.mxu0 0.0
  %5073 = vmatpush2.msra.mxu0 0.0
  %5074 = vmatprep.subr.mxu0 0.0
  %5075 = vmatpush2.msra.mxu0 0.0
  %5076 = vmatprep.subr.mxu0 0.0
  %5077 = vmatpush2.msra.mxu0 0.0
  %5078 = vmatprep.subr.mxu0 0.0
  %5079 = vmatpush2.msra.mxu0 0.0
  %5080 = vmatprep.subr.mxu0 0.0
  %5081 = vmatpush2.msra.mxu0 0.0
  %5082 = vmatprep.subr.mxu0 0.0
  %5083 = vmatpush2.msra.mxu0 0.0
  %5084 = vmatprep.mubr.f32.mxu0 0.0
  %5085 = vmatmul.mubr.f32.gmra.mxu0 %v4947
  %v5086 = vpop.f32.mrf.mxu0
  %v5087 = vadd.f32 0.0, %v5086
  %v5088 = vpop.f32.mrf.mxu0
  %v5089 = vadd.f32 0.0, %v5088
  %5090 = vdwg.mxu0
  %v5091 = vadd.f32 %v4887, %v5016
  %v5092 = vadd.f32 %v4888, %v5018
  %v5093 = vadd.f32 %v4889, %v5087
  %v5094 = vadd.f32 %v4890, %v5089
  %v5095 = vld [vmem:[%s1 + $0x88] sm:$0xf]
  %v5097 = vsel %vm361, %v5095, 0
  %5099 = vmatprep.subr.mxu0 0.0
  %5100 = vmatpush1.msra.mxu0 0.0
  %5101 = vmatprep.subr.mxu0 0.0
  %5102 = vmatpush1.msra.mxu0 0.0
  %5103 = vmatprep.subr.mxu0 0.0
  %5104 = vmatpush1.msra.mxu0 0.0
  %5105 = vmatprep.subr.mxu0 0.0
  %5106 = vmatpush1.msra.mxu0 0.0
  %5107 = vmatprep.subr.mxu0 0.0
  %5108 = vmatpush1.msra.mxu0 0.0
  %5109 = vmatprep.subr.mxu0 0.0
  %5110 = vmatpush1.msra.mxu0 0.0
  %5111 = vmatprep.subr.mxu0 0.0
  %5112 = vmatpush1.msra.mxu0 0.0
  %5113 = vmatprep.subr.mxu0 0.0
  %5114 = vmatpush1.msra.mxu0 0.0
  %5115 = vmatprep.subr.mxu0 0.0
  %5116 = vmatpush1.msra.mxu0 0.0
  %5117 = vmatprep.subr.mxu0 0.0
  %5118 = vmatpush1.msra.mxu0 0.0
  %5119 = vmatprep.subr.mxu0 0.0
  %5120 = vmatpush1.msra.mxu0 0.0
  %5121 = vmatprep.subr.mxu0 0.0
  %5122 = vmatpush1.msra.mxu0 0.0
  %5123 = vmatprep.subr.mxu0 0.0
  %5124 = vmatpush1.msra.mxu0 0.0
  %5125 = vmatprep.subr.mxu0 0.0
  %5126 = vmatpush1.msra.mxu0 0.0
  %5127 = vmatprep.subr.mxu0 %v4284
  %5128 = vmatpush1.msra.mxu0 %v4283
  %5129 = vmatprep.subr.mxu0 %v4280
  %5130 = vmatpush1.msra.mxu0 %v4279
  %5131 = vmatprep.subr.mxu0 0.0
  %5132 = vmatpush2.msra.mxu0 0.0
  %5133 = vmatprep.subr.mxu0 0.0
  %5134 = vmatpush2.msra.mxu0 0.0
  %5135 = vmatprep.subr.mxu0 0.0
  %5136 = vmatpush2.msra.mxu0 0.0
  %5137 = vmatprep.subr.mxu0 0.0
  %5138 = vmatpush2.msra.mxu0 0.0
  %5139 = vmatprep.subr.mxu0 0.0
  %5140 = vmatpush2.msra.mxu0 0.0
  %5141 = vmatprep.subr.mxu0 0.0
  %5142 = vmatpush2.msra.mxu0 0.0
  %5143 = vmatprep.subr.mxu0 0.0
  %5144 = vmatpush2.msra.mxu0 0.0
  %5145 = vmatprep.subr.mxu0 0.0
  %5146 = vmatpush2.msra.mxu0 0.0
  %5147 = vmatprep.subr.mxu0 0.0
  %5148 = vmatpush2.msra.mxu0 0.0
  %5149 = vmatprep.subr.mxu0 0.0
  %5150 = vmatpush2.msra.mxu0 0.0
  %5151 = vmatprep.subr.mxu0 0.0
  %5152 = vmatpush2.msra.mxu0 0.0
  %5153 = vmatprep.subr.mxu0 0.0
  %5154 = vmatpush2.msra.mxu0 0.0
  %5155 = vmatprep.subr.mxu0 0.0
  %5156 = vmatpush2.msra.mxu0 0.0
  %5157 = vmatprep.subr.mxu0 0.0
  %5158 = vmatpush2.msra.mxu0 0.0
  %5159 = vmatprep.subr.mxu0 0.0
  %5160 = vmatpush2.msra.mxu0 0.0
  %5161 = vmatprep.subr.mxu0 0.0
  %5162 = vmatpush2.msra.mxu0 0.0
  %5163 = vmatprep.mubr.f32.mxu0 0.0
  %5164 = vmatmul.mubr.f32.gmra.mxu0 %v5097
  %v5165 = vpop.f32.mrf.mxu0
  %v5166 = vadd.f32 0.0, %v5165
  %v5167 = vpop.f32.mrf.mxu0
  %v5168 = vadd.f32 0.0, %v5167
  %5169 = vdwg.mxu0
  %5170 = vmatprep.subr.mxu0 0.0
  %5171 = vmatpush1.msra.mxu0 0.0
  %5172 = vmatprep.subr.mxu0 0.0
  %5173 = vmatpush1.msra.mxu0 0.0
  %5174 = vmatprep.subr.mxu0 0.0
  %5175 = vmatpush1.msra.mxu0 0.0
  %5176 = vmatprep.subr.mxu0 0.0
  %5177 = vmatpush1.msra.mxu0 0.0
  %5178 = vmatprep.subr.mxu0 0.0
  %5179 = vmatpush1.msra.mxu0 0.0
  %5180 = vmatprep.subr.mxu0 0.0
  %5181 = vmatpush1.msra.mxu0 0.0
  %5182 = vmatprep.subr.mxu0 0.0
  %5183 = vmatpush1.msra.mxu0 0.0
  %5184 = vmatprep.subr.mxu0 0.0
  %5185 = vmatpush1.msra.mxu0 0.0
  %5186 = vmatprep.subr.mxu0 0.0
  %5187 = vmatpush1.msra.mxu0 0.0
  %5188 = vmatprep.subr.mxu0 0.0
  %5189 = vmatpush1.msra.mxu0 0.0
  %5190 = vmatprep.subr.mxu0 0.0
  %5191 = vmatpush1.msra.mxu0 0.0
  %5192 = vmatprep.subr.mxu0 0.0
  %5193 = vmatpush1.msra.mxu0 0.0
  %5194 = vmatprep.subr.mxu0 0.0
  %5195 = vmatpush1.msra.mxu0 0.0
  %5196 = vmatprep.subr.mxu0 0.0
  %5197 = vmatpush1.msra.mxu0 0.0
  %5198 = vmatprep.subr.mxu0 %v4286
  %5199 = vmatpush1.msra.mxu0 %v4285
  %5200 = vmatprep.subr.mxu0 %v4282
  %5201 = vmatpush1.msra.mxu0 %v4281
  %5202 = vmatprep.subr.mxu0 0.0
  %5203 = vmatpush2.msra.mxu0 0.0
  %5204 = vmatprep.subr.mxu0 0.0
  %5205 = vmatpush2.msra.mxu0 0.0
  %5206 = vmatprep.subr.mxu0 0.0
  %5207 = vmatpush2.msra.mxu0 0.0
  %5208 = vmatprep.subr.mxu0 0.0
  %5209 = vmatpush2.msra.mxu0 0.0
  %5210 = vmatprep.subr.mxu0 0.0
  %5211 = vmatpush2.msra.mxu0 0.0
  %5212 = vmatprep.subr.mxu0 0.0
  %5213 = vmatpush2.msra.mxu0 0.0
  %5214 = vmatprep.subr.mxu0 0.0
  %5215 = vmatpush2.msra.mxu0 0.0
  %5216 = vmatprep.subr.mxu0 0.0
  %5217 = vmatpush2.msra.mxu0 0.0
  %5218 = vmatprep.subr.mxu0 0.0
  %5219 = vmatpush2.msra.mxu0 0.0
  %5220 = vmatprep.subr.mxu0 0.0
  %5221 = vmatpush2.msra.mxu0 0.0
  %5222 = vmatprep.subr.mxu0 0.0
  %5223 = vmatpush2.msra.mxu0 0.0
  %5224 = vmatprep.subr.mxu0 0.0
  %5225 = vmatpush2.msra.mxu0 0.0
  %5226 = vmatprep.subr.mxu0 0.0
  %5227 = vmatpush2.msra.mxu0 0.0
  %5228 = vmatprep.subr.mxu0 0.0
  %5229 = vmatpush2.msra.mxu0 0.0
  %5230 = vmatprep.subr.mxu0 0.0
  %5231 = vmatpush2.msra.mxu0 0.0
  %5232 = vmatprep.subr.mxu0 0.0
  %5233 = vmatpush2.msra.mxu0 0.0
  %5234 = vmatprep.mubr.f32.mxu0 0.0
  %5235 = vmatmul.mubr.f32.gmra.mxu0 %v5097
  %v5236 = vpop.f32.mrf.mxu0
  %v5237 = vadd.f32 0.0, %v5236
  %v5238 = vpop.f32.mrf.mxu0
  %v5239 = vadd.f32 0.0, %v5238
  %5240 = vdwg.mxu0
  %v5241 = vadd.f32 %v5091, %v5166
  %v5242 = vadd.f32 %v5092, %v5168
  %v5243 = vadd.f32 %v5093, %v5237
  %v5244 = vadd.f32 %v5094, %v5239
  %5245 = vrot.lane.b32.xlu0 %v4279, 127
  %v5246 = vpop.permute.xlu0 %5245
  %5247 = vrot.lane.b32.xlu0 %v4283, 127
  %v5248 = vpop.permute.xlu0 %5247
  %5249 = vrot.lane.b32.xlu0 %v4280, 127
  %v5250 = vpop.permute.xlu0 %5249
  %5251 = vrot.lane.b32.xlu0 %v4284, 127
  %v5252 = vpop.permute.xlu0 %5251
  %5253 = vrot.lane.b32.xlu0 %v4281, 127
  %v5254 = vpop.permute.xlu0 %5253
  %5255 = vrot.lane.b32.xlu0 %v4285, 127
  %v5256 = vpop.permute.xlu0 %5255
  %5257 = vrot.lane.b32.xlu0 %v4282, 127
  %v5258 = vpop.permute.xlu0 %5257
  %5259 = vrot.lane.b32.xlu0 %v4286, 127
  %v5260 = vpop.permute.xlu0 %5259
  %v5261 = vsel %vm1230, %v5254, %v5258
  %v5262 = vsel %vm1230, %v5256, %v5260
  %v5263 = vsel %vm1230, %v5250, %v5254
  %v5264 = vsel %vm1230, %v5252, %v5256
  %v5265 = vsel %vm1230, %v5246, %v5250
  %v5266 = vsel %vm1230, %v5248, %v5252
  %v5267 = vsel %vm1230, %v5258, %v5246
  %v5268 = vsel %vm1230, %v5260, %v5248
  %v5269 = vld [vmem:[%s1239] ss:$8 sm:$0xf]
  %v5271 = vlaneseq
  %v5272 = vshrl.u32 %v5271, 7
  %v5273 = vsub.s32 0, %v5272
  %v5274 = vrot.slane %v5269, %v5273
  %v5275 = vlaneseq
  %v5276 = vshrl.u32 %v5275, 7
  %v5277 = vsub.s32 1, %v5276
  %v5278 = vrot.slane %v5269, %v5277
  %v5279 = vlaneseq
  %v5280 = vshrl.u32 %v5279, 7
  %v5281 = vsub.s32 2, %v5280
  %v5282 = vrot.slane %v5269, %v5281
  %v5283 = vlaneseq
  %v5284 = vshrl.u32 %v5283, 7
  %v5285 = vsub.s32 3, %v5284
  %v5286 = vrot.slane %v5269, %v5285
  %v5291 = vmul.f32 %v5265, %v5274
  %v5292 = vmul.f32 %v5263, %v5278
  %v5293 = vmul.f32 %v5261, %v5282
  %v5294 = vmul.f32 %v5267, %v5286
  %v5295 = vmul.f32 %v5266, %v5274
  %v5296 = vmul.f32 %v5264, %v5278
  %v5297 = vmul.f32 %v5262, %v5282
  %v5298 = vmul.f32 %v5268, %v5286
  %v5299 = vld [vmem:[%s1 + $0x8c] sm:$0xf]
  %v5301 = vsel %vm361, %v5299, 0
  %5303 = vmatprep.subr.mxu0 0.0
  %5304 = vmatpush1.msra.mxu0 0.0
  %5305 = vmatprep.subr.mxu0 0.0
  %5306 = vmatpush1.msra.mxu0 0.0
  %5307 = vmatprep.subr.mxu0 0.0
  %5308 = vmatpush1.msra.mxu0 0.0
  %5309 = vmatprep.subr.mxu0 0.0
  %5310 = vmatpush1.msra.mxu0 0.0
  %5311 = vmatprep.subr.mxu0 0.0
  %5312 = vmatpush1.msra.mxu0 0.0
  %5313 = vmatprep.subr.mxu0 0.0
  %5314 = vmatpush1.msra.mxu0 0.0
  %5315 = vmatprep.subr.mxu0 0.0
  %5316 = vmatpush1.msra.mxu0 0.0
  %5317 = vmatprep.subr.mxu0 0.0
  %5318 = vmatpush1.msra.mxu0 0.0
  %5319 = vmatprep.subr.mxu0 0.0
  %5320 = vmatpush1.msra.mxu0 0.0
  %5321 = vmatprep.subr.mxu0 0.0
  %5322 = vmatpush1.msra.mxu0 0.0
  %5323 = vmatprep.subr.mxu0 0.0
  %5324 = vmatpush1.msra.mxu0 0.0
  %5325 = vmatprep.subr.mxu0 0.0
  %5326 = vmatpush1.msra.mxu0 0.0
  %5327 = vmatprep.subr.mxu0 0.0
  %5328 = vmatpush1.msra.mxu0 0.0
  %5329 = vmatprep.subr.mxu0 0.0
  %5330 = vmatpush1.msra.mxu0 0.0
  %5331 = vmatprep.subr.mxu0 %v5296
  %5332 = vmatpush1.msra.mxu0 %v5295
  %5333 = vmatprep.subr.mxu0 %v5292
  %5334 = vmatpush1.msra.mxu0 %v5291
  %5335 = vmatprep.subr.mxu0 0.0
  %5336 = vmatpush2.msra.mxu0 0.0
  %5337 = vmatprep.subr.mxu0 0.0
  %5338 = vmatpush2.msra.mxu0 0.0
  %5339 = vmatprep.subr.mxu0 0.0
  %5340 = vmatpush2.msra.mxu0 0.0
  %5341 = vmatprep.subr.mxu0 0.0
  %5342 = vmatpush2.msra.mxu0 0.0
  %5343 = vmatprep.subr.mxu0 0.0
  %5344 = vmatpush2.msra.mxu0 0.0
  %5345 = vmatprep.subr.mxu0 0.0
  %5346 = vmatpush2.msra.mxu0 0.0
  %5347 = vmatprep.subr.mxu0 0.0
  %5348 = vmatpush2.msra.mxu0 0.0
  %5349 = vmatprep.subr.mxu0 0.0
  %5350 = vmatpush2.msra.mxu0 0.0
  %5351 = vmatprep.subr.mxu0 0.0
  %5352 = vmatpush2.msra.mxu0 0.0
  %5353 = vmatprep.subr.mxu0 0.0
  %5354 = vmatpush2.msra.mxu0 0.0
  %5355 = vmatprep.subr.mxu0 0.0
  %5356 = vmatpush2.msra.mxu0 0.0
  %5357 = vmatprep.subr.mxu0 0.0
  %5358 = vmatpush2.msra.mxu0 0.0
  %5359 = vmatprep.subr.mxu0 0.0
  %5360 = vmatpush2.msra.mxu0 0.0
  %5361 = vmatprep.subr.mxu0 0.0
  %5362 = vmatpush2.msra.mxu0 0.0
  %5363 = vmatprep.subr.mxu0 0.0
  %5364 = vmatpush2.msra.mxu0 0.0
  %5365 = vmatprep.subr.mxu0 0.0
  %5366 = vmatpush2.msra.mxu0 0.0
  %5367 = vmatprep.mubr.f32.mxu0 0.0
  %5368 = vmatmul.mubr.f32.gmra.mxu0 %v5301
  %v5369 = vpop.f32.mrf.mxu0
  %v5370 = vadd.f32 0.0, %v5369
  %v5371 = vpop.f32.mrf.mxu0
  %v5372 = vadd.f32 0.0, %v5371
  %5373 = vdwg.mxu0
  %5374 = vmatprep.subr.mxu0 0.0
  %5375 = vmatpush1.msra.mxu0 0.0
  %5376 = vmatprep.subr.mxu0 0.0
  %5377 = vmatpush1.msra.mxu0 0.0
  %5378 = vmatprep.subr.mxu0 0.0
  %5379 = vmatpush1.msra.mxu0 0.0
  %5380 = vmatprep.subr.mxu0 0.0
  %5381 = vmatpush1.msra.mxu0 0.0
  %5382 = vmatprep.subr.mxu0 0.0
  %5383 = vmatpush1.msra.mxu0 0.0
  %5384 = vmatprep.subr.mxu0 0.0
  %5385 = vmatpush1.msra.mxu0 0.0
  %5386 = vmatprep.subr.mxu0 0.0
  %5387 = vmatpush1.msra.mxu0 0.0
  %5388 = vmatprep.subr.mxu0 0.0
  %5389 = vmatpush1.msra.mxu0 0.0
  %5390 = vmatprep.subr.mxu0 0.0
  %5391 = vmatpush1.msra.mxu0 0.0
  %5392 = vmatprep.subr.mxu0 0.0
  %5393 = vmatpush1.msra.mxu0 0.0
  %5394 = vmatprep.subr.mxu0 0.0
  %5395 = vmatpush1.msra.mxu0 0.0
  %5396 = vmatprep.subr.mxu0 0.0
  %5397 = vmatpush1.msra.mxu0 0.0
  %5398 = vmatprep.subr.mxu0 0.0
  %5399 = vmatpush1.msra.mxu0 0.0
  %5400 = vmatprep.subr.mxu0 0.0
  %5401 = vmatpush1.msra.mxu0 0.0
  %5402 = vmatprep.subr.mxu0 %v5298
  %5403 = vmatpush1.msra.mxu0 %v5297
  %5404 = vmatprep.subr.mxu0 %v5294
  %5405 = vmatpush1.msra.mxu0 %v5293
  %5406 = vmatprep.subr.mxu0 0.0
  %5407 = vmatpush2.msra.mxu0 0.0
  %5408 = vmatprep.subr.mxu0 0.0
  %5409 = vmatpush2.msra.mxu0 0.0
  %5410 = vmatprep.subr.mxu0 0.0
  %5411 = vmatpush2.msra.mxu0 0.0
  %5412 = vmatprep.subr.mxu0 0.0
  %5413 = vmatpush2.msra.mxu0 0.0
  %5414 = vmatprep.subr.mxu0 0.0
  %5415 = vmatpush2.msra.mxu0 0.0
  %5416 = vmatprep.subr.mxu0 0.0
  %5417 = vmatpush2.msra.mxu0 0.0
  %5418 = vmatprep.subr.mxu0 0.0
  %5419 = vmatpush2.msra.mxu0 0.0
  %5420 = vmatprep.subr.mxu0 0.0
  %5421 = vmatpush2.msra.mxu0 0.0
  %5422 = vmatprep.subr.mxu0 0.0
  %5423 = vmatpush2.msra.mxu0 0.0
  %5424 = vmatprep.subr.mxu0 0.0
  %5425 = vmatpush2.msra.mxu0 0.0
  %5426 = vmatprep.subr.mxu0 0.0
  %5427 = vmatpush2.msra.mxu0 0.0
  %5428 = vmatprep.subr.mxu0 0.0
  %5429 = vmatpush2.msra.mxu0 0.0
  %5430 = vmatprep.subr.mxu0 0.0
  %5431 = vmatpush2.msra.mxu0 0.0
  %5432 = vmatprep.subr.mxu0 0.0
  %5433 = vmatpush2.msra.mxu0 0.0
  %5434 = vmatprep.subr.mxu0 0.0
  %5435 = vmatpush2.msra.mxu0 0.0
  %5436 = vmatprep.subr.mxu0 0.0
  %5437 = vmatpush2.msra.mxu0 0.0
  %5438 = vmatprep.mubr.f32.mxu0 0.0
  %5439 = vmatmul.mubr.f32.gmra.mxu0 %v5301
  %v5440 = vpop.f32.mrf.mxu0
  %v5441 = vadd.f32 0.0, %v5440
  %v5442 = vpop.f32.mrf.mxu0
  %v5443 = vadd.f32 0.0, %v5442
  %5444 = vdwg.mxu0
  %v5445 = vadd.f32 %v5241, %v5370
  %v5446 = vadd.f32 %v5242, %v5372
  %v5447 = vadd.f32 %v5243, %v5441
  %v5448 = vadd.f32 %v5244, %v5443
  %5449 = vrot.lane.b32.xlu0 %v4279, 113
  %v5450 = vpop.permute.xlu0 %5449
  %5451 = vrot.lane.b32.xlu0 %v4283, 113
  %v5452 = vpop.permute.xlu0 %5451
  %5453 = vrot.lane.b32.xlu0 %v4280, 113
  %v5454 = vpop.permute.xlu0 %5453
  %5455 = vrot.lane.b32.xlu0 %v4284, 113
  %v5456 = vpop.permute.xlu0 %5455
  %5457 = vrot.lane.b32.xlu0 %v4281, 113
  %v5458 = vpop.permute.xlu0 %5457
  %5459 = vrot.lane.b32.xlu0 %v4285, 113
  %v5460 = vpop.permute.xlu0 %5459
  %5461 = vrot.lane.b32.xlu0 %v4282, 113
  %v5462 = vpop.permute.xlu0 %5461
  %5463 = vrot.lane.b32.xlu0 %v4286, 113
  %v5464 = vpop.permute.xlu0 %5463
  %v5465 = vsel %vm1436, %v5458, %v5462
  %v5466 = vsel %vm1436, %v5460, %v5464
  %v5467 = vsel %vm1436, %v5454, %v5458
  %v5468 = vsel %vm1436, %v5456, %v5460
  %v5469 = vsel %vm1436, %v5450, %v5454
  %v5470 = vsel %vm1436, %v5452, %v5456
  %v5471 = vsel %vm1436, %v5462, %v5450
  %v5472 = vsel %vm1436, %v5464, %v5452
  %v5473 = vld [vmem:[%s1445] ss:$8 sm:$0xf]
  %v5475 = vlaneseq
  %v5476 = vshrl.u32 %v5475, 7
  %v5477 = vsub.s32 0, %v5476
  %v5478 = vrot.slane %v5473, %v5477
  %v5479 = vlaneseq
  %v5480 = vshrl.u32 %v5479, 7
  %v5481 = vsub.s32 1, %v5480
  %v5482 = vrot.slane %v5473, %v5481
  %v5483 = vlaneseq
  %v5484 = vshrl.u32 %v5483, 7
  %v5485 = vsub.s32 2, %v5484
  %v5486 = vrot.slane %v5473, %v5485
  %v5487 = vlaneseq
  %v5488 = vshrl.u32 %v5487, 7
  %v5489 = vsub.s32 3, %v5488
  %v5490 = vrot.slane %v5473, %v5489
  %v5495 = vmul.f32 %v5469, %v5478
  %v5496 = vmul.f32 %v5467, %v5482
  %v5497 = vmul.f32 %v5465, %v5486
  %v5498 = vmul.f32 %v5471, %v5490
  %v5499 = vmul.f32 %v5470, %v5478
  %v5500 = vmul.f32 %v5468, %v5482
  %v5501 = vmul.f32 %v5466, %v5486
  %v5502 = vmul.f32 %v5472, %v5490
  %v5503 = vld [vmem:[%s1 + $0x90] sm:$0xf]
  %v5505 = vsel %vm361, %v5503, 0
  %5507 = vmatprep.subr.mxu0 0.0
  %5508 = vmatpush1.msra.mxu0 0.0
  %5509 = vmatprep.subr.mxu0 0.0
  %5510 = vmatpush1.msra.mxu0 0.0
  %5511 = vmatprep.subr.mxu0 0.0
  %5512 = vmatpush1.msra.mxu0 0.0
  %5513 = vmatprep.subr.mxu0 0.0
  %5514 = vmatpush1.msra.mxu0 0.0
  %5515 = vmatprep.subr.mxu0 0.0
  %5516 = vmatpush1.msra.mxu0 0.0
  %5517 = vmatprep.subr.mxu0 0.0
  %5518 = vmatpush1.msra.mxu0 0.0
  %5519 = vmatprep.subr.mxu0 0.0
  %5520 = vmatpush1.msra.mxu0 0.0
  %5521 = vmatprep.subr.mxu0 0.0
  %5522 = vmatpush1.msra.mxu0 0.0
  %5523 = vmatprep.subr.mxu0 0.0
  %5524 = vmatpush1.msra.mxu0 0.0
  %5525 = vmatprep.subr.mxu0 0.0
  %5526 = vmatpush1.msra.mxu0 0.0
  %5527 = vmatprep.subr.mxu0 0.0
  %5528 = vmatpush1.msra.mxu0 0.0
  %5529 = vmatprep.subr.mxu0 0.0
  %5530 = vmatpush1.msra.mxu0 0.0
  %5531 = vmatprep.subr.mxu0 0.0
  %5532 = vmatpush1.msra.mxu0 0.0
  %5533 = vmatprep.subr.mxu0 0.0
  %5534 = vmatpush1.msra.mxu0 0.0
  %5535 = vmatprep.subr.mxu0 %v5500
  %5536 = vmatpush1.msra.mxu0 %v5499
  %5537 = vmatprep.subr.mxu0 %v5496
  %5538 = vmatpush1.msra.mxu0 %v5495
  %5539 = vmatprep.subr.mxu0 0.0
  %5540 = vmatpush2.msra.mxu0 0.0
  %5541 = vmatprep.subr.mxu0 0.0
  %5542 = vmatpush2.msra.mxu0 0.0
  %5543 = vmatprep.subr.mxu0 0.0
  %5544 = vmatpush2.msra.mxu0 0.0
  %5545 = vmatprep.subr.mxu0 0.0
  %5546 = vmatpush2.msra.mxu0 0.0
  %5547 = vmatprep.subr.mxu0 0.0
  %5548 = vmatpush2.msra.mxu0 0.0
  %5549 = vmatprep.subr.mxu0 0.0
  %5550 = vmatpush2.msra.mxu0 0.0
  %5551 = vmatprep.subr.mxu0 0.0
  %5552 = vmatpush2.msra.mxu0 0.0
  %5553 = vmatprep.subr.mxu0 0.0
  %5554 = vmatpush2.msra.mxu0 0.0
  %5555 = vmatprep.subr.mxu0 0.0
  %5556 = vmatpush2.msra.mxu0 0.0
  %5557 = vmatprep.subr.mxu0 0.0
  %5558 = vmatpush2.msra.mxu0 0.0
  %5559 = vmatprep.subr.mxu0 0.0
  %5560 = vmatpush2.msra.mxu0 0.0
  %5561 = vmatprep.subr.mxu0 0.0
  %5562 = vmatpush2.msra.mxu0 0.0
  %5563 = vmatprep.subr.mxu0 0.0
  %5564 = vmatpush2.msra.mxu0 0.0
  %5565 = vmatprep.subr.mxu0 0.0
  %5566 = vmatpush2.msra.mxu0 0.0
  %5567 = vmatprep.subr.mxu0 0.0
  %5568 = vmatpush2.msra.mxu0 0.0
  %5569 = vmatprep.subr.mxu0 0.0
  %5570 = vmatpush2.msra.mxu0 0.0
  %5571 = vmatprep.mubr.f32.mxu0 0.0
  %5572 = vmatmul.mubr.f32.gmra.mxu0 %v5505
  %v5573 = vpop.f32.mrf.mxu0
  %v5574 = vadd.f32 0.0, %v5573
  %v5575 = vpop.f32.mrf.mxu0
  %v5576 = vadd.f32 0.0, %v5575
  %5577 = vdwg.mxu0
  %5578 = vmatprep.subr.mxu0 0.0
  %5579 = vmatpush1.msra.mxu0 0.0
  %5580 = vmatprep.subr.mxu0 0.0
  %5581 = vmatpush1.msra.mxu0 0.0
  %5582 = vmatprep.subr.mxu0 0.0
  %5583 = vmatpush1.msra.mxu0 0.0
  %5584 = vmatprep.subr.mxu0 0.0
  %5585 = vmatpush1.msra.mxu0 0.0
  %5586 = vmatprep.subr.mxu0 0.0
  %5587 = vmatpush1.msra.mxu0 0.0
  %5588 = vmatprep.subr.mxu0 0.0
  %5589 = vmatpush1.msra.mxu0 0.0
  %5590 = vmatprep.subr.mxu0 0.0
  %5591 = vmatpush1.msra.mxu0 0.0
  %5592 = vmatprep.subr.mxu0 0.0
  %5593 = vmatpush1.msra.mxu0 0.0
  %5594 = vmatprep.subr.mxu0 0.0
  %5595 = vmatpush1.msra.mxu0 0.0
  %5596 = vmatprep.subr.mxu0 0.0
  %5597 = vmatpush1.msra.mxu0 0.0
  %5598 = vmatprep.subr.mxu0 0.0
  %5599 = vmatpush1.msra.mxu0 0.0
  %5600 = vmatprep.subr.mxu0 0.0
  %5601 = vmatpush1.msra.mxu0 0.0
  %5602 = vmatprep.subr.mxu0 0.0
  %5603 = vmatpush1.msra.mxu0 0.0
  %5604 = vmatprep.subr.mxu0 0.0
  %5605 = vmatpush1.msra.mxu0 0.0
  %5606 = vmatprep.subr.mxu0 %v5502
  %5607 = vmatpush1.msra.mxu0 %v5501
  %5608 = vmatprep.subr.mxu0 %v5498
  %5609 = vmatpush1.msra.mxu0 %v5497
  %5610 = vmatprep.subr.mxu0 0.0
  %5611 = vmatpush2.msra.mxu0 0.0
  %5612 = vmatprep.subr.mxu0 0.0
  %5613 = vmatpush2.msra.mxu0 0.0
  %5614 = vmatprep.subr.mxu0 0.0
  %5615 = vmatpush2.msra.mxu0 0.0
  %5616 = vmatprep.subr.mxu0 0.0
  %5617 = vmatpush2.msra.mxu0 0.0
  %5618 = vmatprep.subr.mxu0 0.0
  %5619 = vmatpush2.msra.mxu0 0.0
  %5620 = vmatprep.subr.mxu0 0.0
  %5621 = vmatpush2.msra.mxu0 0.0
  %5622 = vmatprep.subr.mxu0 0.0
  %5623 = vmatpush2.msra.mxu0 0.0
  %5624 = vmatprep.subr.mxu0 0.0
  %5625 = vmatpush2.msra.mxu0 0.0
  %5626 = vmatprep.subr.mxu0 0.0
  %5627 = vmatpush2.msra.mxu0 0.0
  %5628 = vmatprep.subr.mxu0 0.0
  %5629 = vmatpush2.msra.mxu0 0.0
  %5630 = vmatprep.subr.mxu0 0.0
  %5631 = vmatpush2.msra.mxu0 0.0
  %5632 = vmatprep.subr.mxu0 0.0
  %5633 = vmatpush2.msra.mxu0 0.0
  %5634 = vmatprep.subr.mxu0 0.0
  %5635 = vmatpush2.msra.mxu0 0.0
  %5636 = vmatprep.subr.mxu0 0.0
  %5637 = vmatpush2.msra.mxu0 0.0
  %5638 = vmatprep.subr.mxu0 0.0
  %5639 = vmatpush2.msra.mxu0 0.0
  %5640 = vmatprep.subr.mxu0 0.0
  %5641 = vmatpush2.msra.mxu0 0.0
  %5642 = vmatprep.mubr.f32.mxu0 0.0
  %5643 = vmatmul.mubr.f32.gmra.mxu0 %v5505
  %v5644 = vpop.f32.mrf.mxu0
  %v5645 = vadd.f32 0.0, %v5644
  %v5646 = vpop.f32.mrf.mxu0
  %v5647 = vadd.f32 0.0, %v5646
  %5648 = vdwg.mxu0
  %v5649 = vadd.f32 %v5445, %v5574
  %v5650 = vadd.f32 %v5446, %v5576
  %v5651 = vadd.f32 %v5447, %v5645
  %v5652 = vadd.f32 %v5448, %v5647
  %5653 = vrot.lane.b32.xlu0 %v4279, 112
  %v5654 = vpop.permute.xlu0 %5653
  %5655 = vrot.lane.b32.xlu0 %v4283, 112
  %v5656 = vpop.permute.xlu0 %5655
  %5657 = vrot.lane.b32.xlu0 %v4280, 112
  %v5658 = vpop.permute.xlu0 %5657
  %5659 = vrot.lane.b32.xlu0 %v4284, 112
  %v5660 = vpop.permute.xlu0 %5659
  %5661 = vrot.lane.b32.xlu0 %v4281, 112
  %v5662 = vpop.permute.xlu0 %5661
  %5663 = vrot.lane.b32.xlu0 %v4285, 112
  %v5664 = vpop.permute.xlu0 %5663
  %5665 = vrot.lane.b32.xlu0 %v4282, 112
  %v5666 = vpop.permute.xlu0 %5665
  %5667 = vrot.lane.b32.xlu0 %v4286, 112
  %v5668 = vpop.permute.xlu0 %5667
  %v5669 = vsel %vm1642, %v5662, %v5666
  %v5670 = vsel %vm1642, %v5664, %v5668
  %v5671 = vsel %vm1642, %v5658, %v5662
  %v5672 = vsel %vm1642, %v5660, %v5664
  %v5673 = vsel %vm1642, %v5654, %v5658
  %v5674 = vsel %vm1642, %v5656, %v5660
  %v5675 = vsel %vm1642, %v5666, %v5654
  %v5676 = vsel %vm1642, %v5668, %v5656
  %v5677 = vld [vmem:[%s1651] ss:$8 sm:$0xf]
  %v5679 = vlaneseq
  %v5680 = vshrl.u32 %v5679, 7
  %v5681 = vsub.s32 0, %v5680
  %v5682 = vrot.slane %v5677, %v5681
  %v5683 = vlaneseq
  %v5684 = vshrl.u32 %v5683, 7
  %v5685 = vsub.s32 1, %v5684
  %v5686 = vrot.slane %v5677, %v5685
  %v5687 = vlaneseq
  %v5688 = vshrl.u32 %v5687, 7
  %v5689 = vsub.s32 2, %v5688
  %v5690 = vrot.slane %v5677, %v5689
  %v5691 = vlaneseq
  %v5692 = vshrl.u32 %v5691, 7
  %v5693 = vsub.s32 3, %v5692
  %v5694 = vrot.slane %v5677, %v5693
  %v5699 = vmul.f32 %v5673, %v5682
  %v5700 = vmul.f32 %v5671, %v5686
  %v5701 = vmul.f32 %v5669, %v5690
  %v5702 = vmul.f32 %v5675, %v5694
  %v5703 = vmul.f32 %v5674, %v5682
  %v5704 = vmul.f32 %v5672, %v5686
  %v5705 = vmul.f32 %v5670, %v5690
  %v5706 = vmul.f32 %v5676, %v5694
  %v5707 = vld [vmem:[%s1 + $0x94] sm:$0xf]
  %v5709 = vsel %vm361, %v5707, 0
  %5711 = vmatprep.subr.mxu0 0.0
  %5712 = vmatpush1.msra.mxu0 0.0
  %5713 = vmatprep.subr.mxu0 0.0
  %5714 = vmatpush1.msra.mxu0 0.0
  %5715 = vmatprep.subr.mxu0 0.0
  %5716 = vmatpush1.msra.mxu0 0.0
  %5717 = vmatprep.subr.mxu0 0.0
  %5718 = vmatpush1.msra.mxu0 0.0
  %5719 = vmatprep.subr.mxu0 0.0
  %5720 = vmatpush1.msra.mxu0 0.0
  %5721 = vmatprep.subr.mxu0 0.0
  %5722 = vmatpush1.msra.mxu0 0.0
  %5723 = vmatprep.subr.mxu0 0.0
  %5724 = vmatpush1.msra.mxu0 0.0
  %5725 = vmatprep.subr.mxu0 0.0
  %5726 = vmatpush1.msra.mxu0 0.0
  %5727 = vmatprep.subr.mxu0 0.0
  %5728 = vmatpush1.msra.mxu0 0.0
  %5729 = vmatprep.subr.mxu0 0.0
  %5730 = vmatpush1.msra.mxu0 0.0
  %5731 = vmatprep.subr.mxu0 0.0
  %5732 = vmatpush1.msra.mxu0 0.0
  %5733 = vmatprep.subr.mxu0 0.0
  %5734 = vmatpush1.msra.mxu0 0.0
  %5735 = vmatprep.subr.mxu0 0.0
  %5736 = vmatpush1.msra.mxu0 0.0
  %5737 = vmatprep.subr.mxu0 0.0
  %5738 = vmatpush1.msra.mxu0 0.0
  %5739 = vmatprep.subr.mxu0 %v5704
  %5740 = vmatpush1.msra.mxu0 %v5703
  %5741 = vmatprep.subr.mxu0 %v5700
  %5742 = vmatpush1.msra.mxu0 %v5699
  %5743 = vmatprep.subr.mxu0 0.0
  %5744 = vmatpush2.msra.mxu0 0.0
  %5745 = vmatprep.subr.mxu0 0.0
  %5746 = vmatpush2.msra.mxu0 0.0
  %5747 = vmatprep.subr.mxu0 0.0
  %5748 = vmatpush2.msra.mxu0 0.0
  %5749 = vmatprep.subr.mxu0 0.0
  %5750 = vmatpush2.msra.mxu0 0.0
  %5751 = vmatprep.subr.mxu0 0.0
  %5752 = vmatpush2.msra.mxu0 0.0
  %5753 = vmatprep.subr.mxu0 0.0
  %5754 = vmatpush2.msra.mxu0 0.0
  %5755 = vmatprep.subr.mxu0 0.0
  %5756 = vmatpush2.msra.mxu0 0.0
  %5757 = vmatprep.subr.mxu0 0.0
  %5758 = vmatpush2.msra.mxu0 0.0
  %5759 = vmatprep.subr.mxu0 0.0
  %5760 = vmatpush2.msra.mxu0 0.0
  %5761 = vmatprep.subr.mxu0 0.0
  %5762 = vmatpush2.msra.mxu0 0.0
  %5763 = vmatprep.subr.mxu0 0.0
  %5764 = vmatpush2.msra.mxu0 0.0
  %5765 = vmatprep.subr.mxu0 0.0
  %5766 = vmatpush2.msra.mxu0 0.0
  %5767 = vmatprep.subr.mxu0 0.0
  %5768 = vmatpush2.msra.mxu0 0.0
  %5769 = vmatprep.subr.mxu0 0.0
  %5770 = vmatpush2.msra.mxu0 0.0
  %5771 = vmatprep.subr.mxu0 0.0
  %5772 = vmatpush2.msra.mxu0 0.0
  %5773 = vmatprep.subr.mxu0 0.0
  %5774 = vmatpush2.msra.mxu0 0.0
  %5775 = vmatprep.mubr.f32.mxu0 0.0
  %5776 = vmatmul.mubr.f32.gmra.mxu0 %v5709
  %v5777 = vpop.f32.mrf.mxu0
  %v5778 = vadd.f32 0.0, %v5777
  %v5779 = vpop.f32.mrf.mxu0
  %v5780 = vadd.f32 0.0, %v5779
  %5781 = vdwg.mxu0
  %5782 = vmatprep.subr.mxu0 0.0
  %5783 = vmatpush1.msra.mxu0 0.0
  %5784 = vmatprep.subr.mxu0 0.0
  %5785 = vmatpush1.msra.mxu0 0.0
  %5786 = vmatprep.subr.mxu0 0.0
  %5787 = vmatpush1.msra.mxu0 0.0
  %5788 = vmatprep.subr.mxu0 0.0
  %5789 = vmatpush1.msra.mxu0 0.0
  %5790 = vmatprep.subr.mxu0 0.0
  %5791 = vmatpush1.msra.mxu0 0.0
  %5792 = vmatprep.subr.mxu0 0.0
  %5793 = vmatpush1.msra.mxu0 0.0
  %5794 = vmatprep.subr.mxu0 0.0
  %5795 = vmatpush1.msra.mxu0 0.0
  %5796 = vmatprep.subr.mxu0 0.0
  %5797 = vmatpush1.msra.mxu0 0.0
  %5798 = vmatprep.subr.mxu0 0.0
  %5799 = vmatpush1.msra.mxu0 0.0
  %5800 = vmatprep.subr.mxu0 0.0
  %5801 = vmatpush1.msra.mxu0 0.0
  %5802 = vmatprep.subr.mxu0 0.0
  %5803 = vmatpush1.msra.mxu0 0.0
  %5804 = vmatprep.subr.mxu0 0.0
  %5805 = vmatpush1.msra.mxu0 0.0
  %5806 = vmatprep.subr.mxu0 0.0
  %5807 = vmatpush1.msra.mxu0 0.0
  %5808 = vmatprep.subr.mxu0 0.0
  %5809 = vmatpush1.msra.mxu0 0.0
  %5810 = vmatprep.subr.mxu0 %v5706
  %5811 = vmatpush1.msra.mxu0 %v5705
  %5812 = vmatprep.subr.mxu0 %v5702
  %5813 = vmatpush1.msra.mxu0 %v5701
  %5814 = vmatprep.subr.mxu0 0.0
  %5815 = vmatpush2.msra.mxu0 0.0
  %5816 = vmatprep.subr.mxu0 0.0
  %5817 = vmatpush2.msra.mxu0 0.0
  %5818 = vmatprep.subr.mxu0 0.0
  %5819 = vmatpush2.msra.mxu0 0.0
  %5820 = vmatprep.subr.mxu0 0.0
  %5821 = vmatpush2.msra.mxu0 0.0
  %5822 = vmatprep.subr.mxu0 0.0
  %5823 = vmatpush2.msra.mxu0 0.0
  %5824 = vmatprep.subr.mxu0 0.0
  %5825 = vmatpush2.msra.mxu0 0.0
  %5826 = vmatprep.subr.mxu0 0.0
  %5827 = vmatpush2.msra.mxu0 0.0
  %5828 = vmatprep.subr.mxu0 0.0
  %5829 = vmatpush2.msra.mxu0 0.0
  %5830 = vmatprep.subr.mxu0 0.0
  %5831 = vmatpush2.msra.mxu0 0.0
  %5832 = vmatprep.subr.mxu0 0.0
  %5833 = vmatpush2.msra.mxu0 0.0
  %5834 = vmatprep.subr.mxu0 0.0
  %5835 = vmatpush2.msra.mxu0 0.0
  %5836 = vmatprep.subr.mxu0 0.0
  %5837 = vmatpush2.msra.mxu0 0.0
  %5838 = vmatprep.subr.mxu0 0.0
  %5839 = vmatpush2.msra.mxu0 0.0
  %5840 = vmatprep.subr.mxu0 0.0
  %5841 = vmatpush2.msra.mxu0 0.0
  %5842 = vmatprep.subr.mxu0 0.0
  %5843 = vmatpush2.msra.mxu0 0.0
  %5844 = vmatprep.subr.mxu0 0.0
  %5845 = vmatpush2.msra.mxu0 0.0
  %5846 = vmatprep.mubr.f32.mxu0 0.0
  %5847 = vmatmul.mubr.f32.gmra.mxu0 %v5709
  %v5848 = vpop.f32.mrf.mxu0
  %v5849 = vadd.f32 0.0, %v5848
  %v5850 = vpop.f32.mrf.mxu0
  %v5851 = vadd.f32 0.0, %v5850
  %5852 = vdwg.mxu0
  %v5853 = vadd.f32 %v5649, %v5778
  %v5854 = vadd.f32 %v5650, %v5780
  %v5855 = vadd.f32 %v5651, %v5849
  %v5856 = vadd.f32 %v5652, %v5851
  %5857 = vrot.lane.b32.xlu0 %v4279, 111
  %v5858 = vpop.permute.xlu0 %5857
  %5859 = vrot.lane.b32.xlu0 %v4283, 111
  %v5860 = vpop.permute.xlu0 %5859
  %5861 = vrot.lane.b32.xlu0 %v4280, 111
  %v5862 = vpop.permute.xlu0 %5861
  %5863 = vrot.lane.b32.xlu0 %v4284, 111
  %v5864 = vpop.permute.xlu0 %5863
  %5865 = vrot.lane.b32.xlu0 %v4281, 111
  %v5866 = vpop.permute.xlu0 %5865
  %5867 = vrot.lane.b32.xlu0 %v4285, 111
  %v5868 = vpop.permute.xlu0 %5867
  %5869 = vrot.lane.b32.xlu0 %v4282, 111
  %v5870 = vpop.permute.xlu0 %5869
  %5871 = vrot.lane.b32.xlu0 %v4286, 111
  %v5872 = vpop.permute.xlu0 %5871
  %v5873 = vsel %vm1848, %v5866, %v5870
  %v5874 = vsel %vm1848, %v5868, %v5872
  %v5875 = vsel %vm1848, %v5862, %v5866
  %v5876 = vsel %vm1848, %v5864, %v5868
  %v5877 = vsel %vm1848, %v5858, %v5862
  %v5878 = vsel %vm1848, %v5860, %v5864
  %v5879 = vsel %vm1848, %v5870, %v5858
  %v5880 = vsel %vm1848, %v5872, %v5860
  %v5881 = vld [vmem:[%s1857] ss:$8 sm:$0xf]
  %v5883 = vlaneseq
  %v5884 = vshrl.u32 %v5883, 7
  %v5885 = vsub.s32 0, %v5884
  %v5886 = vrot.slane %v5881, %v5885
  %v5887 = vlaneseq
  %v5888 = vshrl.u32 %v5887, 7
  %v5889 = vsub.s32 1, %v5888
  %v5890 = vrot.slane %v5881, %v5889
  %v5891 = vlaneseq
  %v5892 = vshrl.u32 %v5891, 7
  %v5893 = vsub.s32 2, %v5892
  %v5894 = vrot.slane %v5881, %v5893
  %v5895 = vlaneseq
  %v5896 = vshrl.u32 %v5895, 7
  %v5897 = vsub.s32 3, %v5896
  %v5898 = vrot.slane %v5881, %v5897
  %v5903 = vmul.f32 %v5877, %v5886
  %v5904 = vmul.f32 %v5875, %v5890
  %v5905 = vmul.f32 %v5873, %v5894
  %v5906 = vmul.f32 %v5879, %v5898
  %v5907 = vmul.f32 %v5878, %v5886
  %v5908 = vmul.f32 %v5876, %v5890
  %v5909 = vmul.f32 %v5874, %v5894
  %v5910 = vmul.f32 %v5880, %v5898
  %v5911 = vld [vmem:[%s1 + $0x98] sm:$0xf]
  %v5913 = vsel %vm361, %v5911, 0
  %5915 = vmatprep.subr.mxu0 0.0
  %5916 = vmatpush1.msra.mxu0 0.0
  %5917 = vmatprep.subr.mxu0 0.0
  %5918 = vmatpush1.msra.mxu0 0.0
  %5919 = vmatprep.subr.mxu0 0.0
  %5920 = vmatpush1.msra.mxu0 0.0
  %5921 = vmatprep.subr.mxu0 0.0
  %5922 = vmatpush1.msra.mxu0 0.0
  %5923 = vmatprep.subr.mxu0 0.0
  %5924 = vmatpush1.msra.mxu0 0.0
  %5925 = vmatprep.subr.mxu0 0.0
  %5926 = vmatpush1.msra.mxu0 0.0
  %5927 = vmatprep.subr.mxu0 0.0
  %5928 = vmatpush1.msra.mxu0 0.0
  %5929 = vmatprep.subr.mxu0 0.0
  %5930 = vmatpush1.msra.mxu0 0.0
  %5931 = vmatprep.subr.mxu0 0.0
  %5932 = vmatpush1.msra.mxu0 0.0
  %5933 = vmatprep.subr.mxu0 0.0
  %5934 = vmatpush1.msra.mxu0 0.0
  %5935 = vmatprep.subr.mxu0 0.0
  %5936 = vmatpush1.msra.mxu0 0.0
  %5937 = vmatprep.subr.mxu0 0.0
  %5938 = vmatpush1.msra.mxu0 0.0
  %5939 = vmatprep.subr.mxu0 0.0
  %5940 = vmatpush1.msra.mxu0 0.0
  %5941 = vmatprep.subr.mxu0 0.0
  %5942 = vmatpush1.msra.mxu0 0.0
  %5943 = vmatprep.subr.mxu0 %v5908
  %5944 = vmatpush1.msra.mxu0 %v5907
  %5945 = vmatprep.subr.mxu0 %v5904
  %5946 = vmatpush1.msra.mxu0 %v5903
  %5947 = vmatprep.subr.mxu0 0.0
  %5948 = vmatpush2.msra.mxu0 0.0
  %5949 = vmatprep.subr.mxu0 0.0
  %5950 = vmatpush2.msra.mxu0 0.0
  %5951 = vmatprep.subr.mxu0 0.0
  %5952 = vmatpush2.msra.mxu0 0.0
  %5953 = vmatprep.subr.mxu0 0.0
  %5954 = vmatpush2.msra.mxu0 0.0
  %5955 = vmatprep.subr.mxu0 0.0
  %5956 = vmatpush2.msra.mxu0 0.0
  %5957 = vmatprep.subr.mxu0 0.0
  %5958 = vmatpush2.msra.mxu0 0.0
  %5959 = vmatprep.subr.mxu0 0.0
  %5960 = vmatpush2.msra.mxu0 0.0
  %5961 = vmatprep.subr.mxu0 0.0
  %5962 = vmatpush2.msra.mxu0 0.0
  %5963 = vmatprep.subr.mxu0 0.0
  %5964 = vmatpush2.msra.mxu0 0.0
  %5965 = vmatprep.subr.mxu0 0.0
  %5966 = vmatpush2.msra.mxu0 0.0
  %5967 = vmatprep.subr.mxu0 0.0
  %5968 = vmatpush2.msra.mxu0 0.0
  %5969 = vmatprep.subr.mxu0 0.0
  %5970 = vmatpush2.msra.mxu0 0.0
  %5971 = vmatprep.subr.mxu0 0.0
  %5972 = vmatpush2.msra.mxu0 0.0
  %5973 = vmatprep.subr.mxu0 0.0
  %5974 = vmatpush2.msra.mxu0 0.0
  %5975 = vmatprep.subr.mxu0 0.0
  %5976 = vmatpush2.msra.mxu0 0.0
  %5977 = vmatprep.subr.mxu0 0.0
  %5978 = vmatpush2.msra.mxu0 0.0
  %5979 = vmatprep.mubr.f32.mxu0 0.0
  %5980 = vmatmul.mubr.f32.gmra.mxu0 %v5913
  %v5981 = vpop.f32.mrf.mxu0
  %v5982 = vadd.f32 0.0, %v5981
  %v5983 = vpop.f32.mrf.mxu0
  %v5984 = vadd.f32 0.0, %v5983
  %5985 = vdwg.mxu0
  %5986 = vmatprep.subr.mxu0 0.0
  %5987 = vmatpush1.msra.mxu0 0.0
  %5988 = vmatprep.subr.mxu0 0.0
  %5989 = vmatpush1.msra.mxu0 0.0
  %5990 = vmatprep.subr.mxu0 0.0
  %5991 = vmatpush1.msra.mxu0 0.0
  %5992 = vmatprep.subr.mxu0 0.0
  %5993 = vmatpush1.msra.mxu0 0.0
  %5994 = vmatprep.subr.mxu0 0.0
  %5995 = vmatpush1.msra.mxu0 0.0
  %5996 = vmatprep.subr.mxu0 0.0
  %5997 = vmatpush1.msra.mxu0 0.0
  %5998 = vmatprep.subr.mxu0 0.0
  %5999 = vmatpush1.msra.mxu0 0.0
  %6000 = vmatprep.subr.mxu0 0.0
  %6001 = vmatpush1.msra.mxu0 0.0
  %6002 = vmatprep.subr.mxu0 0.0
  %6003 = vmatpush1.msra.mxu0 0.0
  %6004 = vmatprep.subr.mxu0 0.0
  %6005 = vmatpush1.msra.mxu0 0.0
  %6006 = vmatprep.subr.mxu0 0.0
  %6007 = vmatpush1.msra.mxu0 0.0
  %6008 = vmatprep.subr.mxu0 0.0
  %6009 = vmatpush1.msra.mxu0 0.0
  %6010 = vmatprep.subr.mxu0 0.0
  %6011 = vmatpush1.msra.mxu0 0.0
  %6012 = vmatprep.subr.mxu0 0.0
  %6013 = vmatpush1.msra.mxu0 0.0
  %6014 = vmatprep.subr.mxu0 %v5910
  %6015 = vmatpush1.msra.mxu0 %v5909
  %6016 = vmatprep.subr.mxu0 %v5906
  %6017 = vmatpush1.msra.mxu0 %v5905
  %6018 = vmatprep.subr.mxu0 0.0
  %6019 = vmatpush2.msra.mxu0 0.0
  %6020 = vmatprep.subr.mxu0 0.0
  %6021 = vmatpush2.msra.mxu0 0.0
  %6022 = vmatprep.subr.mxu0 0.0
  %6023 = vmatpush2.msra.mxu0 0.0
  %6024 = vmatprep.subr.mxu0 0.0
  %6025 = vmatpush2.msra.mxu0 0.0
  %6026 = vmatprep.subr.mxu0 0.0
  %6027 = vmatpush2.msra.mxu0 0.0
  %6028 = vmatprep.subr.mxu0 0.0
  %6029 = vmatpush2.msra.mxu0 0.0
  %6030 = vmatprep.subr.mxu0 0.0
  %6031 = vmatpush2.msra.mxu0 0.0
  %6032 = vmatprep.subr.mxu0 0.0
  %6033 = vmatpush2.msra.mxu0 0.0
  %6034 = vmatprep.subr.mxu0 0.0
  %6035 = vmatpush2.msra.mxu0 0.0
  %6036 = vmatprep.subr.mxu0 0.0
  %6037 = vmatpush2.msra.mxu0 0.0
  %6038 = vmatprep.subr.mxu0 0.0
  %6039 = vmatpush2.msra.mxu0 0.0
  %6040 = vmatprep.subr.mxu0 0.0
  %6041 = vmatpush2.msra.mxu0 0.0
  %6042 = vmatprep.subr.mxu0 0.0
  %6043 = vmatpush2.msra.mxu0 0.0
  %6044 = vmatprep.subr.mxu0 0.0
  %6045 = vmatpush2.msra.mxu0 0.0
  %6046 = vmatprep.subr.mxu0 0.0
  %6047 = vmatpush2.msra.mxu0 0.0
  %6048 = vmatprep.subr.mxu0 0.0
  %6049 = vmatpush2.msra.mxu0 0.0
  %6050 = vmatprep.mubr.f32.mxu0 0.0
  %6051 = vmatmul.mubr.f32.gmra.mxu0 %v5913
  %v6052 = vpop.f32.mrf.mxu0
  %v6053 = vadd.f32 0.0, %v6052
  %v6054 = vpop.f32.mrf.mxu0
  %v6055 = vadd.f32 0.0, %v6054
  %6056 = vdwg.mxu0
  %v6057 = vadd.f32 %v5853, %v5982
  %v6058 = vadd.f32 %v5854, %v5984
  %v6059 = vadd.f32 %v5855, %v6053
  %v6060 = vadd.f32 %v5856, %v6055
  %6061 = vset.pattern.permute.xlu0 16
  %6062 = vperm.xlu0 %6061, %v5095
  %v6063 = vpop.permute.xlu0 %6062
  %v6065 = vadd.f32 %v6057, %v6063
  %v6066 = vadd.f32 %v6058, %v6063
  %v6067 = vadd.f32 %v6059, %v6063
  %v6068 = vadd.f32 %v6060, %v6063
  %v6069 = vmax.f32 %v6065, 0.0
  %v6070 = vmax.f32 %v6066, 0.0
  %v6071 = vmax.f32 %v6067, 0.0
  %v6072 = vmax.f32 %v6068, 0.0
  %v6077 = vrot.slane %v6069, 6
  %v6078 = vrot.slane %v6070, 6
  %v6079 = vrot.slane %v6071, 6
  %v6080 = vrot.slane %v6072, 6
  %6085 = vst [vmem:[%s3] sm:$0x3c] %v6077
  %6086 = vst [vmem:[%s3 + $0x8] sm:$0x3c] %v6078
  %6087 = vst [vmem:[%s3 + $0x10] sm:$0x3c] %v6079
  %6088 = vst [vmem:[%s3 + $0x18] sm:$0x3c] %v6080
  // Predicated region
  $region14: #{csp_dense_block.1} parent=0 // pred_check
    _
  $region15: #{csp_dense_block.1} parent=0 // pred_check_branch
    %6090 = sbr.rel (0) target = $region17
  $region16: #{csp_dense_block.1} parent=0 // pred_region
    _
  $region17: #{csp_dense_block.1} parent=0 // pred_fallthru
    _
  // Predicated region
  $region18: #{csp_dense_block.1} parent=0 // pred_check
    _
  $region19: #{csp_dense_block.1} parent=0 // pred_check_branch
    %6092 = sbr.rel (0) target = $region21
  $region20: #{csp_dense_block.1} parent=0 // pred_region
    _
  $region21: #{csp_dense_block.1} parent=0 // pred_fallthru
    _

</llo_original>
